<compile_context>
chip_gen: v7x
topology: tpu7x:2x2x1
jax: 0.10.0
libtpu: 0.0.40
codegen_flags: <defaults>
</compile_context>

<pallas_src>
import functools

import jax
import jax.numpy as jnp
from jax.experimental import pallas as pl
from jax.experimental.pallas import tpu as pltpu


def _round_up(x, m):
    return (x + m - 1) // m * m


# ------------------------------ Pallas kernels ------------------------------

def _phase_mm_bn_kernel(a_ref, b_ref, o_ref, s1_ref, s2_ref, *, cout):
    """Per-phase matmul + fused BatchNorm partial statistics (sum, sum of squares)."""
    y = jnp.dot(a_ref[0], b_ref[0], preferred_element_type=jnp.float32)
    y = y[:, :cout]                               # drop lane padding of the weights
    o_ref[0] = y
    s1_ref[0] = jnp.sum(y, axis=0, keepdims=True)
    s2_ref[0] = jnp.sum(y * y, axis=0, keepdims=True)


def _phase_mm_tanh_kernel(a_ref, b_ref, o_ref, *, cout):
    """Final layer: matmul with tanh fused into the epilogue (no BatchNorm pass)."""
    y = jnp.dot(a_ref[0], b_ref[0], preferred_element_type=jnp.float32)
    o_ref[0] = jnp.tanh(y[:, :cout])


def _affine_relu_kernel(y_ref, sc_ref, sh_ref, o_ref):
    """Lane-dense fused BatchNorm affine + ReLU."""
    o_ref[...] = jnp.maximum(y_ref[...] * sc_ref[...] + sh_ref[...], 0.0)


# --------------------- sub-pixel ConvTranspose lowering ---------------------

def _phase_geometry(k, s, p):
    """Per output phase r in [0, s): (first kernel tap, #taps, input offset)."""
    geo = []
    for r in range(s):
        k0 = (r + p) % s
        ntap = (k - k0 + s - 1) // s
        off = (r + p - k0) // s
        geo.append((k0, ntap, off))
    return geo, max(g[1] for g in geo)


def _build_phase_operands(x_nhwc, w_pt, stride, padding):
    """Build the per-phase im2col (bf16) and per-phase weight matrices (bf16).

    ConvTranspose2d(x, w, stride=s, padding=p):
      out[n, q*s+r, pc*s+c, co] =
          sum_{a,b,ci} x[n, q+e_r-a, pc+e_c-b, ci] * w[ci, co, k0_r+s*a, k0_c+s*b]
    Missing taps (a >= A_r or b >= A_c) get zero weights, so they contribute nothing.
    """
    # TODO(synk): the multi-tap shifted gather + per-phase weight reordering stays in
    # thin XLA glue; a BlockSpec index_map cannot express it directly.
    N, H, W, Cin = x_nhwc.shape
    Cin2, Cout, kH, kW = w_pt.shape
    assert Cin == Cin2 and kH == kW
    k, s, p = kH, stride, padding
    Ho = (H - 1) * s - 2 * p + k
    Wo = (W - 1) * s - 2 * p + k
    assert Ho % s == 0 and Wo % s == 0            # true for every NetG layer
    Hq, Wq = Ho // s, Wo // s
    geo, a_max = _phase_geometry(k, s, p)

    # zero-pad the (undilated) input once so every phase/tap slice below is in range
    pad_lo = max(0, max(g[1] - 1 - g[2] for g in geo))
    pad_r_hi = max(0, max(g[2] + Hq - 1 - (H - 1) for g in geo))
    pad_c_hi = max(0, max(g[2] + Wq - 1 - (W - 1) for g in geo))
    xp = jnp.pad(x_nhwc.astype(jnp.bfloat16),
                 ((0, 0), (pad_lo, pad_r_hi), (pad_lo, pad_c_hi), (0, 0)))

    ktaps = a_max * a_max * Cin
    kp = _round_up(ktaps, 128)                    # K already tile-padded (built once)
    mq = N * Hq * Wq
    mp = _round_up(mq, 16)
    npad = _round_up(Cout, 128)                   # lane-pad weights only (MXU width)

    w_bf = w_pt.astype(jnp.bfloat16)
    zero_tap = None
    patches, weights = [], []
    for r in range(s):
        k0r, ar, er = geo[r]
        for c in range(s):
            k0c, ac, ec = geo[c]
            taps = []
            for a in range(a_max):
                for b in range(a_max):
                    if a < ar and b < ac:
                        ys, xs = pad_lo + er - a, pad_lo + ec - b
                        assert 0 <= ys and ys + Hq <= xp.shape[1]
                        assert 0 <= xs and xs + Wq <= xp.shape[2]
                        taps.append(xp[:, ys:ys + Hq, xs:xs + Wq, :])
                    else:                         # tap outside kernel: weight is zero
                        if zero_tap is None:
                            zero_tap = jnp.zeros((N, Hq, Wq, Cin), jnp.bfloat16)
                        taps.append(zero_tap)
            if kp > ktaps:                        # build K padding in place
                taps.append(jnp.zeros((N, Hq, Wq, kp - ktaps), jnp.bfloat16))
            patches.append(jnp.concatenate(taps, axis=-1).reshape(mq, kp))

            wsub = w_bf[:, :, k0r::s, k0c::s]                       # (Cin,Cout,ar,ac)
            wsub = jnp.pad(wsub, ((0, 0), (0, 0), (0, a_max - ar), (0, a_max - ac)))
            wmat = jnp.transpose(wsub, (2, 3, 0, 1)).reshape(ktaps, Cout)
            weights.append(jnp.pad(wmat, ((0, kp - ktaps), (0, npad - Cout))))

    a_all = jnp.stack(patches)                                      # (P, mq, kp) bf16
    if mp != mq:
        a_all = jnp.pad(a_all, ((0, 0), (0, mp - mq), (0, 0)))
    b_all = jnp.stack(weights)                                      # (P, kp, npad)
    meta = dict(n=N, hq=Hq, wq=Wq, cout=Cout, mq=mq, s=s)
    return a_all, b_all, meta


def _interleave_phases(y_flat, meta):
    """(P, Mq, Cout) phase-major activations -> NHWC layer output."""
    # TODO(synk): the sub-pixel phase interleave is a small XLA transpose, not Pallas.
    N, Hq, Wq, Cout, s = meta["n"], meta["hq"], meta["wq"], meta["cout"], meta["s"]
    y = y_flat.reshape(s, s, N, Hq, Wq, Cout)
    y = jnp.transpose(y, (2, 3, 0, 4, 1, 5))      # (N, Hq, r, Wq, c, Cout)
    return y.reshape(N, Hq * s, Wq * s, Cout)


# ------------------------------ layer wrappers -------------------------------

_VMEM_LIMIT = 32 * 1024 * 1024   # explicit scoped-VMEM budget (safe on v5e/v6e/v7x)


def gen_layer_bn_relu(x_nhwc, w_pt, stride, padding, gamma, beta):
    a_all, b_all, meta = _build_phase_operands(x_nhwc, w_pt, stride, padding)
    P, Mp, Kp = a_all.shape
    Np = b_all.shape[2]
    Cout, Mq = meta["cout"], meta["mq"]
    N, Hq, Wq = meta["n"], meta["hq"], meta["wq"]

    # One batched-over-phases matmul; K fits in a single block, so there is no K loop
    # and the output (and the fused BN partial statistics) is written exactly once.
    y, s1, s2 = pl.pallas_call(
        functools.partial(_phase_mm_bn_kernel, cout=Cout),
        out_shape=(jax.ShapeDtypeStruct((P, Mp, Cout), jnp.float32),
                   jax.ShapeDtypeStruct((P, 1, Cout), jnp.float32),
                   jax.ShapeDtypeStruct((P, 1, Cout), jnp.float32)),
        grid_spec=pltpu.PrefetchScalarGridSpec(
            num_scalar_prefetch=0,
            grid=(P,),
            in_specs=[pl.BlockSpec((1, Mp, Kp), lambda p: (p, 0, 0)),
                      pl.BlockSpec((1, Kp, Np), lambda p: (p, 0, 0))],
            out_specs=[pl.BlockSpec((1, Mp, Cout), lambda p: (p, 0, 0)),
                       pl.BlockSpec((1, 1, Cout), lambda p: (p, 0, 0)),
                       pl.BlockSpec((1, 1, Cout), lambda p: (p, 0, 0))]),
        compiler_params=pltpu.CompilerParams(
            dimension_semantics=("parallel",),
            vmem_limit_bytes=_VMEM_LIMIT),
    )(a_all, b_all)

    # BatchNorm2d training-mode batch stats (biased variance) from the fused partial
    # sums -- y is never re-read from HBM for statistics.
    count = jnp.float32(P * Mq)                   # == N*Ho*Wo (padded rows are zero)
    mean = jnp.sum(s1, axis=(0, 1)) / count
    var = jnp.maximum(jnp.sum(s2, axis=(0, 1)) / count - mean * mean, 0.0)
    scale = gamma * jax.lax.rsqrt(var + 1e-5)
    shift = beta - mean * scale

    # Fused affine + ReLU on a lane-dense (rows, Wq*Cout) view: no lane-padding waste,
    # wide unmasked stores (Wq*Cout is a multiple of 128 for every NetG layer).
    if Mp != Mq:
        y = y[:, :Mq, :]
    R, L = P * N * Hq, Wq * Cout
    y2 = y.reshape(R, L)
    sc = jnp.tile(scale, Wq).reshape(1, L).astype(jnp.float32)
    sh = jnp.tile(shift, Wq).reshape(1, L).astype(jnp.float32)
    act = pl.pallas_call(
        _affine_relu_kernel,
        out_shape=jax.ShapeDtypeStruct((R, L), jnp.float32),
        grid_spec=pltpu.PrefetchScalarGridSpec(
            num_scalar_prefetch=0,
            grid=(1,),
            in_specs=[pl.BlockSpec((R, L), lambda i: (0, 0)),
                      pl.BlockSpec((1, L), lambda i: (0, 0)),
                      pl.BlockSpec((1, L), lambda i: (0, 0))],
            out_specs=pl.BlockSpec((R, L), lambda i: (0, 0))),
        compiler_params=pltpu.CompilerParams(
            dimension_semantics=("arbitrary",),
            vmem_limit_bytes=_VMEM_LIMIT),
    )(y2, sc, sh)

    return _interleave_phases(act.reshape(P, Mq, Cout), meta)


def gen_layer_tanh(x_nhwc, w_pt, stride, padding, tm=512):
    a_all, b_all, meta = _build_phase_operands(x_nhwc, w_pt, stride, padding)
    P, Mp, Kp = a_all.shape
    Np = b_all.shape[2]
    Cout, Mq = meta["cout"], meta["mq"]

    # Layer 5: grid is (9 phases, 4 M-blocks), both parallel -> both v7x TCs get work;
    # tanh is fused into the epilogue so no extra elementwise pass / HBM round-trip.
    tm = tm if Mp % tm == 0 else Mp
    y = pl.pallas_call(
        functools.partial(_phase_mm_tanh_kernel, cout=Cout),
        out_shape=jax.ShapeDtypeStruct((P, Mp, Cout), jnp.float32),
        grid_spec=pltpu.PrefetchScalarGridSpec(
            num_scalar_prefetch=0,
            grid=(P, Mp // tm),
            in_specs=[pl.BlockSpec((1, tm, Kp), lambda p, m: (p, m, 0)),
                      pl.BlockSpec((1, Kp, Np), lambda p, m: (p, 0, 0))],
            out_specs=pl.BlockSpec((1, tm, Cout), lambda p, m: (p, m, 0))),
        compiler_params=pltpu.CompilerParams(
            dimension_semantics=("parallel", "parallel"),
            vmem_limit_bytes=_VMEM_LIMIT),
    )(a_all, b_all)
    if Mp != Mq:
        y = y[:, :Mq, :]
    return _interleave_phases(y, meta)


def netg_forward(x_nchw, params):
    x = jnp.transpose(x_nchw, (0, 2, 3, 1))                       # NCHW -> NHWC
    x = gen_layer_bn_relu(x, params["w1"], 1, 0, params["g1"], params["b1"])
    x = gen_layer_bn_relu(x, params["w2"], 2, 1, params["g2"], params["b2"])
    x = gen_layer_bn_relu(x, params["w3"], 2, 1, params["g3"], params["b3"])
    x = gen_layer_bn_relu(x, params["w4"], 2, 1, params["g4"], params["b4"])
    x = gen_layer_tanh(x, params["w5"], 3, 1)
    return jnp.transpose(x, (0, 3, 1, 2))                         # NHWC -> NCHW


# --------------------- pure-XLA reference (self-check only) ---------------------

def _conv_transpose_ref(x_nhwc, w_pt, stride, padding):
    k = w_pt.shape[2]
    w_hwio = jnp.transpose(jnp.flip(w_pt, (2, 3)), (2, 3, 0, 1))
    return jax.lax.conv_general_dilated(
        x_nhwc.astype(jnp.bfloat16), w_hwio.astype(jnp.bfloat16),
        window_strides=(1, 1),
        padding=((k - 1 - padding, k - 1 - padding),) * 2,
        lhs_dilation=(stride, stride),
        dimension_numbers=("NHWC", "HWIO", "NHWC"),
        preferred_element_type=jnp.float32)


def _bn_relu_ref(y, gamma, beta):
    mean = jnp.mean(y, axis=(0, 1, 2))
    var = jnp.maximum(jnp.mean(y * y, axis=(0, 1, 2)) - mean * mean, 0.0)
    scale = gamma * jax.lax.rsqrt(var + 1e-5)
    return jnp.maximum(y * scale + (beta - mean * scale), 0.0)


def netg_forward_ref(x_nchw, params):
    x = jnp.transpose(x_nchw, (0, 2, 3, 1))
    x = _bn_relu_ref(_conv_transpose_ref(x, params["w1"], 1, 0), params["g1"], params["b1"])
    x = _bn_relu_ref(_conv_transpose_ref(x, params["w2"], 2, 1), params["g2"], params["b2"])
    x = _bn_relu_ref(_conv_transpose_ref(x, params["w3"], 2, 1), params["g3"], params["b3"])
    x = _bn_relu_ref(_conv_transpose_ref(x, params["w4"], 2, 1), params["g4"], params["b4"])
    x = jnp.tanh(_conv_transpose_ref(x, params["w5"], 3, 1))
    return jnp.transpose(x, (0, 3, 1, 2))


# ----------------------------------- setup -----------------------------------

def init_params(key, ngf, nz):
    ks = jax.random.split(key, 9)

    def w(k, cin, cout, ksize):
        return 0.02 * jax.random.normal(k, (cin, cout, ksize, ksize), jnp.float32)

    def g(k, c):
        return 1.0 + 0.02 * jax.random.normal(k, (c,), jnp.float32)

    return {
        "w1": w(ks[0], nz,      ngf * 8, 4), "g1": g(ks[1], ngf * 8), "b1": jnp.zeros((ngf * 8,), jnp.float32),
        "w2": w(ks[2], ngf * 8, ngf * 4, 4), "g2": g(ks[3], ngf * 4), "b2": jnp.zeros((ngf * 4,), jnp.float32),
        "w3": w(ks[4], ngf * 4, ngf * 2, 4), "g3": g(ks[5], ngf * 2), "b3": jnp.zeros((ngf * 2,), jnp.float32),
        "w4": w(ks[6], ngf * 2, ngf,     4), "g4": g(ks[7], ngf),     "b4": jnp.zeros((ngf,), jnp.float32),
        "w5": w(ks[8], ngf,     3,       5),
    }


if __name__ == "__main__":
    ngf, nz, batch = 16, 16, 2
    key = jax.random.PRNGKey(0)
    pkey, xkey = jax.random.split(key)
    params = init_params(pkey, ngf, nz)
    x = jax.random.normal(xkey, (batch, nz, 1, 1), jnp.float32)   # (N, nz, 1, 1)

    fwd = jax.jit(netg_forward)
    out = jax.block_until_ready(fwd(x, params))

    assert out.shape == (batch, 3, 96, 96), out.shape
    assert out.dtype == jnp.float32
    assert bool(jnp.all(jnp.isfinite(out)))
    assert bool(jnp.all(jnp.abs(out) <= 1.0 + 1e-6))              # tanh range

    # structural self-check vs a plain-XLA reference that uses the same bf16 conv
    # operands (so the comparison is insensitive to bf16 rounding of the inputs)
    ref = jax.block_until_ready(jax.jit(netg_forward_ref)(x, params))
    assert float(jnp.max(jnp.abs(out - ref))) < 2e-2

    print("KERNEL_OK")
</pallas_src>

<mosaic_0001>
module attributes {stable_mosaic.version = 11 : i64} {
  func.func @_phase_mm_bn_kernel(%arg0: i32, %arg1: memref<1x32x256xbf16, #tpu.memory_space<vmem>>, %arg2: memref<1x256x128xbf16, #tpu.memory_space<vmem>>, %arg3: memref<1x32x128xf32, #tpu.memory_space<vmem>>, %arg4: memref<1x1x128xf32, #tpu.memory_space<vmem>>, %arg5: memref<1x1x128xf32, #tpu.memory_space<vmem>>) attributes {dimension_semantics = [#tpu.dimension_semantics<parallel>], iteration_bounds = array<i64: 1>, scalar_prefetch = 0 : i64, scratch_operands = 0 : i64, tpu.core_type = #tpu.core_type<tc>, window_params = [{transform_indices = @transform_0, window_bounds = array<i64: 1, 32, 256>}, {transform_indices = @transform_1, window_bounds = array<i64: 1, 256, 128>}, {transform_indices = @transform_2, window_bounds = array<i64: 1, 32, 128>}, {transform_indices = @transform_3, window_bounds = array<i64: 1, 1, 128>}, {transform_indices = @transform_4, window_bounds = array<i64: 1, 1, 128>}]} {
    %c0 = arith.constant 0 : index
    %c0_0 = arith.constant 0 : index
    %c0_1 = arith.constant 0 : index
    %0 = vector.load %arg1[%c0, %c0_0, %c0_1] : memref<1x32x256xbf16, #tpu.memory_space<vmem>>, vector<1x32x256xbf16>
    %1 = vector.shape_cast %0 : vector<1x32x256xbf16> to vector<32x256xbf16>
    %c0_2 = arith.constant 0 : index
    %c0_3 = arith.constant 0 : index
    %c0_4 = arith.constant 0 : index
    %2 = vector.load %arg2[%c0_2, %c0_3, %c0_4] : memref<1x256x128xbf16, #tpu.memory_space<vmem>>, vector<1x256x128xbf16>
    %3 = vector.shape_cast %2 : vector<1x256x128xbf16> to vector<256x128xbf16>
    %cst = arith.constant dense<0.000000e+00> : vector<32x128xf32>
    %4 = tpu.matmul %1, %3, %cst {dimension_numbers = #tpu.dot_dimension_numbers<[1], [0], [0], [1], [0, 0, 1, 1], [], []>} : vector<32x256xbf16>, vector<256x128xbf16>, vector<32x128xf32> -> vector<32x128xf32>
    %c0_5 = arith.constant 0 : index
    %c0_6 = arith.constant 0 : index
    %c0_7 = arith.constant 0 : index
    %5 = vector.load %arg3[%c0_5, %c0_6, %c0_7] : memref<1x32x128xf32, #tpu.memory_space<vmem>>, vector<1x32x128xf32>
    %6 = vector.shape_cast %5 : vector<1x32x128xf32> to vector<32x128xf32>
    %7 = vector.shape_cast %4 : vector<32x128xf32> to vector<1x32x128xf32>
    tpu.vector_store %arg3[%c0_5, %c0_6, %c0_7], %7 {strides = array<i32>} : memref<1x32x128xf32, #tpu.memory_space<vmem>>, vector<1x32x128xf32>,
    %cst_8 = arith.constant dense<0.000000e+00> : vector<128xf32>
    %8 = vector.multi_reduction <add>, %4, %cst_8 [0] : vector<32x128xf32> to vector<128xf32>
    %9 = vector.shape_cast %8 : vector<128xf32> to vector<1x128xf32>
    %c0_9 = arith.constant 0 : index
    %c0_10 = arith.constant 0 : index
    %c0_11 = arith.constant 0 : index
    %10 = vector.load %arg4[%c0_9, %c0_10, %c0_11] : memref<1x1x128xf32, #tpu.memory_space<vmem>>, vector<1x1x128xf32>
    %11 = vector.shape_cast %10 : vector<1x1x128xf32> to vector<1x128xf32>
    %12 = vector.shape_cast %9 : vector<1x128xf32> to vector<1x1x128xf32>
    tpu.vector_store %arg4[%c0_9, %c0_10, %c0_11], %12 {strides = array<i32>} : memref<1x1x128xf32, #tpu.memory_space<vmem>>, vector<1x1x128xf32>,
    %13 = arith.mulf %4, %4 : vector<32x128xf32>
    %cst_12 = arith.constant dense<0.000000e+00> : vector<128xf32>
    %14 = vector.multi_reduction <add>, %13, %cst_12 [0] : vector<32x128xf32> to vector<128xf32>
    %15 = vector.shape_cast %14 : vector<128xf32> to vector<1x128xf32>
    %c0_13 = arith.constant 0 : index
    %c0_14 = arith.constant 0 : index
    %c0_15 = arith.constant 0 : index
    %16 = vector.load %arg5[%c0_13, %c0_14, %c0_15] : memref<1x1x128xf32, #tpu.memory_space<vmem>>, vector<1x1x128xf32>
    %17 = vector.shape_cast %16 : vector<1x1x128xf32> to vector<1x128xf32>
    %18 = vector.shape_cast %15 : vector<1x128xf32> to vector<1x1x128xf32>
    tpu.vector_store %arg5[%c0_13, %c0_14, %c0_15], %18 {strides = array<i32>} : memref<1x1x128xf32, #tpu.memory_space<vmem>>, vector<1x1x128xf32>,
    return
  }
  func.func @transform_0(%arg0: i32) -> (i32, i32, i32) {
    %c0_i32 = arith.constant 0 : i32
    %c0_i32_0 = arith.constant 0 : i32
    %c0_i32_1 = arith.constant 0 : i32
    return %arg0, %c0_i32, %c0_i32_0 : i32, i32, i32
  }
  func.func @transform_1(%arg0: i32) -> (i32, i32, i32) {
    %c0_i32 = arith.constant 0 : i32
    %c0_i32_0 = arith.constant 0 : i32
    %c0_i32_1 = arith.constant 0 : i32
    return %arg0, %c0_i32, %c0_i32_0 : i32, i32, i32
  }
  func.func @transform_2(%arg0: i32) -> (i32, i32, i32) {
    %c0_i32 = arith.constant 0 : i32
    %c0_i32_0 = arith.constant 0 : i32
    %c0_i32_1 = arith.constant 0 : i32
    return %arg0, %c0_i32, %c0_i32_0 : i32, i32, i32
  }
  func.func @transform_3(%arg0: i32) -> (i32, i32, i32) {
    %c0_i32 = arith.constant 0 : i32
    %c0_i32_0 = arith.constant 0 : i32
    %c0_i32_1 = arith.constant 0 : i32
    return %arg0, %c0_i32, %c0_i32_0 : i32, i32, i32
  }
  func.func @transform_4(%arg0: i32) -> (i32, i32, i32) {
    %c0_i32 = arith.constant 0 : i32
    %c0_i32_0 = arith.constant 0 : i32
    %c0_i32_1 = arith.constant 0 : i32
    return %arg0, %c0_i32, %c0_i32_0 : i32, i32, i32
  }
}

module attributes {stable_mosaic.version = 11 : i64} {
  func.func @_affine_relu_kernel(%arg0: i32, %arg1: memref<8x512xf32, #tpu.memory_space<vmem>>, %arg2: memref<1x512xf32, #tpu.memory_space<vmem>>, %arg3: memref<1x512xf32, #tpu.memory_space<vmem>>, %arg4: memref<8x512xf32, #tpu.memory_space<vmem>>) attributes {dimension_semantics = [#tpu.dimension_semantics<arbitrary>], iteration_bounds = array<i64: 1>, scalar_prefetch = 0 : i64, scratch_operands = 0 : i64, tpu.core_type = #tpu.core_type<tc>, window_params = [{pipeline_mode = #tpu.pipeline_mode<synchronous>, transform_indices = @transform_0, window_bounds = array<i64: 8, 512>}, {pipeline_mode = #tpu.pipeline_mode<synchronous>, transform_indices = @transform_1, window_bounds = array<i64: 1, 512>}, {pipeline_mode = #tpu.pipeline_mode<synchronous>, transform_indices = @transform_2, window_bounds = array<i64: 1, 512>}, {pipeline_mode = #tpu.pipeline_mode<synchronous>, transform_indices = @transform_3, window_bounds = array<i64: 8, 512>}]} {
    %c0 = arith.constant 0 : index
    %c0_0 = arith.constant 0 : index
    %0 = vector.load %arg1[%c0, %c0_0] : memref<8x512xf32, #tpu.memory_space<vmem>>, vector<8x512xf32>
    %c0_1 = arith.constant 0 : index
    %c0_2 = arith.constant 0 : index
    %1 = vector.load %arg2[%c0_1, %c0_2] : memref<1x512xf32, #tpu.memory_space<vmem>>, vector<1x512xf32>
    %2 = vector.broadcast %1 : vector<1x512xf32> to vector<8x512xf32>
    %3 = arith.mulf %0, %2 : vector<8x512xf32>
    %c0_3 = arith.constant 0 : index
    %c0_4 = arith.constant 0 : index
    %4 = vector.load %arg3[%c0_3, %c0_4] : memref<1x512xf32, #tpu.memory_space<vmem>>, vector<1x512xf32>
    %5 = vector.broadcast %4 : vector<1x512xf32> to vector<8x512xf32>
    %6 = arith.addf %3, %5 : vector<8x512xf32>
    %cst = arith.constant 0.000000e+00 : f32
    %7 = vector.broadcast %cst : f32 to vector<8x512xf32>
    %8 = arith.maximumf %6, %7 : vector<8x512xf32>
    %c0_5 = arith.constant 0 : index
    %c0_6 = arith.constant 0 : index
    %9 = vector.load %arg4[%c0_5, %c0_6] : memref<8x512xf32, #tpu.memory_space<vmem>>, vector<8x512xf32>
    tpu.vector_store %arg4[%c0_5, %c0_6], %8 {strides = array<i32>} : memref<8x512xf32, #tpu.memory_space<vmem>>, vector<8x512xf32>,
    return
  }
  func.func @transform_0(%arg0: i32) -> (i32, i32) {
    %c0_i32 = arith.constant 0 : i32
    %c0_i32_0 = arith.constant 0 : i32
    %c0_i32_1 = arith.constant 0 : i32
    return %c0_i32, %c0_i32_0 : i32, i32
  }
  func.func @transform_1(%arg0: i32) -> (i32, i32) {
    %c0_i32 = arith.constant 0 : i32
    %c0_i32_0 = arith.constant 0 : i32
    %c0_i32_1 = arith.constant 0 : i32
    return %c0_i32, %c0_i32_0 : i32, i32
  }
  func.func @transform_2(%arg0: i32) -> (i32, i32) {
    %c0_i32 = arith.constant 0 : i32
    %c0_i32_0 = arith.constant 0 : i32
    %c0_i32_1 = arith.constant 0 : i32
    return %c0_i32, %c0_i32_0 : i32, i32
  }
  func.func @transform_3(%arg0: i32) -> (i32, i32) {
    %c0_i32 = arith.constant 0 : i32
    %c0_i32_0 = arith.constant 0 : i32
    %c0_i32_1 = arith.constant 0 : i32
    return %c0_i32, %c0_i32_0 : i32, i32
  }
}

module attributes {stable_mosaic.version = 11 : i64} {
  func.func @_phase_mm_bn_kernel(%arg0: i32, %arg1: memref<1x32x512xbf16, #tpu.memory_space<vmem>>, %arg2: memref<1x512x128xbf16, #tpu.memory_space<vmem>>, %arg3: memref<1x32x64xf32, #tpu.memory_space<vmem>>, %arg4: memref<1x1x64xf32, #tpu.memory_space<vmem>>, %arg5: memref<1x1x64xf32, #tpu.memory_space<vmem>>) attributes {dimension_semantics = [#tpu.dimension_semantics<parallel>], iteration_bounds = array<i64: 4>, scalar_prefetch = 0 : i64, scratch_operands = 0 : i64, tpu.core_type = #tpu.core_type<tc>, window_params = [{transform_indices = @transform_0, window_bounds = array<i64: 1, 32, 512>}, {transform_indices = @transform_1, window_bounds = array<i64: 1, 512, 128>}, {transform_indices = @transform_2, window_bounds = array<i64: 1, 32, 64>}, {transform_indices = @transform_3, window_bounds = array<i64: 1, 1, 64>}, {transform_indices = @transform_4, window_bounds = array<i64: 1, 1, 64>}]} {
    %c0 = arith.constant 0 : index
    %c0_0 = arith.constant 0 : index
    %c0_1 = arith.constant 0 : index
    %0 = vector.load %arg1[%c0, %c0_0, %c0_1] : memref<1x32x512xbf16, #tpu.memory_space<vmem>>, vector<1x32x512xbf16>
    %1 = vector.shape_cast %0 : vector<1x32x512xbf16> to vector<32x512xbf16>
    %c0_2 = arith.constant 0 : index
    %c0_3 = arith.constant 0 : index
    %c0_4 = arith.constant 0 : index
    %2 = vector.load %arg2[%c0_2, %c0_3, %c0_4] : memref<1x512x128xbf16, #tpu.memory_space<vmem>>, vector<1x512x128xbf16>
    %3 = vector.shape_cast %2 : vector<1x512x128xbf16> to vector<512x128xbf16>
    %cst = arith.constant dense<0.000000e+00> : vector<32x128xf32>
    %4 = tpu.matmul %1, %3, %cst {dimension_numbers = #tpu.dot_dimension_numbers<[1], [0], [0], [1], [0, 0, 1, 1], [], []>} : vector<32x512xbf16>, vector<512x128xbf16>, vector<32x128xf32> -> vector<32x128xf32>
    %5 = vector.extract_strided_slice %4 {offsets = [0, 0], sizes = [32, 64], strides = [1, 1]} : vector<32x128xf32> to vector<32x64xf32>
    %c0_5 = arith.constant 0 : index
    %c0_6 = arith.constant 0 : index
    %c0_7 = arith.constant 0 : index
    %6 = vector.load %arg3[%c0_5, %c0_6, %c0_7] : memref<1x32x64xf32, #tpu.memory_space<vmem>>, vector<1x32x64xf32>
    %7 = vector.shape_cast %6 : vector<1x32x64xf32> to vector<32x64xf32>
    %8 = vector.shape_cast %5 : vector<32x64xf32> to vector<1x32x64xf32>
    tpu.vector_store %arg3[%c0_5, %c0_6, %c0_7], %8 {strides = array<i32>} : memref<1x32x64xf32, #tpu.memory_space<vmem>>, vector<1x32x64xf32>,
    %cst_8 = arith.constant dense<0.000000e+00> : vector<64xf32>
    %9 = vector.multi_reduction <add>, %5, %cst_8 [0] : vector<32x64xf32> to vector<64xf32>
    %10 = vector.shape_cast %9 : vector<64xf32> to vector<1x64xf32>
    %c0_9 = arith.constant 0 : index
    %c0_10 = arith.constant 0 : index
    %c0_11 = arith.constant 0 : index
    %11 = vector.load %arg4[%c0_9, %c0_10, %c0_11] : memref<1x1x64xf32, #tpu.memory_space<vmem>>, vector<1x1x64xf32>
    %12 = vector.shape_cast %11 : vector<1x1x64xf32> to vector<1x64xf32>
    %13 = vector.shape_cast %10 : vector<1x64xf32> to vector<1x1x64xf32>
    tpu.vector_store %arg4[%c0_9, %c0_10, %c0_11], %13 {strides = array<i32>} : memref<1x1x64xf32, #tpu.memory_space<vmem>>, vector<1x1x64xf32>,
    %14 = arith.mulf %5, %5 : vector<32x64xf32>
    %cst_12 = arith.constant dense<0.000000e+00> : vector<64xf32>
    %15 = vector.multi_reduction <add>, %14, %cst_12 [0] : vector<32x64xf32> to vector<64xf32>
    %16 = vector.shape_cast %15 : vector<64xf32> to vector<1x64xf32>
    %c0_13 = arith.constant 0 : index
    %c0_14 = arith.constant 0 : index
    %c0_15 = arith.constant 0 : index
    %17 = vector.load %arg5[%c0_13, %c0_14, %c0_15] : memref<1x1x64xf32, #tpu.memory_space<vmem>>, vector<1x1x64xf32>
    %18 = vector.shape_cast %17 : vector<1x1x64xf32> to vector<1x64xf32>
    %19 = vector.shape_cast %16 : vector<1x64xf32> to vector<1x1x64xf32>
    tpu.vector_store %arg5[%c0_13, %c0_14, %c0_15], %19 {strides = array<i32>} : memref<1x1x64xf32, #tpu.memory_space<vmem>>, vector<1x1x64xf32>,
    return
  }
  func.func @transform_0(%arg0: i32) -> (i32, i32, i32) {
    %c0_i32 = arith.constant 0 : i32
    %c0_i32_0 = arith.constant 0 : i32
    %c0_i32_1 = arith.constant 0 : i32
    return %arg0, %c0_i32, %c0_i32_0 : i32, i32, i32
  }
  func.func @transform_1(%arg0: i32) -> (i32, i32, i32) {
    %c0_i32 = arith.constant 0 : i32
    %c0_i32_0 = arith.constant 0 : i32
    %c0_i32_1 = arith.constant 0 : i32
    return %arg0, %c0_i32, %c0_i32_0 : i32, i32, i32
  }
  func.func @transform_2(%arg0: i32) -> (i32, i32, i32) {
    %c0_i32 = arith.constant 0 : i32
    %c0_i32_0 = arith.constant 0 : i32
    %c0_i32_1 = arith.constant 0 : i32
    return %arg0, %c0_i32, %c0_i32_0 : i32, i32, i32
  }
  func.func @transform_3(%arg0: i32) -> (i32, i32, i32) {
    %c0_i32 = arith.constant 0 : i32
    %c0_i32_0 = arith.constant 0 : i32
    %c0_i32_1 = arith.constant 0 : i32
    return %arg0, %c0_i32, %c0_i32_0 : i32, i32, i32
  }
  func.func @transform_4(%arg0: i32) -> (i32, i32, i32) {
    %c0_i32 = arith.constant 0 : i32
    %c0_i32_0 = arith.constant 0 : i32
    %c0_i32_1 = arith.constant 0 : i32
    return %arg0, %c0_i32, %c0_i32_0 : i32, i32, i32
  }
}

module attributes {stable_mosaic.version = 11 : i64} {
  func.func @_affine_relu_kernel(%arg0: i32, %arg1: memref<32x256xf32, #tpu.memory_space<vmem>>, %arg2: memref<1x256xf32, #tpu.memory_space<vmem>>, %arg3: memref<1x256xf32, #tpu.memory_space<vmem>>, %arg4: memref<32x256xf32, #tpu.memory_space<vmem>>) attributes {dimension_semantics = [#tpu.dimension_semantics<arbitrary>], iteration_bounds = array<i64: 1>, scalar_prefetch = 0 : i64, scratch_operands = 0 : i64, tpu.core_type = #tpu.core_type<tc>, window_params = [{pipeline_mode = #tpu.pipeline_mode<synchronous>, transform_indices = @transform_0, window_bounds = array<i64: 32, 256>}, {pipeline_mode = #tpu.pipeline_mode<synchronous>, transform_indices = @transform_1, window_bounds = array<i64: 1, 256>}, {pipeline_mode = #tpu.pipeline_mode<synchronous>, transform_indices = @transform_2, window_bounds = array<i64: 1, 256>}, {pipeline_mode = #tpu.pipeline_mode<synchronous>, transform_indices = @transform_3, window_bounds = array<i64: 32, 256>}]} {
    %c0 = arith.constant 0 : index
    %c0_0 = arith.constant 0 : index
    %0 = vector.load %arg1[%c0, %c0_0] : memref<32x256xf32, #tpu.memory_space<vmem>>, vector<32x256xf32>
    %c0_1 = arith.constant 0 : index
    %c0_2 = arith.constant 0 : index
    %1 = vector.load %arg2[%c0_1, %c0_2] : memref<1x256xf32, #tpu.memory_space<vmem>>, vector<1x256xf32>
    %2 = vector.broadcast %1 : vector<1x256xf32> to vector<32x256xf32>
    %3 = arith.mulf %0, %2 : vector<32x256xf32>
    %c0_3 = arith.constant 0 : index
    %c0_4 = arith.constant 0 : index
    %4 = vector.load %arg3[%c0_3, %c0_4] : memref<1x256xf32, #tpu.memory_space<vmem>>, vector<1x256xf32>
    %5 = vector.broadcast %4 : vector<1x256xf32> to vector<32x256xf32>
    %6 = arith.addf %3, %5 : vector<32x256xf32>
    %cst = arith.constant 0.000000e+00 : f32
    %7 = vector.broadcast %cst : f32 to vector<32x256xf32>
    %8 = arith.maximumf %6, %7 : vector<32x256xf32>
    %c0_5 = arith.constant 0 : index
    %c0_6 = arith.constant 0 : index
    %9 = vector.load %arg4[%c0_5, %c0_6] : memref<32x256xf32, #tpu.memory_space<vmem>>, vector<32x256xf32>
    tpu.vector_store %arg4[%c0_5, %c0_6], %8 {strides = array<i32>} : memref<32x256xf32, #tpu.memory_space<vmem>>, vector<32x256xf32>,
    return
  }
  func.func @transform_0(%arg0: i32) -> (i32, i32) {
    %c0_i32 = arith.constant 0 : i32
    %c0_i32_0 = arith.constant 0 : i32
    %c0_i32_1 = arith.constant 0 : i32
    return %c0_i32, %c0_i32_0 : i32, i32
  }
  func.func @transform_1(%arg0: i32) -> (i32, i32) {
    %c0_i32 = arith.constant 0 : i32
    %c0_i32_0 = arith.constant 0 : i32
    %c0_i32_1 = arith.constant 0 : i32
    return %c0_i32, %c0_i32_0 : i32, i32
  }
  func.func @transform_2(%arg0: i32) -> (i32, i32) {
    %c0_i32 = arith.constant 0 : i32
    %c0_i32_0 = arith.constant 0 : i32
    %c0_i32_1 = arith.constant 0 : i32
    return %c0_i32, %c0_i32_0 : i32, i32
  }
  func.func @transform_3(%arg0: i32) -> (i32, i32) {
    %c0_i32 = arith.constant 0 : i32
    %c0_i32_0 = arith.constant 0 : i32
    %c0_i32_1 = arith.constant 0 : i32
    return %c0_i32, %c0_i32_0 : i32, i32
  }
}

module attributes {stable_mosaic.version = 11 : i64} {
  func.func @_phase_mm_bn_kernel(%arg0: i32, %arg1: memref<1x128x256xbf16, #tpu.memory_space<vmem>>, %arg2: memref<1x256x128xbf16, #tpu.memory_space<vmem>>, %arg3: memref<1x128x32xf32, #tpu.memory_space<vmem>>, %arg4: memref<1x1x32xf32, #tpu.memory_space<vmem>>, %arg5: memref<1x1x32xf32, #tpu.memory_space<vmem>>) attributes {dimension_semantics = [#tpu.dimension_semantics<parallel>], iteration_bounds = array<i64: 4>, scalar_prefetch = 0 : i64, scratch_operands = 0 : i64, tpu.core_type = #tpu.core_type<tc>, window_params = [{transform_indices = @transform_0, window_bounds = array<i64: 1, 128, 256>}, {transform_indices = @transform_1, window_bounds = array<i64: 1, 256, 128>}, {transform_indices = @transform_2, window_bounds = array<i64: 1, 128, 32>}, {transform_indices = @transform_3, window_bounds = array<i64: 1, 1, 32>}, {transform_indices = @transform_4, window_bounds = array<i64: 1, 1, 32>}]} {
    %c0 = arith.constant 0 : index
    %c0_0 = arith.constant 0 : index
    %c0_1 = arith.constant 0 : index
    %0 = vector.load %arg1[%c0, %c0_0, %c0_1] : memref<1x128x256xbf16, #tpu.memory_space<vmem>>, vector<1x128x256xbf16>
    %1 = vector.shape_cast %0 : vector<1x128x256xbf16> to vector<128x256xbf16>
    %c0_2 = arith.constant 0 : index
    %c0_3 = arith.constant 0 : index
    %c0_4 = arith.constant 0 : index
    %2 = vector.load %arg2[%c0_2, %c0_3, %c0_4] : memref<1x256x128xbf16, #tpu.memory_space<vmem>>, vector<1x256x128xbf16>
    %3 = vector.shape_cast %2 : vector<1x256x128xbf16> to vector<256x128xbf16>
    %cst = arith.constant dense<0.000000e+00> : vector<128x128xf32>
    %4 = tpu.matmul %1, %3, %cst {dimension_numbers = #tpu.dot_dimension_numbers<[1], [0], [0], [1], [0, 0, 1, 1], [], []>} : vector<128x256xbf16>, vector<256x128xbf16>, vector<128x128xf32> -> vector<128x128xf32>
    %5 = vector.extract_strided_slice %4 {offsets = [0, 0], sizes = [128, 32], strides = [1, 1]} : vector<128x128xf32> to vector<128x32xf32>
    %c0_5 = arith.constant 0 : index
    %c0_6 = arith.constant 0 : index
    %c0_7 = arith.constant 0 : index
    %6 = vector.load %arg3[%c0_5, %c0_6, %c0_7] : memref<1x128x32xf32, #tpu.memory_space<vmem>>, vector<1x128x32xf32>
    %7 = vector.shape_cast %6 : vector<1x128x32xf32> to vector<128x32xf32>
    %8 = vector.shape_cast %5 : vector<128x32xf32> to vector<1x128x32xf32>
    tpu.vector_store %arg3[%c0_5, %c0_6, %c0_7], %8 {strides = array<i32>} : memref<1x128x32xf32, #tpu.memory_space<vmem>>, vector<1x128x32xf32>,
    %cst_8 = arith.constant dense<0.000000e+00> : vector<32xf32>
    %9 = vector.multi_reduction <add>, %5, %cst_8 [0] : vector<128x32xf32> to vector<32xf32>
    %10 = vector.shape_cast %9 : vector<32xf32> to vector<1x32xf32>
    %c0_9 = arith.constant 0 : index
    %c0_10 = arith.constant 0 : index
    %c0_11 = arith.constant 0 : index
    %11 = vector.load %arg4[%c0_9, %c0_10, %c0_11] : memref<1x1x32xf32, #tpu.memory_space<vmem>>, vector<1x1x32xf32>
    %12 = vector.shape_cast %11 : vector<1x1x32xf32> to vector<1x32xf32>
    %13 = vector.shape_cast %10 : vector<1x32xf32> to vector<1x1x32xf32>
    tpu.vector_store %arg4[%c0_9, %c0_10, %c0_11], %13 {strides = array<i32>} : memref<1x1x32xf32, #tpu.memory_space<vmem>>, vector<1x1x32xf32>,
    %14 = arith.mulf %5, %5 : vector<128x32xf32>
    %cst_12 = arith.constant dense<0.000000e+00> : vector<32xf32>
    %15 = vector.multi_reduction <add>, %14, %cst_12 [0] : vector<128x32xf32> to vector<32xf32>
    %16 = vector.shape_cast %15 : vector<32xf32> to vector<1x32xf32>
    %c0_13 = arith.constant 0 : index
    %c0_14 = arith.constant 0 : index
    %c0_15 = arith.constant 0 : index
    %17 = vector.load %arg5[%c0_13, %c0_14, %c0_15] : memref<1x1x32xf32, #tpu.memory_space<vmem>>, vector<1x1x32xf32>
    %18 = vector.shape_cast %17 : vector<1x1x32xf32> to vector<1x32xf32>
    %19 = vector.shape_cast %16 : vector<1x32xf32> to vector<1x1x32xf32>
    tpu.vector_store %arg5[%c0_13, %c0_14, %c0_15], %19 {strides = array<i32>} : memref<1x1x32xf32, #tpu.memory_space<vmem>>, vector<1x1x32xf32>,
    return
  }
  func.func @transform_0(%arg0: i32) -> (i32, i32, i32) {
    %c0_i32 = arith.constant 0 : i32
    %c0_i32_0 = arith.constant 0 : i32
    %c0_i32_1 = arith.constant 0 : i32
    return %arg0, %c0_i32, %c0_i32_0 : i32, i32, i32
  }
  func.func @transform_1(%arg0: i32) -> (i32, i32, i32) {
    %c0_i32 = arith.constant 0 : i32
    %c0_i32_0 = arith.constant 0 : i32
    %c0_i32_1 = arith.constant 0 : i32
    return %arg0, %c0_i32, %c0_i32_0 : i32, i32, i32
  }
  func.func @transform_2(%arg0: i32) -> (i32, i32, i32) {
    %c0_i32 = arith.constant 0 : i32
    %c0_i32_0 = arith.constant 0 : i32
    %c0_i32_1 = arith.constant 0 : i32
    return %arg0, %c0_i32, %c0_i32_0 : i32, i32, i32
  }
  func.func @transform_3(%arg0: i32) -> (i32, i32, i32) {
    %c0_i32 = arith.constant 0 : i32
    %c0_i32_0 = arith.constant 0 : i32
    %c0_i32_1 = arith.constant 0 : i32
    return %arg0, %c0_i32, %c0_i32_0 : i32, i32, i32
  }
  func.func @transform_4(%arg0: i32) -> (i32, i32, i32) {
    %c0_i32 = arith.constant 0 : i32
    %c0_i32_0 = arith.constant 0 : i32
    %c0_i32_1 = arith.constant 0 : i32
    return %arg0, %c0_i32, %c0_i32_0 : i32, i32, i32
  }
}

module attributes {stable_mosaic.version = 11 : i64} {
  func.func @_affine_relu_kernel(%arg0: i32, %arg1: memref<64x256xf32, #tpu.memory_space<vmem>>, %arg2: memref<1x256xf32, #tpu.memory_space<vmem>>, %arg3: memref<1x256xf32, #tpu.memory_space<vmem>>, %arg4: memref<64x256xf32, #tpu.memory_space<vmem>>) attributes {dimension_semantics = [#tpu.dimension_semantics<arbitrary>], iteration_bounds = array<i64: 1>, scalar_prefetch = 0 : i64, scratch_operands = 0 : i64, tpu.core_type = #tpu.core_type<tc>, window_params = [{pipeline_mode = #tpu.pipeline_mode<synchronous>, transform_indices = @transform_0, window_bounds = array<i64: 64, 256>}, {pipeline_mode = #tpu.pipeline_mode<synchronous>, transform_indices = @transform_1, window_bounds = array<i64: 1, 256>}, {pipeline_mode = #tpu.pipeline_mode<synchronous>, transform_indices = @transform_2, window_bounds = array<i64: 1, 256>}, {pipeline_mode = #tpu.pipeline_mode<synchronous>, transform_indices = @transform_3, window_bounds = array<i64: 64, 256>}]} {
    %c0 = arith.constant 0 : index
    %c0_0 = arith.constant 0 : index
    %0 = vector.load %arg1[%c0, %c0_0] : memref<64x256xf32, #tpu.memory_space<vmem>>, vector<64x256xf32>
    %c0_1 = arith.constant 0 : index
    %c0_2 = arith.constant 0 : index
    %1 = vector.load %arg2[%c0_1, %c0_2] : memref<1x256xf32, #tpu.memory_space<vmem>>, vector<1x256xf32>
    %2 = vector.broadcast %1 : vector<1x256xf32> to vector<64x256xf32>
    %3 = arith.mulf %0, %2 : vector<64x256xf32>
    %c0_3 = arith.constant 0 : index
    %c0_4 = arith.constant 0 : index
    %4 = vector.load %arg3[%c0_3, %c0_4] : memref<1x256xf32, #tpu.memory_space<vmem>>, vector<1x256xf32>
    %5 = vector.broadcast %4 : vector<1x256xf32> to vector<64x256xf32>
    %6 = arith.addf %3, %5 : vector<64x256xf32>
    %cst = arith.constant 0.000000e+00 : f32
    %7 = vector.broadcast %cst : f32 to vector<64x256xf32>
    %8 = arith.maximumf %6, %7 : vector<64x256xf32>
    %c0_5 = arith.constant 0 : index
    %c0_6 = arith.constant 0 : index
    %9 = vector.load %arg4[%c0_5, %c0_6] : memref<64x256xf32, #tpu.memory_space<vmem>>, vector<64x256xf32>
    tpu.vector_store %arg4[%c0_5, %c0_6], %8 {strides = array<i32>} : memref<64x256xf32, #tpu.memory_space<vmem>>, vector<64x256xf32>,
    return
  }
  func.func @transform_0(%arg0: i32) -> (i32, i32) {
    %c0_i32 = arith.constant 0 : i32
    %c0_i32_0 = arith.constant 0 : i32
    %c0_i32_1 = arith.constant 0 : i32
    return %c0_i32, %c0_i32_0 : i32, i32
  }
  func.func @transform_1(%arg0: i32) -> (i32, i32) {
    %c0_i32 = arith.constant 0 : i32
    %c0_i32_0 = arith.constant 0 : i32
    %c0_i32_1 = arith.constant 0 : i32
    return %c0_i32, %c0_i32_0 : i32, i32
  }
  func.func @transform_2(%arg0: i32) -> (i32, i32) {
    %c0_i32 = arith.constant 0 : i32
    %c0_i32_0 = arith.constant 0 : i32
    %c0_i32_1 = arith.constant 0 : i32
    return %c0_i32, %c0_i32_0 : i32, i32
  }
  func.func @transform_3(%arg0: i32) -> (i32, i32) {
    %c0_i32 = arith.constant 0 : i32
    %c0_i32_0 = arith.constant 0 : i32
    %c0_i32_1 = arith.constant 0 : i32
    return %c0_i32, %c0_i32_0 : i32, i32
  }
}

module attributes {stable_mosaic.version = 11 : i64} {
  func.func @_phase_mm_bn_kernel(%arg0: i32, %arg1: memref<1x512x128xbf16, #tpu.memory_space<vmem>>, %arg2: memref<1x128x128xbf16, #tpu.memory_space<vmem>>, %arg3: memref<1x512x16xf32, #tpu.memory_space<vmem>>, %arg4: memref<1x1x16xf32, #tpu.memory_space<vmem>>, %arg5: memref<1x1x16xf32, #tpu.memory_space<vmem>>) attributes {dimension_semantics = [#tpu.dimension_semantics<parallel>], iteration_bounds = array<i64: 4>, scalar_prefetch = 0 : i64, scratch_operands = 0 : i64, tpu.core_type = #tpu.core_type<tc>, window_params = [{transform_indices = @transform_0, window_bounds = array<i64: 1, 512, 128>}, {transform_indices = @transform_1, window_bounds = array<i64: 1, 128, 128>}, {transform_indices = @transform_2, window_bounds = array<i64: 1, 512, 16>}, {transform_indices = @transform_3, window_bounds = array<i64: 1, 1, 16>}, {transform_indices = @transform_4, window_bounds = array<i64: 1, 1, 16>}]} {
    %c0 = arith.constant 0 : index
    %c0_0 = arith.constant 0 : index
    %c0_1 = arith.constant 0 : index
    %0 = vector.load %arg1[%c0, %c0_0, %c0_1] : memref<1x512x128xbf16, #tpu.memory_space<vmem>>, vector<1x512x128xbf16>
    %1 = vector.shape_cast %0 : vector<1x512x128xbf16> to vector<512x128xbf16>
    %c0_2 = arith.constant 0 : index
    %c0_3 = arith.constant 0 : index
    %c0_4 = arith.constant 0 : index
    %2 = vector.load %arg2[%c0_2, %c0_3, %c0_4] : memref<1x128x128xbf16, #tpu.memory_space<vmem>>, vector<1x128x128xbf16>
    %3 = vector.shape_cast %2 : vector<1x128x128xbf16> to vector<128x128xbf16>
    %cst = arith.constant dense<0.000000e+00> : vector<512x128xf32>
    %4 = tpu.matmul %1, %3, %cst {dimension_numbers = #tpu.dot_dimension_numbers<[1], [0], [0], [1], [0, 0, 1, 1], [], []>} : vector<512x128xbf16>, vector<128x128xbf16>, vector<512x128xf32> -> vector<512x128xf32>
    %5 = vector.extract_strided_slice %4 {offsets = [0, 0], sizes = [512, 16], strides = [1, 1]} : vector<512x128xf32> to vector<512x16xf32>
    %c0_5 = arith.constant 0 : index
    %c0_6 = arith.constant 0 : index
    %c0_7 = arith.constant 0 : index
    %6 = vector.load %arg3[%c0_5, %c0_6, %c0_7] : memref<1x512x16xf32, #tpu.memory_space<vmem>>, vector<1x512x16xf32>
    %7 = vector.shape_cast %6 : vector<1x512x16xf32> to vector<512x16xf32>
    %8 = vector.shape_cast %5 : vector<512x16xf32> to vector<1x512x16xf32>
    tpu.vector_store %arg3[%c0_5, %c0_6, %c0_7], %8 {strides = array<i32>} : memref<1x512x16xf32, #tpu.memory_space<vmem>>, vector<1x512x16xf32>,
    %cst_8 = arith.constant dense<0.000000e+00> : vector<16xf32>
    %9 = vector.multi_reduction <add>, %5, %cst_8 [0] : vector<512x16xf32> to vector<16xf32>
    %10 = vector.shape_cast %9 : vector<16xf32> to vector<1x16xf32>
    %c0_9 = arith.constant 0 : index
    %c0_10 = arith.constant 0 : index
    %c0_11 = arith.constant 0 : index
    %11 = vector.load %arg4[%c0_9, %c0_10, %c0_11] : memref<1x1x16xf32, #tpu.memory_space<vmem>>, vector<1x1x16xf32>
    %12 = vector.shape_cast %11 : vector<1x1x16xf32> to vector<1x16xf32>
    %13 = vector.shape_cast %10 : vector<1x16xf32> to vector<1x1x16xf32>
    tpu.vector_store %arg4[%c0_9, %c0_10, %c0_11], %13 {strides = array<i32>} : memref<1x1x16xf32, #tpu.memory_space<vmem>>, vector<1x1x16xf32>,
    %14 = arith.mulf %5, %5 : vector<512x16xf32>
    %cst_12 = arith.constant dense<0.000000e+00> : vector<16xf32>
    %15 = vector.multi_reduction <add>, %14, %cst_12 [0] : vector<512x16xf32> to vector<16xf32>
    %16 = vector.shape_cast %15 : vector<16xf32> to vector<1x16xf32>
    %c0_13 = arith.constant 0 : index
    %c0_14 = arith.constant 0 : index
    %c0_15 = arith.constant 0 : index
    %17 = vector.load %arg5[%c0_13, %c0_14, %c0_15] : memref<1x1x16xf32, #tpu.memory_space<vmem>>, vector<1x1x16xf32>
    %18 = vector.shape_cast %17 : vector<1x1x16xf32> to vector<1x16xf32>
    %19 = vector.shape_cast %16 : vector<1x16xf32> to vector<1x1x16xf32>
    tpu.vector_store %arg5[%c0_13, %c0_14, %c0_15], %19 {strides = array<i32>} : memref<1x1x16xf32, #tpu.memory_space<vmem>>, vector<1x1x16xf32>,
    return
  }
  func.func @transform_0(%arg0: i32) -> (i32, i32, i32) {
    %c0_i32 = arith.constant 0 : i32
    %c0_i32_0 = arith.constant 0 : i32
    %c0_i32_1 = arith.constant 0 : i32
    return %arg0, %c0_i32, %c0_i32_0 : i32, i32, i32
  }
  func.func @transform_1(%arg0: i32) -> (i32, i32, i32) {
    %c0_i32 = arith.constant 0 : i32
    %c0_i32_0 = arith.constant 0 : i32
    %c0_i32_1 = arith.constant 0 : i32
    return %arg0, %c0_i32, %c0_i32_0 : i32, i32, i32
  }
  func.func @transform_2(%arg0: i32) -> (i32, i32, i32) {
    %c0_i32 = arith.constant 0 : i32
    %c0_i32_0 = arith.constant 0 : i32
    %c0_i32_1 = arith.constant 0 : i32
    return %arg0, %c0_i32, %c0_i32_0 : i32, i32, i32
  }
  func.func @transform_3(%arg0: i32) -> (i32, i32, i32) {
    %c0_i32 = arith.constant 0 : i32
    %c0_i32_0 = arith.constant 0 : i32
    %c0_i32_1 = arith.constant 0 : i32
    return %arg0, %c0_i32, %c0_i32_0 : i32, i32, i32
  }
  func.func @transform_4(%arg0: i32) -> (i32, i32, i32) {
    %c0_i32 = arith.constant 0 : i32
    %c0_i32_0 = arith.constant 0 : i32
    %c0_i32_1 = arith.constant 0 : i32
    return %arg0, %c0_i32, %c0_i32_0 : i32, i32, i32
  }
}

module attributes {stable_mosaic.version = 11 : i64} {
  func.func @_affine_relu_kernel(%arg0: i32, %arg1: memref<128x256xf32, #tpu.memory_space<vmem>>, %arg2: memref<1x256xf32, #tpu.memory_space<vmem>>, %arg3: memref<1x256xf32, #tpu.memory_space<vmem>>, %arg4: memref<128x256xf32, #tpu.memory_space<vmem>>) attributes {dimension_semantics = [#tpu.dimension_semantics<arbitrary>], iteration_bounds = array<i64: 1>, scalar_prefetch = 0 : i64, scratch_operands = 0 : i64, tpu.core_type = #tpu.core_type<tc>, window_params = [{pipeline_mode = #tpu.pipeline_mode<synchronous>, transform_indices = @transform_0, window_bounds = array<i64: 128, 256>}, {pipeline_mode = #tpu.pipeline_mode<synchronous>, transform_indices = @transform_1, window_bounds = array<i64: 1, 256>}, {pipeline_mode = #tpu.pipeline_mode<synchronous>, transform_indices = @transform_2, window_bounds = array<i64: 1, 256>}, {pipeline_mode = #tpu.pipeline_mode<synchronous>, transform_indices = @transform_3, window_bounds = array<i64: 128, 256>}]} {
    %c0 = arith.constant 0 : index
    %c0_0 = arith.constant 0 : index
    %0 = vector.load %arg1[%c0, %c0_0] : memref<128x256xf32, #tpu.memory_space<vmem>>, vector<128x256xf32>
    %c0_1 = arith.constant 0 : index
    %c0_2 = arith.constant 0 : index
    %1 = vector.load %arg2[%c0_1, %c0_2] : memref<1x256xf32, #tpu.memory_space<vmem>>, vector<1x256xf32>
    %2 = vector.broadcast %1 : vector<1x256xf32> to vector<128x256xf32>
    %3 = arith.mulf %0, %2 : vector<128x256xf32>
    %c0_3 = arith.constant 0 : index
    %c0_4 = arith.constant 0 : index
    %4 = vector.load %arg3[%c0_3, %c0_4] : memref<1x256xf32, #tpu.memory_space<vmem>>, vector<1x256xf32>
    %5 = vector.broadcast %4 : vector<1x256xf32> to vector<128x256xf32>
    %6 = arith.addf %3, %5 : vector<128x256xf32>
    %cst = arith.constant 0.000000e+00 : f32
    %7 = vector.broadcast %cst : f32 to vector<128x256xf32>
    %8 = arith.maximumf %6, %7 : vector<128x256xf32>
    %c0_5 = arith.constant 0 : index
    %c0_6 = arith.constant 0 : index
    %9 = vector.load %arg4[%c0_5, %c0_6] : memref<128x256xf32, #tpu.memory_space<vmem>>, vector<128x256xf32>
    tpu.vector_store %arg4[%c0_5, %c0_6], %8 {strides = array<i32>} : memref<128x256xf32, #tpu.memory_space<vmem>>, vector<128x256xf32>,
    return
  }
  func.func @transform_0(%arg0: i32) -> (i32, i32) {
    %c0_i32 = arith.constant 0 : i32
    %c0_i32_0 = arith.constant 0 : i32
    %c0_i32_1 = arith.constant 0 : i32
    return %c0_i32, %c0_i32_0 : i32, i32
  }
  func.func @transform_1(%arg0: i32) -> (i32, i32) {
    %c0_i32 = arith.constant 0 : i32
    %c0_i32_0 = arith.constant 0 : i32
    %c0_i32_1 = arith.constant 0 : i32
    return %c0_i32, %c0_i32_0 : i32, i32
  }
  func.func @transform_2(%arg0: i32) -> (i32, i32) {
    %c0_i32 = arith.constant 0 : i32
    %c0_i32_0 = arith.constant 0 : i32
    %c0_i32_1 = arith.constant 0 : i32
    return %c0_i32, %c0_i32_0 : i32, i32
  }
  func.func @transform_3(%arg0: i32) -> (i32, i32) {
    %c0_i32 = arith.constant 0 : i32
    %c0_i32_0 = arith.constant 0 : i32
    %c0_i32_1 = arith.constant 0 : i32
    return %c0_i32, %c0_i32_0 : i32, i32
  }
}

module attributes {stable_mosaic.version = 11 : i64} {
  func.func @_phase_mm_tanh_kernel(%arg0: i32, %arg1: i32, %arg2: memref<1x512x128xbf16, #tpu.memory_space<vmem>>, %arg3: memref<1x128x128xbf16, #tpu.memory_space<vmem>>, %arg4: memref<1x512x3xf32, #tpu.memory_space<vmem>>) attributes {dimension_semantics = [#tpu.dimension_semantics<parallel>, #tpu.dimension_semantics<parallel>], iteration_bounds = array<i64: 9, 4>, scalar_prefetch = 0 : i64, scratch_operands = 0 : i64, tpu.core_type = #tpu.core_type<tc>, window_params = [{transform_indices = @transform_0, window_bounds = array<i64: 1, 512, 128>}, {transform_indices = @transform_1, window_bounds = array<i64: 1, 128, 128>}, {transform_indices = @transform_2, window_bounds = array<i64: 1, 512, 3>}]} {
    %c0 = arith.constant 0 : index
    %c0_0 = arith.constant 0 : index
    %c0_1 = arith.constant 0 : index
    %0 = vector.load %arg2[%c0, %c0_0, %c0_1] : memref<1x512x128xbf16, #tpu.memory_space<vmem>>, vector<1x512x128xbf16>
    %1 = vector.shape_cast %0 : vector<1x512x128xbf16> to vector<512x128xbf16>
    %c0_2 = arith.constant 0 : index
    %c0_3 = arith.constant 0 : index
    %c0_4 = arith.constant 0 : index
    %2 = vector.load %arg3[%c0_2, %c0_3, %c0_4] : memref<1x128x128xbf16, #tpu.memory_space<vmem>>, vector<1x128x128xbf16>
    %3 = vector.shape_cast %2 : vector<1x128x128xbf16> to vector<128x128xbf16>
    %cst = arith.constant dense<0.000000e+00> : vector<512x128xf32>
    %4 = tpu.matmul %1, %3, %cst {dimension_numbers = #tpu.dot_dimension_numbers<[1], [0], [0], [1], [0, 0, 1, 1], [], []>} : vector<512x128xbf16>, vector<128x128xbf16>, vector<512x128xf32> -> vector<512x128xf32>
    %5 = vector.extract_strided_slice %4 {offsets = [0, 0], sizes = [512, 3], strides = [1, 1]} : vector<512x128xf32> to vector<512x3xf32>
    %6 = math.tanh %5 : vector<512x3xf32>
    %c0_5 = arith.constant 0 : index
    %c0_6 = arith.constant 0 : index
    %c0_7 = arith.constant 0 : index
    %7 = vector.load %arg4[%c0_5, %c0_6, %c0_7] : memref<1x512x3xf32, #tpu.memory_space<vmem>>, vector<1x512x3xf32>
    %8 = vector.shape_cast %7 : vector<1x512x3xf32> to vector<512x3xf32>
    %9 = vector.shape_cast %6 : vector<512x3xf32> to vector<1x512x3xf32>
    tpu.vector_store %arg4[%c0_5, %c0_6, %c0_7], %9 {strides = array<i32>} : memref<1x512x3xf32, #tpu.memory_space<vmem>>, vector<1x512x3xf32>,
    return
  }
  func.func @transform_0(%arg0: i32, %arg1: i32) -> (i32, i32, i32) {
    %c0_i32 = arith.constant 0 : i32
    %c0_i32_0 = arith.constant 0 : i32
    return %arg0, %arg1, %c0_i32 : i32, i32, i32
  }
  func.func @transform_1(%arg0: i32, %arg1: i32) -> (i32, i32, i32) {
    %c0_i32 = arith.constant 0 : i32
    %c0_i32_0 = arith.constant 0 : i32
    %c0_i32_1 = arith.constant 0 : i32
    return %arg0, %c0_i32, %c0_i32_0 : i32, i32, i32
  }
  func.func @transform_2(%arg0: i32, %arg1: i32) -> (i32, i32, i32) {
    %c0_i32 = arith.constant 0 : i32
    %c0_i32_0 = arith.constant 0 : i32
    return %arg0, %arg1, %c0_i32 : i32, i32, i32
  }
}

</mosaic_0001>

<llo_original>
// kernel: tile.48
$region0: #{tile.48}
  #allocation0 [shape = 's32[1]{0}', space=sflag, size = 0x4, scoped, tag = 'scoped memory for tile.48']
  %s0 = inlined_call_operand.vmem [shape: f32[128], index: 0, kind: input, shape index: {}]
  %s1 = inlined_call_operand.vmem [shape: f32[4,128], index: 1, kind: output, shape index: {}]
  // Predicated region
  $region2: #{tile.48} parent=0 // pred_check
    _
  $region3: #{tile.48} parent=0 // pred_check_branch
    %3 = sbr.rel (0) target = $region5
  $region4: #{tile.48} parent=0 // pred_region
    _
  $region5: #{tile.48} parent=0 // pred_fallthru
    _
  %v4 = vld [vmem:[%s0] ss:$0 sm:$0xff]
  %5 = vst [vmem:[%s1] sm:$0xf] %v4

// kernel: netg_forward.10
$region0: #{netg_forward.10}
  #allocation0 [shape = 'u32[]', space=smem, size = 0x4, offset = 0x4, fixed_abs, tag = 'smem constant byte address 0x4 - core index']
  #allocation1 [shape = 'u32[144,128]{1,0:T(1,128)}', space=vmem, size = 0x12000, scoped, tag = 'internal scratch']
  %s0 = inlined_call_operand.vmem [shape: f32[8,512], index: 0, kind: input, shape index: {}]
  %s1 = inlined_call_operand.vmem [shape: f32[1,512], index: 1, kind: input, shape index: {}]
  %s2 = inlined_call_operand.vmem [shape: f32[1,512], index: 2, kind: input, shape index: {}]
  %s3 = inlined_call_operand.vmem [shape: f32[8,512], index: 3, kind: output, shape index: {}]
  %s4 = sld [smem:[#allocation0]]
  $region22: #{netg_forward.10} parent=0
    _
  %s6 = ssub.s32 1, %s4
  %s7 = scalar_select 0, %s6, %s4
  // Predicated region
  $region2: #{netg_forward.10} parent=0 // pred_check
    _
  $region3: #{netg_forward.10} parent=0 // pred_check_branch
    %9 = sbr.rel (0) target = $region5
  $region4: #{netg_forward.10} parent=0 // pred_region
    _
  $region5: #{netg_forward.10} parent=0 // pred_fallthru
    _
  // Predicated region
  $region6: #{netg_forward.10} parent=0 // pred_check
    _
  $region7: #{netg_forward.10} parent=0 // pred_check_branch
    %11 = sbr.rel (0) target = $region9
  $region8: #{netg_forward.10} parent=0 // pred_region
    _
  $region9: #{netg_forward.10} parent=0 // pred_fallthru
    _
  // Predicated region
  $region10: #{netg_forward.10} parent=0 // pred_check
    _
  $region11: #{netg_forward.10} parent=0 // pred_check_branch
    %13 = sbr.rel (0) target = $region13
  $region12: #{netg_forward.10} parent=0 // pred_region
    _
  $region13: #{netg_forward.10} parent=0 // pred_fallthru
    _
  %v14 = vld [vmem:[%s0] sm:$0xff]
  %v15 = vld [vmem:[%s0 + $0x8] sm:$0xff]
  %v16 = vld [vmem:[%s0 + $0x10] sm:$0xff]
  %v17 = vld [vmem:[%s0 + $0x18] sm:$0xff]
  %v18 = vld [vmem:[%s1] sm:$0xf]
  %v20 = vlaneseq
  %v21 = vshrl.u32 %v20, 7
  %v22 = vsub.s32 0, %v21
  %v23 = vrot.slane %v18, %v22
  %v24 = vlaneseq
  %v25 = vshrl.u32 %v24, 7
  %v26 = vsub.s32 1, %v25
  %v27 = vrot.slane %v18, %v26
  %v28 = vlaneseq
  %v29 = vshrl.u32 %v28, 7
  %v30 = vsub.s32 2, %v29
  %v31 = vrot.slane %v18, %v30
  %v32 = vlaneseq
  %v33 = vshrl.u32 %v32, 7
  %v34 = vsub.s32 3, %v33
  %v35 = vrot.slane %v18, %v34
  %v40 = vmul.f32 %v14, %v23
  %v41 = vmul.f32 %v15, %v27
  %v42 = vmul.f32 %v16, %v31
  %v43 = vmul.f32 %v17, %v35
  %v44 = vld [vmem:[%s2] sm:$0xf]
  %v46 = vlaneseq
  %v47 = vshrl.u32 %v46, 7
  %v48 = vsub.s32 0, %v47
  %v49 = vrot.slane %v44, %v48
  %v50 = vlaneseq
  %v51 = vshrl.u32 %v50, 7
  %v52 = vsub.s32 1, %v51
  %v53 = vrot.slane %v44, %v52
  %v54 = vlaneseq
  %v55 = vshrl.u32 %v54, 7
  %v56 = vsub.s32 2, %v55
  %v57 = vrot.slane %v44, %v56
  %v58 = vlaneseq
  %v59 = vshrl.u32 %v58, 7
  %v60 = vsub.s32 3, %v59
  %v61 = vrot.slane %v44, %v60
  %v66 = vadd.f32 %v40, %v49
  %v67 = vadd.f32 %v41, %v53
  %v68 = vadd.f32 %v42, %v57
  %v69 = vadd.f32 %v43, %v61
  %v70 = vmax.f32 %v66, 0.0
  %v71 = vmax.f32 %v67, 0.0
  %v72 = vmax.f32 %v68, 0.0
  %v73 = vmax.f32 %v69, 0.0
  %74 = vst [vmem:[%s3] sm:$0xff] %v70
  %75 = vst [vmem:[%s3 + $0x8] sm:$0xff] %v71
  %76 = vst [vmem:[%s3 + $0x10] sm:$0xff] %v72
  %77 = vst [vmem:[%s3 + $0x18] sm:$0xff] %v73
  // Predicated region
  $region14: #{netg_forward.10} parent=0 // pred_check
    _
  $region15: #{netg_forward.10} parent=0 // pred_check_branch
    %79 = sbr.rel (0) target = $region17
  $region16: #{netg_forward.10} parent=0 // pred_region
    _
  $region17: #{netg_forward.10} parent=0 // pred_fallthru
    _
  // Predicated region
  $region18: #{netg_forward.10} parent=0 // pred_check
    _
  $region19: #{netg_forward.10} parent=0 // pred_check_branch
    %81 = sbr.rel (0) target = $region21
  $region20: #{netg_forward.10} parent=0 // pred_region
    _
  $region21: #{netg_forward.10} parent=0 // pred_fallthru
    _

// kernel: netg_forward.9
$region0: #{netg_forward.9}
  #allocation0 [shape = 'u32[]', space=smem, size = 0x4, offset = 0x4, fixed_abs, tag = 'smem constant byte address 0x4 - core index']
  #allocation1 [shape = 'u32[144,128]{1,0:T(1,128)}', space=vmem, size = 0x12000, scoped, tag = 'internal scratch']
  %s0 = inlined_call_operand.vmem [shape: bf16[1,32,256], index: 0, kind: input, shape index: {}]
  %s1 = inlined_call_operand.vmem [shape: bf16[1,256,128], index: 1, kind: input, shape index: {}]
  %s2 = inlined_call_operand.vmem [shape: f32[1,32,128], index: 2, kind: output, shape index: {0}]
  %s3 = inlined_call_operand.vmem [shape: f32[1,1,128], index: 3, kind: output, shape index: {1}]
  %s4 = inlined_call_operand.vmem [shape: f32[1,1,128], index: 4, kind: output, shape index: {2}]
  %5 = xla_tuple %s2, %s3, %s4
  %s6 = sld [smem:[#allocation0]]
  $region34: #{netg_forward.9} parent=0
    _
  %s8 = ssub.s32 1, %s6
  %s9 = scalar_select 0, %s8, %s6
  // Predicated region
  $region2: #{netg_forward.9} parent=0 // pred_check
    _
  $region3: #{netg_forward.9} parent=0 // pred_check_branch
    %11 = sbr.rel (0) target = $region5
  $region4: #{netg_forward.9} parent=0 // pred_region
    _
  $region5: #{netg_forward.9} parent=0 // pred_fallthru
    _
  // Predicated region
  $region6: #{netg_forward.9} parent=0 // pred_check
    _
  $region7: #{netg_forward.9} parent=0 // pred_check_branch
    %13 = sbr.rel (0) target = $region9
  $region8: #{netg_forward.9} parent=0 // pred_region
    _
  $region9: #{netg_forward.9} parent=0 // pred_fallthru
    _
  %v15 = vld [vmem:[%s0] sm:$0xff]
  %v16 = vld [vmem:[%s0 + $0x8] sm:$0xff]
  %v17 = vld [vmem:[%s0 + $0x10] sm:$0xff]
  %v18 = vld [vmem:[%s0 + $0x18] sm:$0xff]
  %v19 = vld [vmem:[%s1] sm:$0xf]
  %v20 = vld [vmem:[%s1 + $0x4] sm:$0xf]
  %v21 = vld [vmem:[%s1 + $0x8] sm:$0xf]
  %v22 = vld [vmem:[%s1 + $0xc] sm:$0xf]
  %v23 = vld [vmem:[%s1 + $0x10] sm:$0xf]
  %v24 = vld [vmem:[%s1 + $0x14] sm:$0xf]
  %v25 = vld [vmem:[%s1 + $0x18] sm:$0xf]
  %v26 = vld [vmem:[%s1 + $0x1c] sm:$0xf]
  %v27 = vld [vmem:[%s1 + $0x20] sm:$0xf]
  %v28 = vld [vmem:[%s1 + $0x24] sm:$0xf]
  %v29 = vld [vmem:[%s1 + $0x28] sm:$0xf]
  %v30 = vld [vmem:[%s1 + $0x2c] sm:$0xf]
  %v31 = vld [vmem:[%s1 + $0x30] sm:$0xf]
  %v32 = vld [vmem:[%s1 + $0x34] sm:$0xf]
  %v33 = vld [vmem:[%s1 + $0x38] sm:$0xf]
  %v34 = vld [vmem:[%s1 + $0x3c] sm:$0xf]
  %v35 = vld [vmem:[%s1 + $0x40] sm:$0xf]
  %v36 = vld [vmem:[%s1 + $0x44] sm:$0xf]
  %v37 = vld [vmem:[%s1 + $0x48] sm:$0xf]
  %v38 = vld [vmem:[%s1 + $0x4c] sm:$0xf]
  %v39 = vld [vmem:[%s1 + $0x50] sm:$0xf]
  %v40 = vld [vmem:[%s1 + $0x54] sm:$0xf]
  %v41 = vld [vmem:[%s1 + $0x58] sm:$0xf]
  %v42 = vld [vmem:[%s1 + $0x5c] sm:$0xf]
  %v43 = vld [vmem:[%s1 + $0x60] sm:$0xf]
  %v44 = vld [vmem:[%s1 + $0x64] sm:$0xf]
  %v45 = vld [vmem:[%s1 + $0x68] sm:$0xf]
  %v46 = vld [vmem:[%s1 + $0x6c] sm:$0xf]
  %v47 = vld [vmem:[%s1 + $0x70] sm:$0xf]
  %v48 = vld [vmem:[%s1 + $0x74] sm:$0xf]
  %v49 = vld [vmem:[%s1 + $0x78] sm:$0xf]
  %v50 = vld [vmem:[%s1 + $0x7c] sm:$0xf]
  %v55 = vunpack.c.l.b16 %v15
  %v56 = vunpack.c.h.b16 %v15
  %v57 = vunpack.c.l.b16 %v16
  %v58 = vunpack.c.h.b16 %v16
  %v59 = vunpack.c.l.b16 %v17
  %v60 = vunpack.c.h.b16 %v17
  %v61 = vunpack.c.l.b16 %v18
  %v62 = vunpack.c.h.b16 %v18
  %v63 = vpack.c.b16 %v57, %v55
  %v64 = vpack.c.b16 %v58, %v56
  %v65 = vpack.c.b16 %v61, %v59
  %v66 = vpack.c.b16 %v62, %v60
  %v103 = vunpack.c.l.b16 %v19
  %v104 = vunpack.c.l.b16 %v20
  %v105 = vunpack.c.l.b16 %v21
  %v106 = vunpack.c.l.b16 %v22
  %v107 = vunpack.c.l.b16 %v23
  %v108 = vunpack.c.l.b16 %v24
  %v109 = vunpack.c.l.b16 %v25
  %v110 = vunpack.c.l.b16 %v26
  %v111 = vunpack.c.l.b16 %v27
  %v112 = vunpack.c.l.b16 %v28
  %v113 = vunpack.c.l.b16 %v29
  %v114 = vunpack.c.l.b16 %v30
  %v115 = vunpack.c.l.b16 %v31
  %v116 = vunpack.c.l.b16 %v32
  %v117 = vunpack.c.l.b16 %v33
  %v118 = vunpack.c.l.b16 %v34
  %v119 = vunpack.c.l.b16 %v35
  %v120 = vunpack.c.l.b16 %v36
  %v121 = vunpack.c.l.b16 %v37
  %v122 = vunpack.c.l.b16 %v38
  %v123 = vunpack.c.l.b16 %v39
  %v124 = vunpack.c.l.b16 %v40
  %v125 = vunpack.c.l.b16 %v41
  %v126 = vunpack.c.l.b16 %v42
  %v127 = vunpack.c.l.b16 %v43
  %v128 = vunpack.c.l.b16 %v44
  %v129 = vunpack.c.l.b16 %v45
  %v130 = vunpack.c.l.b16 %v46
  %v131 = vunpack.c.l.b16 %v47
  %v132 = vunpack.c.l.b16 %v48
  %v133 = vunpack.c.l.b16 %v49
  %v134 = vunpack.c.l.b16 %v50
  %v135 = vpack.c.b16 %v104, %v103
  %v136 = vpack.c.b16 %v106, %v105
  %v137 = vpack.c.b16 %v108, %v107
  %v138 = vpack.c.b16 %v110, %v109
  %v139 = vpack.c.b16 %v112, %v111
  %v140 = vpack.c.b16 %v114, %v113
  %v141 = vpack.c.b16 %v116, %v115
  %v142 = vpack.c.b16 %v118, %v117
  %v143 = vpack.c.b16 %v120, %v119
  %v144 = vpack.c.b16 %v122, %v121
  %v145 = vpack.c.b16 %v124, %v123
  %v146 = vpack.c.b16 %v126, %v125
  %v147 = vpack.c.b16 %v128, %v127
  %v148 = vpack.c.b16 %v130, %v129
  %v149 = vpack.c.b16 %v132, %v131
  %v150 = vpack.c.b16 %v134, %v133
  %167 = vmatprep.subr.bf16.mxu0 0
  %168 = vmatpush1.bf16.msra.mxu0 %v135
  %169 = vmatprep.subr.bf16.mxu0 0
  %170 = vmatpush1.bf16.msra.mxu0 %v136
  %171 = vmatprep.subr.bf16.mxu0 0
  %172 = vmatpush1.bf16.msra.mxu0 %v137
  %173 = vmatprep.subr.bf16.mxu0 0
  %174 = vmatpush1.bf16.msra.mxu0 %v138
  %175 = vmatprep.subr.bf16.mxu0 0
  %176 = vmatpush1.bf16.msra.mxu0 %v139
  %177 = vmatprep.subr.bf16.mxu0 0
  %178 = vmatpush1.bf16.msra.mxu0 %v140
  %179 = vmatprep.subr.bf16.mxu0 0
  %180 = vmatpush1.bf16.msra.mxu0 %v141
  %181 = vmatprep.subr.bf16.mxu0 0
  %182 = vmatpush1.bf16.msra.mxu0 %v142
  %183 = vmatprep.subr.bf16.mxu0 0
  %184 = vmatpush1.bf16.msra.mxu0 %v143
  %185 = vmatprep.subr.bf16.mxu0 0
  %186 = vmatpush1.bf16.msra.mxu0 %v144
  %187 = vmatprep.subr.bf16.mxu0 0
  %188 = vmatpush1.bf16.msra.mxu0 %v145
  %189 = vmatprep.subr.bf16.mxu0 0
  %190 = vmatpush1.bf16.msra.mxu0 %v146
  %191 = vmatprep.subr.bf16.mxu0 0
  %192 = vmatpush1.bf16.msra.mxu0 %v147
  %193 = vmatprep.subr.bf16.mxu0 0
  %194 = vmatpush1.bf16.msra.mxu0 %v148
  %195 = vmatprep.subr.bf16.mxu0 0
  %196 = vmatpush1.bf16.msra.mxu0 %v149
  %197 = vmatprep.subr.bf16.mxu0 0
  %198 = vmatpush1.bf16.msra.mxu0 %v150
  %199 = vmatprep.mubr.bf16.mxu0 %v64
  %200 = vmatmul.mubr.bf16.gmra.mrb[0].mxu0 %v63
  %v201 = vpop.f32.mrb[0].mxu0
  %v202 = vadd.f32 0.0, %v201
  %v203 = vpop.f32.mrb[0].mxu0
  %v204 = vpop.f32.mrb[0].mxu0
  %v205 = vadd.f32 0.0, %v204
  %v206 = vpop.f32.mrb[0].mxu0
  %207 = vmatprep.mubr.bf16.mxu0 %v66
  %208 = vmatmul.mubr.bf16.gmra.mrb[0].mxu0 %v65
  %v209 = vpop.f32.mrb[0].mxu0
  %v210 = vadd.f32 0.0, %v209
  %v211 = vpop.f32.mrb[0].mxu0
  %v212 = vpop.f32.mrb[0].mxu0
  %v213 = vadd.f32 0.0, %v212
  %v214 = vpop.f32.mrb[0].mxu0
  %215 = vdwg.mxu0
  %216 = vst [vmem:[%s2] sm:$0xff] %v202
  %217 = vst [vmem:[%s2 + $0x8] sm:$0xff] %v205
  %218 = vst [vmem:[%s2 + $0x10] sm:$0xff] %v210
  %219 = vst [vmem:[%s2 + $0x18] sm:$0xff] %v213
  %v220 = vadd.f32 %v202, %v205
  %v221 = vadd.f32 %v220, %v210
  %v222 = vadd.f32 %v221, %v213
  %v223 = vrot.slane %v222, 4
  %v224 = vadd.f32 %v222, %v223
  %v225 = vrot.slane %v224, 2
  %v226 = vadd.f32 %v224, %v225
  %v227 = vrot.slane %v226, 1
  %v228 = vadd.f32 %v226, %v227
  %229 = vst [vmem:[%s3] sm:$0x1] %v228
  %v230 = vmul.f32 %v202, %v202
  %v231 = vmul.f32 %v205, %v205
  %v232 = vmul.f32 %v210, %v210
  %v233 = vmul.f32 %v213, %v213
  %v234 = vadd.f32 %v230, %v231
  %v235 = vadd.f32 %v234, %v232
  %v236 = vadd.f32 %v235, %v233
  %v237 = vrot.slane %v236, 4
  %v238 = vadd.f32 %v236, %v237
  %v239 = vrot.slane %v238, 2
  %v240 = vadd.f32 %v238, %v239
  %v241 = vrot.slane %v240, 1
  %v242 = vadd.f32 %v240, %v241
  %243 = vst [vmem:[%s4] sm:$0x1] %v242
  // Predicated region
  $region10: #{netg_forward.9} parent=0 // pred_check
    _
  $region11: #{netg_forward.9} parent=0 // pred_check_branch
    %245 = sbr.rel (0) target = $region13
  $region12: #{netg_forward.9} parent=0 // pred_region
    _
  $region13: #{netg_forward.9} parent=0 // pred_fallthru
    _
  // Predicated region
  $region14: #{netg_forward.9} parent=0 // pred_check
    _
  $region15: #{netg_forward.9} parent=0 // pred_check_branch
    %247 = sbr.rel (0) target = $region17
  $region16: #{netg_forward.9} parent=0 // pred_region
    _
  $region17: #{netg_forward.9} parent=0 // pred_fallthru
    _
  // Predicated region
  $region18: #{netg_forward.9} parent=0 // pred_check
    _
  $region19: #{netg_forward.9} parent=0 // pred_check_branch
    %249 = sbr.rel (0) target = $region21
  $region20: #{netg_forward.9} parent=0 // pred_region
    _
  $region21: #{netg_forward.9} parent=0 // pred_fallthru
    _
  // Predicated region
  $region22: #{netg_forward.9} parent=0 // pred_check
    _
  $region23: #{netg_forward.9} parent=0 // pred_check_branch
    %251 = sbr.rel (0) target = $region25
  $region24: #{netg_forward.9} parent=0 // pred_region
    _
  $region25: #{netg_forward.9} parent=0 // pred_fallthru
    _
  // Predicated region
  $region26: #{netg_forward.9} parent=0 // pred_check
    _
  $region27: #{netg_forward.9} parent=0 // pred_check_branch
    %253 = sbr.rel (0) target = $region29
  $region28: #{netg_forward.9} parent=0 // pred_region
    _
  $region29: #{netg_forward.9} parent=0 // pred_fallthru
    _
  // Predicated region
  $region30: #{netg_forward.9} parent=0 // pred_check
    _
  $region31: #{netg_forward.9} parent=0 // pred_check_branch
    %255 = sbr.rel (0) target = $region33
  $region32: #{netg_forward.9} parent=0 // pred_region
    _
  $region33: #{netg_forward.9} parent=0 // pred_fallthru
    _

// kernel: tile.58
$region0: #{tile.58}
  #allocation0 [shape = 's32[1]{0}', space=sflag, size = 0x4, scoped, tag = 'scoped memory for tile.58']
  %s0 = inlined_call_operand.vmem [shape: f32[64], index: 0, kind: input, shape index: {}]
  %s1 = inlined_call_operand.vmem [shape: f32[4,64], index: 1, kind: output, shape index: {}]
  // Predicated region
  $region2: #{tile.58} parent=0 // pred_check
    _
  $region3: #{tile.58} parent=0 // pred_check_branch
    %3 = sbr.rel (0) target = $region5
  $region4: #{tile.58} parent=0 // pred_region
    _
  $region5: #{tile.58} parent=0 // pred_fallthru
    _
  %v4 = vld [vmem:[%s0] ss:$0 sm:$0xff]
  %5 = vst [vmem:[%s1] sm:$0xf] %v4

// kernel: tile.59
$region0: #{tile.59}
  %s0 = inlined_call_operand.vmem [shape: f32[4,64], index: 0, kind: input, shape index: {}]
  %s1 = inlined_call_operand.vmem [shape: f32[1,256], index: 1, kind: output, shape index: {}]
  $region1: #{tile.59} parent=0
    #allocation0 [shape = 'u8[8192]{0}', space=vmem, size = 0x2000, scoped, tag = 'scoped mem for output reshape']
    #allocation1 [shape = 'u8[4096]{0}', space=vmem, size = 0x1000, scoped, tag = 'scoped mem for input reshape']
    %s3 = sshllo.u32 0, 4
    %v4 = vld [vmem:[%s0] sm:%s3]
    %5 = vst [vmem:[#allocation1] sm:%s3] %v4
    %s6 = smov 3
    %v7 = vld [vmem:[#allocation1] ss:$2 sm:%s6]
    %vm8 = vcmask 523264
    %9 = vst.msk [vmem:[#allocation0] ss:$8 sm:$0x3] %vm8, %v7
    %s10 = scalar_lea.vmem [#allocation1], 1
    %s11 = smov 3
    %v12 = vld [vmem:[%s10] ss:$2 sm:%s11]
    %13 = vrot.lane.b32.xlu0 %v12, 64
    %v14 = vpop.permute.xlu0 %13
    %vm15 = vcmask 1048064
    %16 = vst.msk [vmem:[#allocation0] ss:$8 sm:$0x3] %vm15, %v14
    %s18 = sshllo.u32 0, 1
    %v20 = vld [vmem:[#allocation0] sm:%s18]
    %s21 = sshllo.u32 0, 1
    %22 = vst [vmem:[%s1] sm:%s21] %v20
    %s23 = scalar_lea.vmem [#allocation0], 8
    %v24 = vld [vmem:[%s23] sm:%s18]
    %s25 = sshllo.u32 0, 1
    %s26 = scalar_lea.vmem %s1, 1
    %27 = vst [vmem:[%s26] sm:%s25] %v24

// kernel: netg_forward.11
$region0: #{netg_forward.11}
  #allocation0 [shape = 'u32[]', space=smem, size = 0x4, offset = 0x4, fixed_abs, tag = 'smem constant byte address 0x4 - core index']
  #allocation1 [shape = 'u32[144,128]{1,0:T(1,128)}', space=vmem, size = 0x12000, scoped, tag = 'internal scratch']
  %s0 = inlined_call_operand.vmem [shape: bf16[4,32,512], index: 0, kind: input, shape index: {}]
  %s1 = inlined_call_operand.vmem [shape: bf16[4,512,128], index: 1, kind: input, shape index: {}]
  %s2 = inlined_call_operand.vmem [shape: f32[4,32,64], index: 2, kind: output, shape index: {0}]
  %s3 = inlined_call_operand.vmem [shape: f32[4,1,64], index: 3, kind: output, shape index: {1}]
  %s4 = inlined_call_operand.vmem [shape: f32[4,1,64], index: 4, kind: output, shape index: {2}]
  %5 = xla_tuple %s2, %s3, %s4
  %s6 = sld [smem:[#allocation0]]
  $region57: #{netg_forward.11} parent=0
    _
  %s8 = ssub.s32 1, %s6
  %s9 = scalar_select 0, %s8, %s6
  loop: start=0, step=1, limit=6
  $region2: #{netg_forward.11} parent=0 // loop_pre_header
    _
  $region3: #{netg_forward.11} parent=0 // loop_header
    %s11 = sphi 0, %s15
    %p12 = scmp.ge.s32.totalorder %s11, 6
    %s21 = sphi 0, %s23
    %s24 = sphi 0, %s21
    %s25 = sphi 0, %s24
    %s41 = sphi 0, %s25
    %s47 = sphi 0, %s49
    %s50 = sphi 0, %s47
    %s51 = sphi 0, %s50
    %s67 = sphi 0, %s51
    %s73 = sphi 0, %s75
    %s76 = sphi 0, %s73
    %s77 = sphi 0, %s76
    %s93 = sphi 0, %s77
    %s99 = sphi 0, %s101
    %s102 = sphi 0, %s99
    %s103 = sphi 0, %s102
    %s119 = sphi 0, %s103
    %s125 = sphi 0, %s127
    %s128 = sphi 0, %s125
    %s129 = sphi 0, %s128
    %s145 = sphi 0, %s129
  $region4: #{netg_forward.11} parent=0 // loop_header_branch
    %14 = sbr.rel (%p12) target = $region8
  $region5: #{netg_forward.11} parent=0 // loop_body
    %s16 = ssub.s32 %s11, 1
    %s17 = ssub.s32 %s11, 2
    %s18 = sadd.s32 %s11, 1
    %s19 = ssub.s32 %s11, %s18
    %p20 = scmp.eq.s32.totalorder %s19, 0
    %s22 = sadd.s32 %s21, 1
    %s23 = scalar_select %p20, %s21, %s22
    %p26 = pneg %p20
    %p27 = scmp.eq.s32.totalorder %s11, 3
    %p28 = por %p26, %p27
    %p29 = scmp.ne.s32.totalorder %s21, %s24
    %p30 = scmp.eq.s32.totalorder %s11, 0
    %p31 = por %p29, %p30
    %p32 = scmp.ne.s32.totalorder %s21, %s24
    %p33 = scmp.eq.s32.totalorder %s16, 3
    %p34 = por %p32, %p33
    %p35 = scmp.ne.s32.totalorder %s24, %s25
    %p36 = scmp.eq.s32.totalorder %s16, 0
    %p37 = por %p35, %p36
    %p38 = scmp.ne.s32.totalorder %s24, %s25
    %p39 = scmp.eq.s32.totalorder %s17, 3
    %p40 = por %p38, %p39
    %p42 = scmp.ne.s32.totalorder %s25, %s41
    %p43 = scmp.eq.s32.totalorder %s17, 0
    %p44 = por %p42, %p43
    %s45 = ssub.s32 %s11, %s18
    %p46 = scmp.eq.s32.totalorder %s45, 0
    %s48 = sadd.s32 %s47, 1
    %s49 = scalar_select %p46, %s47, %s48
    %p52 = pneg %p46
    %p53 = scmp.eq.s32.totalorder %s11, 3
    %p54 = por %p52, %p53
    %p55 = scmp.ne.s32.totalorder %s47, %s50
    %p56 = scmp.eq.s32.totalorder %s11, 0
    %p57 = por %p55, %p56
    %p58 = scmp.ne.s32.totalorder %s47, %s50
    %p59 = scmp.eq.s32.totalorder %s16, 3
    %p60 = por %p58, %p59
    %p61 = scmp.ne.s32.totalorder %s50, %s51
    %p62 = scmp.eq.s32.totalorder %s16, 0
    %p63 = por %p61, %p62
    %p64 = scmp.ne.s32.totalorder %s50, %s51
    %p65 = scmp.eq.s32.totalorder %s17, 3
    %p66 = por %p64, %p65
    %p68 = scmp.ne.s32.totalorder %s51, %s67
    %p69 = scmp.eq.s32.totalorder %s17, 0
    %p70 = por %p68, %p69
    %s71 = ssub.s32 %s11, %s18
    %p72 = scmp.eq.s32.totalorder %s71, 0
    %s74 = sadd.s32 %s73, 1
    %s75 = scalar_select %p72, %s73, %s74
    %p78 = pneg %p72
    %p79 = scmp.eq.s32.totalorder %s11, 3
    %p80 = por %p78, %p79
    %p81 = scmp.ne.s32.totalorder %s73, %s76
    %p82 = scmp.eq.s32.totalorder %s11, 0
    %p83 = por %p81, %p82
    %p84 = scmp.ne.s32.totalorder %s73, %s76
    %p85 = scmp.eq.s32.totalorder %s16, 3
    %p86 = por %p84, %p85
    %p87 = scmp.ne.s32.totalorder %s76, %s77
    %p88 = scmp.eq.s32.totalorder %s16, 0
    %p89 = por %p87, %p88
    %p90 = scmp.ne.s32.totalorder %s76, %s77
    %p91 = scmp.eq.s32.totalorder %s17, 3
    %p92 = por %p90, %p91
    %p94 = scmp.ne.s32.totalorder %s77, %s93
    %p95 = scmp.eq.s32.totalorder %s17, 0
    %p96 = por %p94, %p95
    %s97 = ssub.s32 %s11, %s18
    %p98 = scmp.eq.s32.totalorder %s97, 0
    %s100 = sadd.s32 %s99, 1
    %s101 = scalar_select %p98, %s99, %s100
    %p104 = pneg %p98
    %p105 = scmp.eq.s32.totalorder %s11, 3
    %p106 = por %p104, %p105
    %p107 = scmp.ne.s32.totalorder %s99, %s102
    %p108 = scmp.eq.s32.totalorder %s11, 0
    %p109 = por %p107, %p108
    %p110 = scmp.ne.s32.totalorder %s99, %s102
    %p111 = scmp.eq.s32.totalorder %s16, 3
    %p112 = por %p110, %p111
    %p113 = scmp.ne.s32.totalorder %s102, %s103
    %p114 = scmp.eq.s32.totalorder %s16, 0
    %p115 = por %p113, %p114
    %p116 = scmp.ne.s32.totalorder %s102, %s103
    %p117 = scmp.eq.s32.totalorder %s17, 3
    %p118 = por %p116, %p117
    %p120 = scmp.ne.s32.totalorder %s103, %s119
    %p121 = scmp.eq.s32.totalorder %s17, 0
    %p122 = por %p120, %p121
    %s123 = ssub.s32 %s11, %s18
    %p124 = scmp.eq.s32.totalorder %s123, 0
    %s126 = sadd.s32 %s125, 1
    %s127 = scalar_select %p124, %s125, %s126
    %p130 = pneg %p124
    %p131 = scmp.eq.s32.totalorder %s11, 3
    %p132 = por %p130, %p131
    %p133 = scmp.ne.s32.totalorder %s125, %s128
    %p134 = scmp.eq.s32.totalorder %s11, 0
    %p135 = por %p133, %p134
    %p136 = scmp.ne.s32.totalorder %s125, %s128
    %p137 = scmp.eq.s32.totalorder %s16, 3
    %p138 = por %p136, %p137
    %p139 = scmp.ne.s32.totalorder %s128, %s129
    %p140 = scmp.eq.s32.totalorder %s16, 0
    %p141 = por %p139, %p140
    %p142 = scmp.ne.s32.totalorder %s128, %s129
    %p143 = scmp.eq.s32.totalorder %s17, 3
    %p144 = por %p142, %p143
    %p146 = scmp.ne.s32.totalorder %s129, %s145
    %p147 = scmp.eq.s32.totalorder %s17, 0
    %p148 = por %p146, %p147
    %p149 = scmp.le.s32.totalorder 1, %s11
    %p150 = scmp.lt.s32.totalorder %s11, 5
    %p151 = pnand %p149, %p150
    %p152 = pneg %p151
    // Predicated region
    $region9: #{netg_forward.11} parent=5 // pred_check
      _
    $region10: #{netg_forward.11} parent=5 // pred_check_branch
      %154 = sbr.rel (%p151) target = $region12
    $region11: #{netg_forward.11} parent=5 // pred_region
      %s155 = ssub.s32 %s11, 1
    $region12: #{netg_forward.11} parent=5 // pred_fallthru
      _
    %p156 = scmp.lt.s32.totalorder %s11, 4
    // Predicated region
    $region13: #{netg_forward.11} parent=5 // pred_check
      %p157 = pneg %p156
    $region14: #{netg_forward.11} parent=5 // pred_check_branch
      %159 = sbr.rel (%p157) target = $region16
    $region15: #{netg_forward.11} parent=5 // pred_region
      // Predicated region
      $region17: #{netg_forward.11} parent=15 // pred_check
        %p160 = pneg %p31
      $region18: #{netg_forward.11} parent=15 // pred_check_branch
        %162 = sbr.rel (%p160) target = $region20
      $region19: #{netg_forward.11} parent=15 // pred_region
        %p163 = scmp.lt.s32.totalorder %s11, 3
        %s164 = scalar_select %p163, %s11, 3
        %s165 = smul.addr %s164, 16
        %s166 = smul.addr %s165, 4
        %s167 = scalar_lea.vmem %s0, %s166
      $region20: #{netg_forward.11} parent=15 // pred_fallthru
        _
      // Predicated region
      $region21: #{netg_forward.11} parent=15 // pred_check
        %p168 = pneg %p57
      $region22: #{netg_forward.11} parent=15 // pred_check_branch
        %170 = sbr.rel (%p168) target = $region24
      $region23: #{netg_forward.11} parent=15 // pred_region
        %p171 = scmp.lt.s32.totalorder %s11, 3
        %s172 = scalar_select %p171, %s11, 3
        %s173 = smul.addr %s172, 64
        %s174 = smul.addr %s173, 4
        %s175 = scalar_lea.vmem %s1, %s174
      $region24: #{netg_forward.11} parent=15 // pred_fallthru
        _
    $region16: #{netg_forward.11} parent=5 // pred_fallthru
      _
    %p176 = scmp.le.s32.totalorder 1, %s11
    %p177 = scmp.lt.s32.totalorder %s11, 5
    %p178 = pnand %p176, %p177
    %p179 = pneg %p178
    // Predicated region
    $region25: #{netg_forward.11} parent=5 // pred_check
      _
    $region26: #{netg_forward.11} parent=5 // pred_check_branch
      %181 = sbr.rel (%p178) target = $region28
    $region27: #{netg_forward.11} parent=5 // pred_region
      %s182 = ssub.s32 %s11, 1
      %p183 = scmp.lt.s32.totalorder %s16, 3
      %s184 = scalar_select %p183, %s16, 3
      %s185 = smul.addr %s184, 16
      %s186 = smul.addr %s185, 4
      %s187 = scalar_lea.vmem %s0, %s186
      %p188 = pneg %p37
      %p189 = pneg %p34
      %p190 = scmp.lt.s32.totalorder %s16, 3
      %s191 = scalar_select %p190, %s16, 3
      %s192 = smul.addr %s191, 64
      %s193 = smul.addr %s192, 4
      %s194 = scalar_lea.vmem %s1, %s193
      %p195 = pneg %p63
      %p196 = pneg %p60
      %p197 = pneg %p89
      %p198 = pneg %p86
      %p199 = scmp.lt.s32.totalorder %s16, 3
      %s200 = scalar_select %p199, %s16, 3
      %s201 = smul.addr %s200, 4
      %s202 = smul.addr %s201, 8
      %s203 = scalar_lea.vmem %s2, %s202
      %p204 = pneg %p115
      %p205 = pneg %p112
      %p206 = scmp.lt.s32.totalorder %s16, 3
      %s207 = scalar_select %p206, %s16, 3
      %s208 = scalar_lea.vmem %s3, %s207
      %p209 = pneg %p141
      %p210 = pneg %p138
      %p211 = scmp.lt.s32.totalorder %s16, 3
      %s212 = scalar_select %p211, %s16, 3
      %s213 = scalar_lea.vmem %s4, %s212
      %p214 = scmp.lt.s32.totalorder %s16, 3
      %s215 = scalar_select %p214, %s16, 3
      %s216 = smul.addr %s215, 16
      %s217 = smul.addr %s216, 4
      %s218 = scalar_lea.vmem %s0, %s217
      %p219 = scmp.lt.s32.totalorder %s16, 3
      %s220 = scalar_select %p219, %s16, 3
      %s221 = smul.addr %s220, 64
      %s222 = smul.addr %s221, 4
      %s223 = scalar_lea.vmem %s1, %s222
      %p224 = scmp.lt.s32.totalorder %s16, 3
      %s225 = scalar_select %p224, %s16, 3
      %s226 = smul.addr %s225, 4
      %s227 = smul.addr %s226, 8
      %s228 = scalar_lea.vmem %s2, %s227
      %p229 = scmp.lt.s32.totalorder %s16, 3
      %s230 = scalar_select %p229, %s16, 3
      %s231 = scalar_lea.vmem %s3, %s230
      %p232 = scmp.lt.s32.totalorder %s16, 3
      %s233 = scalar_select %p232, %s16, 3
      %s234 = scalar_lea.vmem %s4, %s233
      %v236 = vld [vmem:[%s218] sm:$0xff]
      %v237 = vld [vmem:[%s218 + $0x8] sm:$0xff]
      %v238 = vld [vmem:[%s218 + $0x10] sm:$0xff]
      %v239 = vld [vmem:[%s218 + $0x18] sm:$0xff]
      %v240 = vld [vmem:[%s218 + $0x20] sm:$0xff]
      %v241 = vld [vmem:[%s218 + $0x28] sm:$0xff]
      %v242 = vld [vmem:[%s218 + $0x30] sm:$0xff]
      %v243 = vld [vmem:[%s218 + $0x38] sm:$0xff]
      %v244 = vld [vmem:[%s223] sm:$0xf]
      %v245 = vld [vmem:[%s223 + $0x4] sm:$0xf]
      %v246 = vld [vmem:[%s223 + $0x8] sm:$0xf]
      %v247 = vld [vmem:[%s223 + $0xc] sm:$0xf]
      %v248 = vld [vmem:[%s223 + $0x10] sm:$0xf]
      %v249 = vld [vmem:[%s223 + $0x14] sm:$0xf]
      %v250 = vld [vmem:[%s223 + $0x18] sm:$0xf]
      %v251 = vld [vmem:[%s223 + $0x1c] sm:$0xf]
      %v252 = vld [vmem:[%s223 + $0x20] sm:$0xf]
      %v253 = vld [vmem:[%s223 + $0x24] sm:$0xf]
      %v254 = vld [vmem:[%s223 + $0x28] sm:$0xf]
      %v255 = vld [vmem:[%s223 + $0x2c] sm:$0xf]
      %v256 = vld [vmem:[%s223 + $0x30] sm:$0xf]
      %v257 = vld [vmem:[%s223 + $0x34] sm:$0xf]
      %v258 = vld [vmem:[%s223 + $0x38] sm:$0xf]
      %v259 = vld [vmem:[%s223 + $0x3c] sm:$0xf]
      %v260 = vld [vmem:[%s223 + $0x40] sm:$0xf]
      %v261 = vld [vmem:[%s223 + $0x44] sm:$0xf]
      %v262 = vld [vmem:[%s223 + $0x48] sm:$0xf]
      %v263 = vld [vmem:[%s223 + $0x4c] sm:$0xf]
      %v264 = vld [vmem:[%s223 + $0x50] sm:$0xf]
      %v265 = vld [vmem:[%s223 + $0x54] sm:$0xf]
      %v266 = vld [vmem:[%s223 + $0x58] sm:$0xf]
      %v267 = vld [vmem:[%s223 + $0x5c] sm:$0xf]
      %v268 = vld [vmem:[%s223 + $0x60] sm:$0xf]
      %v269 = vld [vmem:[%s223 + $0x64] sm:$0xf]
      %v270 = vld [vmem:[%s223 + $0x68] sm:$0xf]
      %v271 = vld [vmem:[%s223 + $0x6c] sm:$0xf]
      %v272 = vld [vmem:[%s223 + $0x70] sm:$0xf]
      %v273 = vld [vmem:[%s223 + $0x74] sm:$0xf]
      %v274 = vld [vmem:[%s223 + $0x78] sm:$0xf]
      %v275 = vld [vmem:[%s223 + $0x7c] sm:$0xf]
      %v276 = vld [vmem:[%s223 + $0x80] sm:$0xf]
      %v277 = vld [vmem:[%s223 + $0x84] sm:$0xf]
      %v278 = vld [vmem:[%s223 + $0x88] sm:$0xf]
      %v279 = vld [vmem:[%s223 + $0x8c] sm:$0xf]
      %v280 = vld [vmem:[%s223 + $0x90] sm:$0xf]
      %v281 = vld [vmem:[%s223 + $0x94] sm:$0xf]
      %v282 = vld [vmem:[%s223 + $0x98] sm:$0xf]
      %v283 = vld [vmem:[%s223 + $0x9c] sm:$0xf]
      %v284 = vld [vmem:[%s223 + $0xa0] sm:$0xf]
      %v285 = vld [vmem:[%s223 + $0xa4] sm:$0xf]
      %v286 = vld [vmem:[%s223 + $0xa8] sm:$0xf]
      %v287 = vld [vmem:[%s223 + $0xac] sm:$0xf]
      %v288 = vld [vmem:[%s223 + $0xb0] sm:$0xf]
      %v289 = vld [vmem:[%s223 + $0xb4] sm:$0xf]
      %v290 = vld [vmem:[%s223 + $0xb8] sm:$0xf]
      %v291 = vld [vmem:[%s223 + $0xbc] sm:$0xf]
      %v292 = vld [vmem:[%s223 + $0xc0] sm:$0xf]
      %v293 = vld [vmem:[%s223 + $0xc4] sm:$0xf]
      %v294 = vld [vmem:[%s223 + $0xc8] sm:$0xf]
      %v295 = vld [vmem:[%s223 + $0xcc] sm:$0xf]
      %v296 = vld [vmem:[%s223 + $0xd0] sm:$0xf]
      %v297 = vld [vmem:[%s223 + $0xd4] sm:$0xf]
      %v298 = vld [vmem:[%s223 + $0xd8] sm:$0xf]
      %v299 = vld [vmem:[%s223 + $0xdc] sm:$0xf]
      %v300 = vld [vmem:[%s223 + $0xe0] sm:$0xf]
      %v301 = vld [vmem:[%s223 + $0xe4] sm:$0xf]
      %v302 = vld [vmem:[%s223 + $0xe8] sm:$0xf]
      %v303 = vld [vmem:[%s223 + $0xec] sm:$0xf]
      %v304 = vld [vmem:[%s223 + $0xf0] sm:$0xf]
      %v305 = vld [vmem:[%s223 + $0xf4] sm:$0xf]
      %v306 = vld [vmem:[%s223 + $0xf8] sm:$0xf]
      %v307 = vld [vmem:[%s223 + $0xfc] sm:$0xf]
      %v316 = vunpack.c.l.b16 %v236
      %v317 = vunpack.c.h.b16 %v236
      %v318 = vunpack.c.l.b16 %v237
      %v319 = vunpack.c.h.b16 %v237
      %v320 = vunpack.c.l.b16 %v238
      %v321 = vunpack.c.h.b16 %v238
      %v322 = vunpack.c.l.b16 %v239
      %v323 = vunpack.c.h.b16 %v239
      %v324 = vunpack.c.l.b16 %v240
      %v325 = vunpack.c.h.b16 %v240
      %v326 = vunpack.c.l.b16 %v241
      %v327 = vunpack.c.h.b16 %v241
      %v328 = vunpack.c.l.b16 %v242
      %v329 = vunpack.c.h.b16 %v242
      %v330 = vunpack.c.l.b16 %v243
      %v331 = vunpack.c.h.b16 %v243
      %v332 = vpack.c.b16 %v320, %v316
      %v333 = vpack.c.b16 %v321, %v317
      %v334 = vpack.c.b16 %v322, %v318
      %v335 = vpack.c.b16 %v323, %v319
      %v336 = vpack.c.b16 %v328, %v324
      %v337 = vpack.c.b16 %v329, %v325
      %v338 = vpack.c.b16 %v330, %v326
      %v339 = vpack.c.b16 %v331, %v327
      %v412 = vunpack.c.l.b16 %v244
      %v413 = vunpack.c.l.b16 %v245
      %v414 = vunpack.c.l.b16 %v246
      %v415 = vunpack.c.l.b16 %v247
      %v416 = vunpack.c.l.b16 %v248
      %v417 = vunpack.c.l.b16 %v249
      %v418 = vunpack.c.l.b16 %v250
      %v419 = vunpack.c.l.b16 %v251
      %v420 = vunpack.c.l.b16 %v252
      %v421 = vunpack.c.l.b16 %v253
      %v422 = vunpack.c.l.b16 %v254
      %v423 = vunpack.c.l.b16 %v255
      %v424 = vunpack.c.l.b16 %v256
      %v425 = vunpack.c.l.b16 %v257
      %v426 = vunpack.c.l.b16 %v258
      %v427 = vunpack.c.l.b16 %v259
      %v428 = vunpack.c.l.b16 %v260
      %v429 = vunpack.c.l.b16 %v261
      %v430 = vunpack.c.l.b16 %v262
      %v431 = vunpack.c.l.b16 %v263
      %v432 = vunpack.c.l.b16 %v264
      %v433 = vunpack.c.l.b16 %v265
      %v434 = vunpack.c.l.b16 %v266
      %v435 = vunpack.c.l.b16 %v267
      %v436 = vunpack.c.l.b16 %v268
      %v437 = vunpack.c.l.b16 %v269
      %v438 = vunpack.c.l.b16 %v270
      %v439 = vunpack.c.l.b16 %v271
      %v440 = vunpack.c.l.b16 %v272
      %v441 = vunpack.c.l.b16 %v273
      %v442 = vunpack.c.l.b16 %v274
      %v443 = vunpack.c.l.b16 %v275
      %v444 = vunpack.c.l.b16 %v276
      %v445 = vunpack.c.l.b16 %v277
      %v446 = vunpack.c.l.b16 %v278
      %v447 = vunpack.c.l.b16 %v279
      %v448 = vunpack.c.l.b16 %v280
      %v449 = vunpack.c.l.b16 %v281
      %v450 = vunpack.c.l.b16 %v282
      %v451 = vunpack.c.l.b16 %v283
      %v452 = vunpack.c.l.b16 %v284
      %v453 = vunpack.c.l.b16 %v285
      %v454 = vunpack.c.l.b16 %v286
      %v455 = vunpack.c.l.b16 %v287
      %v456 = vunpack.c.l.b16 %v288
      %v457 = vunpack.c.l.b16 %v289
      %v458 = vunpack.c.l.b16 %v290
      %v459 = vunpack.c.l.b16 %v291
      %v460 = vunpack.c.l.b16 %v292
      %v461 = vunpack.c.l.b16 %v293
      %v462 = vunpack.c.l.b16 %v294
      %v463 = vunpack.c.l.b16 %v295
      %v464 = vunpack.c.l.b16 %v296
      %v465 = vunpack.c.l.b16 %v297
      %v466 = vunpack.c.l.b16 %v298
      %v467 = vunpack.c.l.b16 %v299
      %v468 = vunpack.c.l.b16 %v300
      %v469 = vunpack.c.l.b16 %v301
      %v470 = vunpack.c.l.b16 %v302
      %v471 = vunpack.c.l.b16 %v303
      %v472 = vunpack.c.l.b16 %v304
      %v473 = vunpack.c.l.b16 %v305
      %v474 = vunpack.c.l.b16 %v306
      %v475 = vunpack.c.l.b16 %v307
      %v476 = vpack.c.b16 %v413, %v412
      %v477 = vpack.c.b16 %v415, %v414
      %v478 = vpack.c.b16 %v417, %v416
      %v479 = vpack.c.b16 %v419, %v418
      %v480 = vpack.c.b16 %v421, %v420
      %v481 = vpack.c.b16 %v423, %v422
      %v482 = vpack.c.b16 %v425, %v424
      %v483 = vpack.c.b16 %v427, %v426
      %v484 = vpack.c.b16 %v429, %v428
      %v485 = vpack.c.b16 %v431, %v430
      %v486 = vpack.c.b16 %v433, %v432
      %v487 = vpack.c.b16 %v435, %v434
      %v488 = vpack.c.b16 %v437, %v436
      %v489 = vpack.c.b16 %v439, %v438
      %v490 = vpack.c.b16 %v441, %v440
      %v491 = vpack.c.b16 %v443, %v442
      %v492 = vpack.c.b16 %v445, %v444
      %v493 = vpack.c.b16 %v447, %v446
      %v494 = vpack.c.b16 %v449, %v448
      %v495 = vpack.c.b16 %v451, %v450
      %v496 = vpack.c.b16 %v453, %v452
      %v497 = vpack.c.b16 %v455, %v454
      %v498 = vpack.c.b16 %v457, %v456
      %v499 = vpack.c.b16 %v459, %v458
      %v500 = vpack.c.b16 %v461, %v460
      %v501 = vpack.c.b16 %v463, %v462
      %v502 = vpack.c.b16 %v465, %v464
      %v503 = vpack.c.b16 %v467, %v466
      %v504 = vpack.c.b16 %v469, %v468
      %v505 = vpack.c.b16 %v471, %v470
      %v506 = vpack.c.b16 %v473, %v472
      %v507 = vpack.c.b16 %v475, %v474
      %540 = vmatprep.subr.bf16.mxu0 0
      %541 = vmatpush1.bf16.msra.mxu0 %v476
      %542 = vmatprep.subr.bf16.mxu0 0
      %543 = vmatpush1.bf16.msra.mxu0 %v477
      %544 = vmatprep.subr.bf16.mxu0 0
      %545 = vmatpush1.bf16.msra.mxu0 %v478
      %546 = vmatprep.subr.bf16.mxu0 0
      %547 = vmatpush1.bf16.msra.mxu0 %v479
      %548 = vmatprep.subr.bf16.mxu0 0
      %549 = vmatpush1.bf16.msra.mxu0 %v480
      %550 = vmatprep.subr.bf16.mxu0 0
      %551 = vmatpush1.bf16.msra.mxu0 %v481
      %552 = vmatprep.subr.bf16.mxu0 0
      %553 = vmatpush1.bf16.msra.mxu0 %v482
      %554 = vmatprep.subr.bf16.mxu0 0
      %555 = vmatpush1.bf16.msra.mxu0 %v483
      %556 = vmatprep.subr.bf16.mxu0 0
      %557 = vmatpush1.bf16.msra.mxu0 %v484
      %558 = vmatprep.subr.bf16.mxu0 0
      %559 = vmatpush1.bf16.msra.mxu0 %v485
      %560 = vmatprep.subr.bf16.mxu0 0
      %561 = vmatpush1.bf16.msra.mxu0 %v486
      %562 = vmatprep.subr.bf16.mxu0 0
      %563 = vmatpush1.bf16.msra.mxu0 %v487
      %564 = vmatprep.subr.bf16.mxu0 0
      %565 = vmatpush1.bf16.msra.mxu0 %v488
      %566 = vmatprep.subr.bf16.mxu0 0
      %567 = vmatpush1.bf16.msra.mxu0 %v489
      %568 = vmatprep.subr.bf16.mxu0 0
      %569 = vmatpush1.bf16.msra.mxu0 %v490
      %570 = vmatprep.subr.bf16.mxu0 0
      %571 = vmatpush1.bf16.msra.mxu0 %v491
      %572 = vmatprep.mubr.bf16.mxu0 %v333
      %573 = vmatmul.mubr.bf16.gmra.mrb[0].mxu0 %v332
      %v574 = vpop.f32.mrb[0].mxu0
      %v575 = vadd.f32 0.0, %v574
      %v576 = vpop.f32.mrb[0].mxu0
      %v577 = vpop.f32.mrb[0].mxu0
      %v578 = vadd.f32 0.0, %v577
      %v579 = vpop.f32.mrb[0].mxu0
      %580 = vmatprep.mubr.bf16.mxu0 %v337
      %581 = vmatmul.mubr.bf16.gmra.mrb[0].mxu0 %v336
      %v582 = vpop.f32.mrb[0].mxu0
      %v583 = vadd.f32 0.0, %v582
      %v584 = vpop.f32.mrb[0].mxu0
      %v585 = vpop.f32.mrb[0].mxu0
      %v586 = vadd.f32 0.0, %v585
      %v587 = vpop.f32.mrb[0].mxu0
      %588 = vdwg.mxu0
      %589 = vmatprep.subr.bf16.mxu0 0
      %590 = vmatpush1.bf16.msra.mxu0 %v492
      %591 = vmatprep.subr.bf16.mxu0 0
      %592 = vmatpush1.bf16.msra.mxu0 %v493
      %593 = vmatprep.subr.bf16.mxu0 0
      %594 = vmatpush1.bf16.msra.mxu0 %v494
      %595 = vmatprep.subr.bf16.mxu0 0
      %596 = vmatpush1.bf16.msra.mxu0 %v495
      %597 = vmatprep.subr.bf16.mxu0 0
      %598 = vmatpush1.bf16.msra.mxu0 %v496
      %599 = vmatprep.subr.bf16.mxu0 0
      %600 = vmatpush1.bf16.msra.mxu0 %v497
      %601 = vmatprep.subr.bf16.mxu0 0
      %602 = vmatpush1.bf16.msra.mxu0 %v498
      %603 = vmatprep.subr.bf16.mxu0 0
      %604 = vmatpush1.bf16.msra.mxu0 %v499
      %605 = vmatprep.subr.bf16.mxu0 0
      %606 = vmatpush1.bf16.msra.mxu0 %v500
      %607 = vmatprep.subr.bf16.mxu0 0
      %608 = vmatpush1.bf16.msra.mxu0 %v501
      %609 = vmatprep.subr.bf16.mxu0 0
      %610 = vmatpush1.bf16.msra.mxu0 %v502
      %611 = vmatprep.subr.bf16.mxu0 0
      %612 = vmatpush1.bf16.msra.mxu0 %v503
      %613 = vmatprep.subr.bf16.mxu0 0
      %614 = vmatpush1.bf16.msra.mxu0 %v504
      %615 = vmatprep.subr.bf16.mxu0 0
      %616 = vmatpush1.bf16.msra.mxu0 %v505
      %617 = vmatprep.subr.bf16.mxu0 0
      %618 = vmatpush1.bf16.msra.mxu0 %v506
      %619 = vmatprep.subr.bf16.mxu0 0
      %620 = vmatpush1.bf16.msra.mxu0 %v507
      %621 = vmatprep.mubr.bf16.mxu0 %v335
      %622 = vmatmul.mubr.bf16.gmra.mrb[0].mxu0 %v334
      %v623 = vpop.f32.mrb[0].mxu0
      %v624 = vadd.f32 %v575, %v623
      %v625 = vpop.f32.mrb[0].mxu0
      %v626 = vpop.f32.mrb[0].mxu0
      %v627 = vadd.f32 %v578, %v626
      %v628 = vpop.f32.mrb[0].mxu0
      %629 = vmatprep.mubr.bf16.mxu0 %v339
      %630 = vmatmul.mubr.bf16.gmra.mrb[0].mxu0 %v338
      %v631 = vpop.f32.mrb[0].mxu0
      %v632 = vadd.f32 %v583, %v631
      %v633 = vpop.f32.mrb[0].mxu0
      %v634 = vpop.f32.mrb[0].mxu0
      %v635 = vadd.f32 %v586, %v634
      %v636 = vpop.f32.mrb[0].mxu0
      %637 = vdwg.mxu0
      %vm638 = vcmask 523264
      %639 = vst.msk [vmem:[%s228] sm:$0xff] %vm638, %v624
      %640 = vst.msk [vmem:[%s228 + $0x8] sm:$0xff] %vm638, %v627
      %641 = vst.msk [vmem:[%s228 + $0x10] sm:$0xff] %vm638, %v632
      %642 = vst.msk [vmem:[%s228 + $0x18] sm:$0xff] %vm638, %v635
      %v643 = vsel %vm638, %v624, 0.0
      %v644 = vsel %vm638, %v627, 0.0
      %v645 = vadd.f32 %v643, %v644
      %v646 = vsel %vm638, %v632, 0.0
      %v647 = vadd.f32 %v645, %v646
      %v648 = vsel %vm638, %v635, 0.0
      %v649 = vadd.f32 %v647, %v648
      %v650 = vrot.slane %v649, 4
      %v651 = vadd.f32 %v649, %v650
      %v652 = vrot.slane %v651, 2
      %v653 = vadd.f32 %v651, %v652
      %v654 = vrot.slane %v653, 1
      %v655 = vadd.f32 %v653, %v654
      %vm656 = vcmask 516096
      %657 = vst.msk [vmem:[%s231] sm:$0x1] %vm656, %v655
      %v658 = vmul.f32 %v624, %v624
      %v659 = vmul.f32 %v627, %v627
      %v660 = vmul.f32 %v632, %v632
      %v661 = vmul.f32 %v635, %v635
      %v662 = vsel %vm638, %v658, 0.0
      %v663 = vsel %vm638, %v659, 0.0
      %v664 = vadd.f32 %v662, %v663
      %v665 = vsel %vm638, %v660, 0.0
      %v666 = vadd.f32 %v664, %v665
      %v667 = vsel %vm638, %v661, 0.0
      %v668 = vadd.f32 %v666, %v667
      %v669 = vrot.slane %v668, 4
      %v670 = vadd.f32 %v668, %v669
      %v671 = vrot.slane %v670, 2
      %v672 = vadd.f32 %v670, %v671
      %v673 = vrot.slane %v672, 1
      %v674 = vadd.f32 %v672, %v673
      %675 = vst.msk [vmem:[%s234] sm:$0x1] %vm656, %v674
      %p676 = scmp.lt.s32.totalorder %s16, 3
      %s677 = scalar_select %p676, %s16, 3
      %s678 = smul.addr %s677, 4
      %s679 = smul.addr %s678, 8
      %s680 = scalar_lea.vmem %s2, %s679
      %p681 = scmp.lt.s32.totalorder %s16, 3
      %s682 = scalar_select %p681, %s16, 3
      %s683 = scalar_lea.vmem %s3, %s682
      %p684 = scmp.lt.s32.totalorder %s16, 3
      %s685 = scalar_select %p684, %s16, 3
      %s686 = scalar_lea.vmem %s4, %s685
      // Predicated region
      $region29: #{netg_forward.11} parent=27 // pred_check
        %p687 = pneg %p86
      $region30: #{netg_forward.11} parent=27 // pred_check_branch
        %689 = sbr.rel (%p687) target = $region32
      $region31: #{netg_forward.11} parent=27 // pred_region
        _
      $region32: #{netg_forward.11} parent=27 // pred_fallthru
        _
      // Predicated region
      $region33: #{netg_forward.11} parent=27 // pred_check
        %p690 = pneg %p112
      $region34: #{netg_forward.11} parent=27 // pred_check_branch
        %692 = sbr.rel (%p690) target = $region36
      $region35: #{netg_forward.11} parent=27 // pred_region
        _
      $region36: #{netg_forward.11} parent=27 // pred_fallthru
        _
      // Predicated region
      $region37: #{netg_forward.11} parent=27 // pred_check
        %p693 = pneg %p138
      $region38: #{netg_forward.11} parent=27 // pred_check_branch
        %695 = sbr.rel (%p693) target = $region40
      $region39: #{netg_forward.11} parent=27 // pred_region
        _
      $region40: #{netg_forward.11} parent=27 // pred_fallthru
        _
    $region28: #{netg_forward.11} parent=5 // pred_fallthru
      _
    %p696 = scmp.le.s32.totalorder 2, %s11
    // Predicated region
    $region41: #{netg_forward.11} parent=5 // pred_check
      %p697 = pneg %p696
    $region42: #{netg_forward.11} parent=5 // pred_check_branch
      %699 = sbr.rel (%p697) target = $region44
    $region43: #{netg_forward.11} parent=5 // pred_region
      %s700 = ssub.s32 %s11, 2
      // Predicated region
      $region45: #{netg_forward.11} parent=43 // pred_check
        %p701 = pneg %p92
      $region46: #{netg_forward.11} parent=43 // pred_check_branch
        %703 = sbr.rel (%p701) target = $region48
      $region47: #{netg_forward.11} parent=43 // pred_region
        %p704 = scmp.lt.s32.totalorder %s17, 3
        %s705 = scalar_select %p704, %s17, 3
        %s706 = smul.addr %s705, 4
        %s707 = smul.addr %s706, 8
        %s708 = scalar_lea.vmem %s2, %s707
      $region48: #{netg_forward.11} parent=43 // pred_fallthru
        _
      // Predicated region
      $region49: #{netg_forward.11} parent=43 // pred_check
        %p709 = pneg %p118
      $region50: #{netg_forward.11} parent=43 // pred_check_branch
        %711 = sbr.rel (%p709) target = $region52
      $region51: #{netg_forward.11} parent=43 // pred_region
        %p712 = scmp.lt.s32.totalorder %s17, 3
        %s713 = scalar_select %p712, %s17, 3
        %s714 = scalar_lea.vmem %s3, %s713
      $region52: #{netg_forward.11} parent=43 // pred_fallthru
        _
      // Predicated region
      $region53: #{netg_forward.11} parent=43 // pred_check
        %p715 = pneg %p144
      $region54: #{netg_forward.11} parent=43 // pred_check_branch
        %717 = sbr.rel (%p715) target = $region56
      $region55: #{netg_forward.11} parent=43 // pred_region
        %p718 = scmp.lt.s32.totalorder %s17, 3
        %s719 = scalar_select %p718, %s17, 3
        %s720 = scalar_lea.vmem %s4, %s719
      $region56: #{netg_forward.11} parent=43 // pred_fallthru
        _
    $region44: #{netg_forward.11} parent=5 // pred_fallthru
      _
  $region6: #{netg_forward.11} parent=0 // loop_footer
    %s15 = sadd.s32 1, %s11
  $region7: #{netg_forward.11} parent=0 // loop_footer_branch
    %10 = sbr.rel target = $region3
  $region8: #{netg_forward.11} parent=0 // loop_exit
    _

// kernel: netg_forward.12
$region0: #{netg_forward.12}
  #allocation0 [shape = 'u32[]', space=smem, size = 0x4, offset = 0x4, fixed_abs, tag = 'smem constant byte address 0x4 - core index']
  #allocation1 [shape = 'u32[144,128]{1,0:T(1,128)}', space=vmem, size = 0x12000, scoped, tag = 'internal scratch']
  %s0 = inlined_call_operand.vmem [shape: f32[32,256], index: 0, kind: input, shape index: {}]
  %s1 = inlined_call_operand.vmem [shape: f32[1,256], index: 1, kind: input, shape index: {}]
  %s2 = inlined_call_operand.vmem [shape: f32[1,256], index: 2, kind: input, shape index: {}]
  %s3 = inlined_call_operand.vmem [shape: f32[32,256], index: 3, kind: output, shape index: {}]
  %s4 = sld [smem:[#allocation0]]
  $region22: #{netg_forward.12} parent=0
    _
  %s6 = ssub.s32 1, %s4
  %s7 = scalar_select 0, %s6, %s4
  // Predicated region
  $region2: #{netg_forward.12} parent=0 // pred_check
    _
  $region3: #{netg_forward.12} parent=0 // pred_check_branch
    %9 = sbr.rel (0) target = $region5
  $region4: #{netg_forward.12} parent=0 // pred_region
    _
  $region5: #{netg_forward.12} parent=0 // pred_fallthru
    _
  // Predicated region
  $region6: #{netg_forward.12} parent=0 // pred_check
    _
  $region7: #{netg_forward.12} parent=0 // pred_check_branch
    %11 = sbr.rel (0) target = $region9
  $region8: #{netg_forward.12} parent=0 // pred_region
    _
  $region9: #{netg_forward.12} parent=0 // pred_fallthru
    _
  // Predicated region
  $region10: #{netg_forward.12} parent=0 // pred_check
    _
  $region11: #{netg_forward.12} parent=0 // pred_check_branch
    %13 = sbr.rel (0) target = $region13
  $region12: #{netg_forward.12} parent=0 // pred_region
    _
  $region13: #{netg_forward.12} parent=0 // pred_fallthru
    _
  %v14 = vld [vmem:[%s0] sm:$0xff]
  %v15 = vld [vmem:[%s0 + $0x8] sm:$0xff]
  %v16 = vld [vmem:[%s0 + $0x10] sm:$0xff]
  %v17 = vld [vmem:[%s0 + $0x18] sm:$0xff]
  %v18 = vld [vmem:[%s0 + $0x20] sm:$0xff]
  %v19 = vld [vmem:[%s0 + $0x28] sm:$0xff]
  %v20 = vld [vmem:[%s0 + $0x30] sm:$0xff]
  %v21 = vld [vmem:[%s0 + $0x38] sm:$0xff]
  %v22 = vld [vmem:[%s1] sm:$0x3]
  %v24 = vlaneseq
  %v25 = vshrl.u32 %v24, 7
  %v26 = vsub.s32 0, %v25
  %v27 = vrot.slane %v22, %v26
  %v28 = vlaneseq
  %v29 = vshrl.u32 %v28, 7
  %v30 = vsub.s32 1, %v29
  %v31 = vrot.slane %v22, %v30
  %v34 = vmul.f32 %v14, %v27
  %v35 = vmul.f32 %v15, %v31
  %v36 = vmul.f32 %v16, %v27
  %v37 = vmul.f32 %v17, %v31
  %v38 = vmul.f32 %v18, %v27
  %v39 = vmul.f32 %v19, %v31
  %v40 = vmul.f32 %v20, %v27
  %v41 = vmul.f32 %v21, %v31
  %v42 = vld [vmem:[%s2] sm:$0x3]
  %v44 = vlaneseq
  %v45 = vshrl.u32 %v44, 7
  %v46 = vsub.s32 0, %v45
  %v47 = vrot.slane %v42, %v46
  %v48 = vlaneseq
  %v49 = vshrl.u32 %v48, 7
  %v50 = vsub.s32 1, %v49
  %v51 = vrot.slane %v42, %v50
  %v54 = vadd.f32 %v34, %v47
  %v55 = vadd.f32 %v35, %v51
  %v56 = vadd.f32 %v36, %v47
  %v57 = vadd.f32 %v37, %v51
  %v58 = vadd.f32 %v38, %v47
  %v59 = vadd.f32 %v39, %v51
  %v60 = vadd.f32 %v40, %v47
  %v61 = vadd.f32 %v41, %v51
  %v62 = vmax.f32 %v54, 0.0
  %v63 = vmax.f32 %v55, 0.0
  %v64 = vmax.f32 %v56, 0.0
  %v65 = vmax.f32 %v57, 0.0
  %v66 = vmax.f32 %v58, 0.0
  %v67 = vmax.f32 %v59, 0.0
  %v68 = vmax.f32 %v60, 0.0
  %v69 = vmax.f32 %v61, 0.0
  %70 = vst [vmem:[%s3] sm:$0xff] %v62
  %71 = vst [vmem:[%s3 + $0x8] sm:$0xff] %v63
  %72 = vst [vmem:[%s3 + $0x10] sm:$0xff] %v64
  %73 = vst [vmem:[%s3 + $0x18] sm:$0xff] %v65
  %74 = vst [vmem:[%s3 + $0x20] sm:$0xff] %v66
  %75 = vst [vmem:[%s3 + $0x28] sm:$0xff] %v67
  %76 = vst [vmem:[%s3 + $0x30] sm:$0xff] %v68
  %77 = vst [vmem:[%s3 + $0x38] sm:$0xff] %v69
  // Predicated region
  $region14: #{netg_forward.12} parent=0 // pred_check
    _
  $region15: #{netg_forward.12} parent=0 // pred_check_branch
    %79 = sbr.rel (0) target = $region17
  $region16: #{netg_forward.12} parent=0 // pred_region
    _
  $region17: #{netg_forward.12} parent=0 // pred_fallthru
    _
  // Predicated region
  $region18: #{netg_forward.12} parent=0 // pred_check
    _
  $region19: #{netg_forward.12} parent=0 // pred_check_branch
    %81 = sbr.rel (0) target = $region21
  $region20: #{netg_forward.12} parent=0 // pred_region
    _
  $region21: #{netg_forward.12} parent=0 // pred_fallthru
    _

// kernel: tile.68
$region0: #{tile.68}
  #allocation0 [shape = 's32[1]{0}', space=sflag, size = 0x4, scoped, tag = 'scoped memory for tile.68']
  %s0 = inlined_call_operand.vmem [shape: f32[32], index: 0, kind: input, shape index: {}]
  %s1 = inlined_call_operand.vmem [shape: f32[8,32], index: 1, kind: output, shape index: {}]
  // Predicated region
  $region2: #{tile.68} parent=0 // pred_check
    _
  $region3: #{tile.68} parent=0 // pred_check_branch
    %3 = sbr.rel (0) target = $region5
  $region4: #{tile.68} parent=0 // pred_region
    _
  $region5: #{tile.68} parent=0 // pred_fallthru
    _
  %v4 = vld [vmem:[%s0] ss:$0 sm:$0xff]
  %5 = vst [vmem:[%s1] sm:$0xff] %v4

// kernel: tile.69
$region0: #{tile.69}
  %s0 = inlined_call_operand.vmem [shape: f32[8,32], index: 0, kind: input, shape index: {}]
  %s1 = inlined_call_operand.vmem [shape: f32[1,256], index: 1, kind: output, shape index: {}]
  $region1: #{tile.69} parent=0
    #allocation0 [shape = 'u8[8192]{0}', space=vmem, size = 0x2000, scoped, tag = 'scoped mem for output reshape']
    %s2 = smov 3
    %v3 = vld [vmem:[%s0] ss:$4 sm:%s2]
    %vm4 = vcmask 261120
    %5 = vst.msk [vmem:[#allocation0] ss:$8 sm:$0x3] %vm4, %v3
    %s6 = scalar_lea.vmem %s0, 3
    %s7 = smov 3
    %v8 = vld [vmem:[%s6] ss:$4 sm:%s7]
    %9 = vrot.lane.b32.xlu0 %v8, 96
    %v10 = vpop.permute.xlu0 %9
    %vm11 = vcmask 1048320
    %12 = vst.msk [vmem:[#allocation0] ss:$8 sm:$0x3] %vm11, %v10
    %s13 = scalar_lea.vmem %s0, 2
    %s14 = smov 3
    %v15 = vld [vmem:[%s13] ss:$4 sm:%s14]
    %16 = vrot.lane.b32.xlu0 %v15, 64
    %v17 = vpop.permute.xlu0 %16
    %vm18 = vcmask 785920
    %19 = vst.msk [vmem:[#allocation0] ss:$8 sm:$0x3] %vm18, %v17
    %s20 = scalar_lea.vmem %s0, 1
    %s21 = smov 3
    %v22 = vld [vmem:[%s20] ss:$4 sm:%s21]
    %23 = vrot.lane.b32.xlu0 %v22, 32
    %v24 = vpop.permute.xlu0 %23
    %vm25 = vcmask 523520
    %26 = vst.msk [vmem:[#allocation0] ss:$8 sm:$0x3] %vm25, %v24
    %s28 = sshllo.u32 0, 1
    %v30 = vld [vmem:[#allocation0] sm:%s28]
    %s31 = sshllo.u32 0, 1
    %32 = vst [vmem:[%s1] sm:%s31] %v30
    %s33 = scalar_lea.vmem [#allocation0], 8
    %v34 = vld [vmem:[%s33] sm:%s28]
    %s35 = sshllo.u32 0, 1
    %s36 = scalar_lea.vmem %s1, 1
    %37 = vst [vmem:[%s36] sm:%s35] %v34

// kernel: netg_forward.13
$region0: #{netg_forward.13}
  #allocation0 [shape = 'u32[]', space=smem, size = 0x4, offset = 0x4, fixed_abs, tag = 'smem constant byte address 0x4 - core index']
  #allocation1 [shape = 'u32[144,128]{1,0:T(1,128)}', space=vmem, size = 0x12000, scoped, tag = 'internal scratch']
  %s0 = inlined_call_operand.vmem [shape: bf16[4,128,256], index: 0, kind: input, shape index: {}]
  %s1 = inlined_call_operand.vmem [shape: bf16[4,256,128], index: 1, kind: input, shape index: {}]
  %s2 = inlined_call_operand.vmem [shape: f32[4,128,32], index: 2, kind: output, shape index: {0}]
  %s3 = inlined_call_operand.vmem [shape: f32[4,1,32], index: 3, kind: output, shape index: {1}]
  %s4 = inlined_call_operand.vmem [shape: f32[4,1,32], index: 4, kind: output, shape index: {2}]
  %5 = xla_tuple %s2, %s3, %s4
  %s6 = sld [smem:[#allocation0]]
  $region57: #{netg_forward.13} parent=0
    _
  %s8 = ssub.s32 1, %s6
  %s9 = scalar_select 0, %s8, %s6
  loop: start=0, step=1, limit=6
  $region2: #{netg_forward.13} parent=0 // loop_pre_header
    _
  $region3: #{netg_forward.13} parent=0 // loop_header
    %s11 = sphi 0, %s15
    %p12 = scmp.ge.s32.totalorder %s11, 6
    %s21 = sphi 0, %s23
    %s24 = sphi 0, %s21
    %s25 = sphi 0, %s24
    %s41 = sphi 0, %s25
    %s47 = sphi 0, %s49
    %s50 = sphi 0, %s47
    %s51 = sphi 0, %s50
    %s67 = sphi 0, %s51
    %s73 = sphi 0, %s75
    %s76 = sphi 0, %s73
    %s77 = sphi 0, %s76
    %s93 = sphi 0, %s77
    %s99 = sphi 0, %s101
    %s102 = sphi 0, %s99
    %s103 = sphi 0, %s102
    %s119 = sphi 0, %s103
    %s125 = sphi 0, %s127
    %s128 = sphi 0, %s125
    %s129 = sphi 0, %s128
    %s145 = sphi 0, %s129
  $region4: #{netg_forward.13} parent=0 // loop_header_branch
    %14 = sbr.rel (%p12) target = $region8
  $region5: #{netg_forward.13} parent=0 // loop_body
    %s16 = ssub.s32 %s11, 1
    %s17 = ssub.s32 %s11, 2
    %s18 = sadd.s32 %s11, 1
    %s19 = ssub.s32 %s11, %s18
    %p20 = scmp.eq.s32.totalorder %s19, 0
    %s22 = sadd.s32 %s21, 1
    %s23 = scalar_select %p20, %s21, %s22
    %p26 = pneg %p20
    %p27 = scmp.eq.s32.totalorder %s11, 3
    %p28 = por %p26, %p27
    %p29 = scmp.ne.s32.totalorder %s21, %s24
    %p30 = scmp.eq.s32.totalorder %s11, 0
    %p31 = por %p29, %p30
    %p32 = scmp.ne.s32.totalorder %s21, %s24
    %p33 = scmp.eq.s32.totalorder %s16, 3
    %p34 = por %p32, %p33
    %p35 = scmp.ne.s32.totalorder %s24, %s25
    %p36 = scmp.eq.s32.totalorder %s16, 0
    %p37 = por %p35, %p36
    %p38 = scmp.ne.s32.totalorder %s24, %s25
    %p39 = scmp.eq.s32.totalorder %s17, 3
    %p40 = por %p38, %p39
    %p42 = scmp.ne.s32.totalorder %s25, %s41
    %p43 = scmp.eq.s32.totalorder %s17, 0
    %p44 = por %p42, %p43
    %s45 = ssub.s32 %s11, %s18
    %p46 = scmp.eq.s32.totalorder %s45, 0
    %s48 = sadd.s32 %s47, 1
    %s49 = scalar_select %p46, %s47, %s48
    %p52 = pneg %p46
    %p53 = scmp.eq.s32.totalorder %s11, 3
    %p54 = por %p52, %p53
    %p55 = scmp.ne.s32.totalorder %s47, %s50
    %p56 = scmp.eq.s32.totalorder %s11, 0
    %p57 = por %p55, %p56
    %p58 = scmp.ne.s32.totalorder %s47, %s50
    %p59 = scmp.eq.s32.totalorder %s16, 3
    %p60 = por %p58, %p59
    %p61 = scmp.ne.s32.totalorder %s50, %s51
    %p62 = scmp.eq.s32.totalorder %s16, 0
    %p63 = por %p61, %p62
    %p64 = scmp.ne.s32.totalorder %s50, %s51
    %p65 = scmp.eq.s32.totalorder %s17, 3
    %p66 = por %p64, %p65
    %p68 = scmp.ne.s32.totalorder %s51, %s67
    %p69 = scmp.eq.s32.totalorder %s17, 0
    %p70 = por %p68, %p69
    %s71 = ssub.s32 %s11, %s18
    %p72 = scmp.eq.s32.totalorder %s71, 0
    %s74 = sadd.s32 %s73, 1
    %s75 = scalar_select %p72, %s73, %s74
    %p78 = pneg %p72
    %p79 = scmp.eq.s32.totalorder %s11, 3
    %p80 = por %p78, %p79
    %p81 = scmp.ne.s32.totalorder %s73, %s76
    %p82 = scmp.eq.s32.totalorder %s11, 0
    %p83 = por %p81, %p82
    %p84 = scmp.ne.s32.totalorder %s73, %s76
    %p85 = scmp.eq.s32.totalorder %s16, 3
    %p86 = por %p84, %p85
    %p87 = scmp.ne.s32.totalorder %s76, %s77
    %p88 = scmp.eq.s32.totalorder %s16, 0
    %p89 = por %p87, %p88
    %p90 = scmp.ne.s32.totalorder %s76, %s77
    %p91 = scmp.eq.s32.totalorder %s17, 3
    %p92 = por %p90, %p91
    %p94 = scmp.ne.s32.totalorder %s77, %s93
    %p95 = scmp.eq.s32.totalorder %s17, 0
    %p96 = por %p94, %p95
    %s97 = ssub.s32 %s11, %s18
    %p98 = scmp.eq.s32.totalorder %s97, 0
    %s100 = sadd.s32 %s99, 1
    %s101 = scalar_select %p98, %s99, %s100
    %p104 = pneg %p98
    %p105 = scmp.eq.s32.totalorder %s11, 3
    %p106 = por %p104, %p105
    %p107 = scmp.ne.s32.totalorder %s99, %s102
    %p108 = scmp.eq.s32.totalorder %s11, 0
    %p109 = por %p107, %p108
    %p110 = scmp.ne.s32.totalorder %s99, %s102
    %p111 = scmp.eq.s32.totalorder %s16, 3
    %p112 = por %p110, %p111
    %p113 = scmp.ne.s32.totalorder %s102, %s103
    %p114 = scmp.eq.s32.totalorder %s16, 0
    %p115 = por %p113, %p114
    %p116 = scmp.ne.s32.totalorder %s102, %s103
    %p117 = scmp.eq.s32.totalorder %s17, 3
    %p118 = por %p116, %p117
    %p120 = scmp.ne.s32.totalorder %s103, %s119
    %p121 = scmp.eq.s32.totalorder %s17, 0
    %p122 = por %p120, %p121
    %s123 = ssub.s32 %s11, %s18
    %p124 = scmp.eq.s32.totalorder %s123, 0
    %s126 = sadd.s32 %s125, 1
    %s127 = scalar_select %p124, %s125, %s126
    %p130 = pneg %p124
    %p131 = scmp.eq.s32.totalorder %s11, 3
    %p132 = por %p130, %p131
    %p133 = scmp.ne.s32.totalorder %s125, %s128
    %p134 = scmp.eq.s32.totalorder %s11, 0
    %p135 = por %p133, %p134
    %p136 = scmp.ne.s32.totalorder %s125, %s128
    %p137 = scmp.eq.s32.totalorder %s16, 3
    %p138 = por %p136, %p137
    %p139 = scmp.ne.s32.totalorder %s128, %s129
    %p140 = scmp.eq.s32.totalorder %s16, 0
    %p141 = por %p139, %p140
    %p142 = scmp.ne.s32.totalorder %s128, %s129
    %p143 = scmp.eq.s32.totalorder %s17, 3
    %p144 = por %p142, %p143
    %p146 = scmp.ne.s32.totalorder %s129, %s145
    %p147 = scmp.eq.s32.totalorder %s17, 0
    %p148 = por %p146, %p147
    %p149 = scmp.le.s32.totalorder 1, %s11
    %p150 = scmp.lt.s32.totalorder %s11, 5
    %p151 = pnand %p149, %p150
    %p152 = pneg %p151
    // Predicated region
    $region9: #{netg_forward.13} parent=5 // pred_check
      _
    $region10: #{netg_forward.13} parent=5 // pred_check_branch
      %154 = sbr.rel (%p151) target = $region12
    $region11: #{netg_forward.13} parent=5 // pred_region
      %s155 = ssub.s32 %s11, 1
    $region12: #{netg_forward.13} parent=5 // pred_fallthru
      _
    %p156 = scmp.lt.s32.totalorder %s11, 4
    // Predicated region
    $region13: #{netg_forward.13} parent=5 // pred_check
      %p157 = pneg %p156
    $region14: #{netg_forward.13} parent=5 // pred_check_branch
      %159 = sbr.rel (%p157) target = $region16
    $region15: #{netg_forward.13} parent=5 // pred_region
      // Predicated region
      $region17: #{netg_forward.13} parent=15 // pred_check
        %p160 = pneg %p31
      $region18: #{netg_forward.13} parent=15 // pred_check_branch
        %162 = sbr.rel (%p160) target = $region20
      $region19: #{netg_forward.13} parent=15 // pred_region
        %p163 = scmp.lt.s32.totalorder %s11, 3
        %s164 = scalar_select %p163, %s11, 3
        %s165 = smul.addr %s164, 32
        %s166 = smul.addr %s165, 4
        %s167 = scalar_lea.vmem %s0, %s166
      $region20: #{netg_forward.13} parent=15 // pred_fallthru
        _
      // Predicated region
      $region21: #{netg_forward.13} parent=15 // pred_check
        %p168 = pneg %p57
      $region22: #{netg_forward.13} parent=15 // pred_check_branch
        %170 = sbr.rel (%p168) target = $region24
      $region23: #{netg_forward.13} parent=15 // pred_region
        %p171 = scmp.lt.s32.totalorder %s11, 3
        %s172 = scalar_select %p171, %s11, 3
        %s173 = smul.addr %s172, 32
        %s174 = smul.addr %s173, 4
        %s175 = scalar_lea.vmem %s1, %s174
      $region24: #{netg_forward.13} parent=15 // pred_fallthru
        _
    $region16: #{netg_forward.13} parent=5 // pred_fallthru
      _
    %p176 = scmp.le.s32.totalorder 1, %s11
    %p177 = scmp.lt.s32.totalorder %s11, 5
    %p178 = pnand %p176, %p177
    %p179 = pneg %p178
    // Predicated region
    $region25: #{netg_forward.13} parent=5 // pred_check
      _
    $region26: #{netg_forward.13} parent=5 // pred_check_branch
      %181 = sbr.rel (%p178) target = $region28
    $region27: #{netg_forward.13} parent=5 // pred_region
      %s182 = ssub.s32 %s11, 1
      %p183 = scmp.lt.s32.totalorder %s16, 3
      %s184 = scalar_select %p183, %s16, 3
      %s185 = smul.addr %s184, 32
      %s186 = smul.addr %s185, 4
      %s187 = scalar_lea.vmem %s0, %s186
      %p188 = pneg %p37
      %p189 = pneg %p34
      %p190 = scmp.lt.s32.totalorder %s16, 3
      %s191 = scalar_select %p190, %s16, 3
      %s192 = smul.addr %s191, 32
      %s193 = smul.addr %s192, 4
      %s194 = scalar_lea.vmem %s1, %s193
      %p195 = pneg %p63
      %p196 = pneg %p60
      %p197 = pneg %p89
      %p198 = pneg %p86
      %p199 = scmp.lt.s32.totalorder %s16, 3
      %s200 = scalar_select %p199, %s16, 3
      %s201 = smul.addr %s200, 16
      %s202 = smul.addr %s201, 8
      %s203 = scalar_lea.vmem %s2, %s202
      %p204 = pneg %p115
      %p205 = pneg %p112
      %p206 = scmp.lt.s32.totalorder %s16, 3
      %s207 = scalar_select %p206, %s16, 3
      %s208 = scalar_lea.vmem %s3, %s207
      %p209 = pneg %p141
      %p210 = pneg %p138
      %p211 = scmp.lt.s32.totalorder %s16, 3
      %s212 = scalar_select %p211, %s16, 3
      %s213 = scalar_lea.vmem %s4, %s212
      %p214 = scmp.lt.s32.totalorder %s16, 3
      %s215 = scalar_select %p214, %s16, 3
      %s216 = smul.addr %s215, 32
      %s217 = smul.addr %s216, 4
      %s218 = scalar_lea.vmem %s0, %s217
      %p219 = scmp.lt.s32.totalorder %s16, 3
      %s220 = scalar_select %p219, %s16, 3
      %s221 = smul.addr %s220, 32
      %s222 = smul.addr %s221, 4
      %s223 = scalar_lea.vmem %s1, %s222
      %p224 = scmp.lt.s32.totalorder %s16, 3
      %s225 = scalar_select %p224, %s16, 3
      %s226 = smul.addr %s225, 16
      %s227 = smul.addr %s226, 8
      %s228 = scalar_lea.vmem %s2, %s227
      %p229 = scmp.lt.s32.totalorder %s16, 3
      %s230 = scalar_select %p229, %s16, 3
      %s231 = scalar_lea.vmem %s3, %s230
      %p232 = scmp.lt.s32.totalorder %s16, 3
      %s233 = scalar_select %p232, %s16, 3
      %s234 = scalar_lea.vmem %s4, %s233
      %v236 = vld [vmem:[%s218] sm:$0xff]
      %v237 = vld [vmem:[%s218 + $0x8] sm:$0xff]
      %v238 = vld [vmem:[%s218 + $0x10] sm:$0xff]
      %v239 = vld [vmem:[%s218 + $0x18] sm:$0xff]
      %v240 = vld [vmem:[%s218 + $0x20] sm:$0xff]
      %v241 = vld [vmem:[%s218 + $0x28] sm:$0xff]
      %v242 = vld [vmem:[%s218 + $0x30] sm:$0xff]
      %v243 = vld [vmem:[%s218 + $0x38] sm:$0xff]
      %v244 = vld [vmem:[%s218 + $0x40] sm:$0xff]
      %v245 = vld [vmem:[%s218 + $0x48] sm:$0xff]
      %v246 = vld [vmem:[%s218 + $0x50] sm:$0xff]
      %v247 = vld [vmem:[%s218 + $0x58] sm:$0xff]
      %v248 = vld [vmem:[%s218 + $0x60] sm:$0xff]
      %v249 = vld [vmem:[%s218 + $0x68] sm:$0xff]
      %v250 = vld [vmem:[%s218 + $0x70] sm:$0xff]
      %v251 = vld [vmem:[%s218 + $0x78] sm:$0xff]
      %v252 = vld [vmem:[%s223] sm:$0xf]
      %v253 = vld [vmem:[%s223 + $0x4] sm:$0xf]
      %v254 = vld [vmem:[%s223 + $0x8] sm:$0xf]
      %v255 = vld [vmem:[%s223 + $0xc] sm:$0xf]
      %v256 = vld [vmem:[%s223 + $0x10] sm:$0xf]
      %v257 = vld [vmem:[%s223 + $0x14] sm:$0xf]
      %v258 = vld [vmem:[%s223 + $0x18] sm:$0xf]
      %v259 = vld [vmem:[%s223 + $0x1c] sm:$0xf]
      %v260 = vld [vmem:[%s223 + $0x20] sm:$0xf]
      %v261 = vld [vmem:[%s223 + $0x24] sm:$0xf]
      %v262 = vld [vmem:[%s223 + $0x28] sm:$0xf]
      %v263 = vld [vmem:[%s223 + $0x2c] sm:$0xf]
      %v264 = vld [vmem:[%s223 + $0x30] sm:$0xf]
      %v265 = vld [vmem:[%s223 + $0x34] sm:$0xf]
      %v266 = vld [vmem:[%s223 + $0x38] sm:$0xf]
      %v267 = vld [vmem:[%s223 + $0x3c] sm:$0xf]
      %v268 = vld [vmem:[%s223 + $0x40] sm:$0xf]
      %v269 = vld [vmem:[%s223 + $0x44] sm:$0xf]
      %v270 = vld [vmem:[%s223 + $0x48] sm:$0xf]
      %v271 = vld [vmem:[%s223 + $0x4c] sm:$0xf]
      %v272 = vld [vmem:[%s223 + $0x50] sm:$0xf]
      %v273 = vld [vmem:[%s223 + $0x54] sm:$0xf]
      %v274 = vld [vmem:[%s223 + $0x58] sm:$0xf]
      %v275 = vld [vmem:[%s223 + $0x5c] sm:$0xf]
      %v276 = vld [vmem:[%s223 + $0x60] sm:$0xf]
      %v277 = vld [vmem:[%s223 + $0x64] sm:$0xf]
      %v278 = vld [vmem:[%s223 + $0x68] sm:$0xf]
      %v279 = vld [vmem:[%s223 + $0x6c] sm:$0xf]
      %v280 = vld [vmem:[%s223 + $0x70] sm:$0xf]
      %v281 = vld [vmem:[%s223 + $0x74] sm:$0xf]
      %v282 = vld [vmem:[%s223 + $0x78] sm:$0xf]
      %v283 = vld [vmem:[%s223 + $0x7c] sm:$0xf]
      %v300 = vunpack.c.l.b16 %v236
      %v301 = vunpack.c.h.b16 %v236
      %v302 = vunpack.c.l.b16 %v237
      %v303 = vunpack.c.h.b16 %v237
      %v304 = vunpack.c.l.b16 %v238
      %v305 = vunpack.c.h.b16 %v238
      %v306 = vunpack.c.l.b16 %v239
      %v307 = vunpack.c.h.b16 %v239
      %v308 = vunpack.c.l.b16 %v240
      %v309 = vunpack.c.h.b16 %v240
      %v310 = vunpack.c.l.b16 %v241
      %v311 = vunpack.c.h.b16 %v241
      %v312 = vunpack.c.l.b16 %v242
      %v313 = vunpack.c.h.b16 %v242
      %v314 = vunpack.c.l.b16 %v243
      %v315 = vunpack.c.h.b16 %v243
      %v316 = vunpack.c.l.b16 %v244
      %v317 = vunpack.c.h.b16 %v244
      %v318 = vunpack.c.l.b16 %v245
      %v319 = vunpack.c.h.b16 %v245
      %v320 = vunpack.c.l.b16 %v246
      %v321 = vunpack.c.h.b16 %v246
      %v322 = vunpack.c.l.b16 %v247
      %v323 = vunpack.c.h.b16 %v247
      %v324 = vunpack.c.l.b16 %v248
      %v325 = vunpack.c.h.b16 %v248
      %v326 = vunpack.c.l.b16 %v249
      %v327 = vunpack.c.h.b16 %v249
      %v328 = vunpack.c.l.b16 %v250
      %v329 = vunpack.c.h.b16 %v250
      %v330 = vunpack.c.l.b16 %v251
      %v331 = vunpack.c.h.b16 %v251
      %v332 = vpack.c.b16 %v302, %v300
      %v333 = vpack.c.b16 %v303, %v301
      %v334 = vpack.c.b16 %v306, %v304
      %v335 = vpack.c.b16 %v307, %v305
      %v336 = vpack.c.b16 %v310, %v308
      %v337 = vpack.c.b16 %v311, %v309
      %v338 = vpack.c.b16 %v314, %v312
      %v339 = vpack.c.b16 %v315, %v313
      %v340 = vpack.c.b16 %v318, %v316
      %v341 = vpack.c.b16 %v319, %v317
      %v342 = vpack.c.b16 %v322, %v320
      %v343 = vpack.c.b16 %v323, %v321
      %v344 = vpack.c.b16 %v326, %v324
      %v345 = vpack.c.b16 %v327, %v325
      %v346 = vpack.c.b16 %v330, %v328
      %v347 = vpack.c.b16 %v331, %v329
      %v396 = vunpack.c.l.b16 %v252
      %v397 = vunpack.c.l.b16 %v253
      %v398 = vunpack.c.l.b16 %v254
      %v399 = vunpack.c.l.b16 %v255
      %v400 = vunpack.c.l.b16 %v256
      %v401 = vunpack.c.l.b16 %v257
      %v402 = vunpack.c.l.b16 %v258
      %v403 = vunpack.c.l.b16 %v259
      %v404 = vunpack.c.l.b16 %v260
      %v405 = vunpack.c.l.b16 %v261
      %v406 = vunpack.c.l.b16 %v262
      %v407 = vunpack.c.l.b16 %v263
      %v408 = vunpack.c.l.b16 %v264
      %v409 = vunpack.c.l.b16 %v265
      %v410 = vunpack.c.l.b16 %v266
      %v411 = vunpack.c.l.b16 %v267
      %v412 = vunpack.c.l.b16 %v268
      %v413 = vunpack.c.l.b16 %v269
      %v414 = vunpack.c.l.b16 %v270
      %v415 = vunpack.c.l.b16 %v271
      %v416 = vunpack.c.l.b16 %v272
      %v417 = vunpack.c.l.b16 %v273
      %v418 = vunpack.c.l.b16 %v274
      %v419 = vunpack.c.l.b16 %v275
      %v420 = vunpack.c.l.b16 %v276
      %v421 = vunpack.c.l.b16 %v277
      %v422 = vunpack.c.l.b16 %v278
      %v423 = vunpack.c.l.b16 %v279
      %v424 = vunpack.c.l.b16 %v280
      %v425 = vunpack.c.l.b16 %v281
      %v426 = vunpack.c.l.b16 %v282
      %v427 = vunpack.c.l.b16 %v283
      %v428 = vpack.c.b16 %v397, %v396
      %v429 = vpack.c.b16 %v399, %v398
      %v430 = vpack.c.b16 %v401, %v400
      %v431 = vpack.c.b16 %v403, %v402
      %v432 = vpack.c.b16 %v405, %v404
      %v433 = vpack.c.b16 %v407, %v406
      %v434 = vpack.c.b16 %v409, %v408
      %v435 = vpack.c.b16 %v411, %v410
      %v436 = vpack.c.b16 %v413, %v412
      %v437 = vpack.c.b16 %v415, %v414
      %v438 = vpack.c.b16 %v417, %v416
      %v439 = vpack.c.b16 %v419, %v418
      %v440 = vpack.c.b16 %v421, %v420
      %v441 = vpack.c.b16 %v423, %v422
      %v442 = vpack.c.b16 %v425, %v424
      %v443 = vpack.c.b16 %v427, %v426
      %460 = vmatprep.subr.bf16.mxu0 0
      %461 = vmatpush1.bf16.msra.mxu0 %v428
      %462 = vmatprep.subr.bf16.mxu0 0
      %463 = vmatpush1.bf16.msra.mxu0 %v429
      %464 = vmatprep.subr.bf16.mxu0 0
      %465 = vmatpush1.bf16.msra.mxu0 %v430
      %466 = vmatprep.subr.bf16.mxu0 0
      %467 = vmatpush1.bf16.msra.mxu0 %v431
      %468 = vmatprep.subr.bf16.mxu0 0
      %469 = vmatpush1.bf16.msra.mxu0 %v432
      %470 = vmatprep.subr.bf16.mxu0 0
      %471 = vmatpush1.bf16.msra.mxu0 %v433
      %472 = vmatprep.subr.bf16.mxu0 0
      %473 = vmatpush1.bf16.msra.mxu0 %v434
      %474 = vmatprep.subr.bf16.mxu0 0
      %475 = vmatpush1.bf16.msra.mxu0 %v435
      %476 = vmatprep.subr.bf16.mxu0 0
      %477 = vmatpush1.bf16.msra.mxu0 %v436
      %478 = vmatprep.subr.bf16.mxu0 0
      %479 = vmatpush1.bf16.msra.mxu0 %v437
      %480 = vmatprep.subr.bf16.mxu0 0
      %481 = vmatpush1.bf16.msra.mxu0 %v438
      %482 = vmatprep.subr.bf16.mxu0 0
      %483 = vmatpush1.bf16.msra.mxu0 %v439
      %484 = vmatprep.subr.bf16.mxu0 0
      %485 = vmatpush1.bf16.msra.mxu0 %v440
      %486 = vmatprep.subr.bf16.mxu0 0
      %487 = vmatpush1.bf16.msra.mxu0 %v441
      %488 = vmatprep.subr.bf16.mxu0 0
      %489 = vmatpush1.bf16.msra.mxu0 %v442
      %490 = vmatprep.subr.bf16.mxu0 0
      %491 = vmatpush1.bf16.msra.mxu0 %v443
      %492 = vmatprep.mubr.bf16.mxu0 %v333
      %493 = vmatmul.mubr.bf16.gmra.mrb[0].mxu0 %v332
      %v494 = vpop.f32.mrb[0].mxu0
      %v495 = vadd.f32 0.0, %v494
      %v496 = vpop.f32.mrb[0].mxu0
      %v497 = vpop.f32.mrb[0].mxu0
      %v498 = vadd.f32 0.0, %v497
      %v499 = vpop.f32.mrb[0].mxu0
      %500 = vmatprep.mubr.bf16.mxu0 %v335
      %501 = vmatmul.mubr.bf16.gmra.mrb[0].mxu0 %v334
      %v502 = vpop.f32.mrb[0].mxu0
      %v503 = vadd.f32 0.0, %v502
      %v504 = vpop.f32.mrb[0].mxu0
      %v505 = vpop.f32.mrb[0].mxu0
      %v506 = vadd.f32 0.0, %v505
      %v507 = vpop.f32.mrb[0].mxu0
      %508 = vmatprep.mubr.bf16.mxu0 %v337
      %509 = vmatmul.mubr.bf16.gmra.mrb[0].mxu0 %v336
      %v510 = vpop.f32.mrb[0].mxu0
      %v511 = vadd.f32 0.0, %v510
      %v512 = vpop.f32.mrb[0].mxu0
      %v513 = vpop.f32.mrb[0].mxu0
      %v514 = vadd.f32 0.0, %v513
      %v515 = vpop.f32.mrb[0].mxu0
      %516 = vmatprep.mubr.bf16.mxu0 %v339
      %517 = vmatmul.mubr.bf16.gmra.mrb[0].mxu0 %v338
      %v518 = vpop.f32.mrb[0].mxu0
      %v519 = vadd.f32 0.0, %v518
      %v520 = vpop.f32.mrb[0].mxu0
      %v521 = vpop.f32.mrb[0].mxu0
      %v522 = vadd.f32 0.0, %v521
      %v523 = vpop.f32.mrb[0].mxu0
      %524 = vmatprep.mubr.bf16.mxu0 %v341
      %525 = vmatmul.mubr.bf16.gmra.mrb[0].mxu0 %v340
      %v526 = vpop.f32.mrb[0].mxu0
      %v527 = vadd.f32 0.0, %v526
      %v528 = vpop.f32.mrb[0].mxu0
      %v529 = vpop.f32.mrb[0].mxu0
      %v530 = vadd.f32 0.0, %v529
      %v531 = vpop.f32.mrb[0].mxu0
      %532 = vmatprep.mubr.bf16.mxu0 %v343
      %533 = vmatmul.mubr.bf16.gmra.mrb[0].mxu0 %v342
      %v534 = vpop.f32.mrb[0].mxu0
      %v535 = vadd.f32 0.0, %v534
      %v536 = vpop.f32.mrb[0].mxu0
      %v537 = vpop.f32.mrb[0].mxu0
      %v538 = vadd.f32 0.0, %v537
      %v539 = vpop.f32.mrb[0].mxu0
      %540 = vmatprep.mubr.bf16.mxu0 %v345
      %541 = vmatmul.mubr.bf16.gmra.mrb[0].mxu0 %v344
      %v542 = vpop.f32.mrb[0].mxu0
      %v543 = vadd.f32 0.0, %v542
      %v544 = vpop.f32.mrb[0].mxu0
      %v545 = vpop.f32.mrb[0].mxu0
      %v546 = vadd.f32 0.0, %v545
      %v547 = vpop.f32.mrb[0].mxu0
      %548 = vmatprep.mubr.bf16.mxu0 %v347
      %549 = vmatmul.mubr.bf16.gmra.mrb[0].mxu0 %v346
      %v550 = vpop.f32.mrb[0].mxu0
      %v551 = vadd.f32 0.0, %v550
      %v552 = vpop.f32.mrb[0].mxu0
      %v553 = vpop.f32.mrb[0].mxu0
      %v554 = vadd.f32 0.0, %v553
      %v555 = vpop.f32.mrb[0].mxu0
      %556 = vdwg.mxu0
      %vm557 = vcmask 261120
      %558 = vst.msk [vmem:[%s228] sm:$0xff] %vm557, %v495
      %559 = vst.msk [vmem:[%s228 + $0x8] sm:$0xff] %vm557, %v498
      %560 = vst.msk [vmem:[%s228 + $0x10] sm:$0xff] %vm557, %v503
      %561 = vst.msk [vmem:[%s228 + $0x18] sm:$0xff] %vm557, %v506
      %562 = vst.msk [vmem:[%s228 + $0x20] sm:$0xff] %vm557, %v511
      %563 = vst.msk [vmem:[%s228 + $0x28] sm:$0xff] %vm557, %v514
      %564 = vst.msk [vmem:[%s228 + $0x30] sm:$0xff] %vm557, %v519
      %565 = vst.msk [vmem:[%s228 + $0x38] sm:$0xff] %vm557, %v522
      %566 = vst.msk [vmem:[%s228 + $0x40] sm:$0xff] %vm557, %v527
      %567 = vst.msk [vmem:[%s228 + $0x48] sm:$0xff] %vm557, %v530
      %568 = vst.msk [vmem:[%s228 + $0x50] sm:$0xff] %vm557, %v535
      %569 = vst.msk [vmem:[%s228 + $0x58] sm:$0xff] %vm557, %v538
      %570 = vst.msk [vmem:[%s228 + $0x60] sm:$0xff] %vm557, %v543
      %571 = vst.msk [vmem:[%s228 + $0x68] sm:$0xff] %vm557, %v546
      %572 = vst.msk [vmem:[%s228 + $0x70] sm:$0xff] %vm557, %v551
      %573 = vst.msk [vmem:[%s228 + $0x78] sm:$0xff] %vm557, %v554
      %v574 = vsel %vm557, %v495, 0.0
      %v575 = vsel %vm557, %v498, 0.0
      %v576 = vadd.f32 %v574, %v575
      %v577 = vsel %vm557, %v503, 0.0
      %v578 = vadd.f32 %v576, %v577
      %v579 = vsel %vm557, %v506, 0.0
      %v580 = vadd.f32 %v578, %v579
      %v581 = vsel %vm557, %v511, 0.0
      %v582 = vadd.f32 %v580, %v581
      %v583 = vsel %vm557, %v514, 0.0
      %v584 = vadd.f32 %v582, %v583
      %v585 = vsel %vm557, %v519, 0.0
      %v586 = vadd.f32 %v584, %v585
      %v587 = vsel %vm557, %v522, 0.0
      %v588 = vadd.f32 %v586, %v587
      %v589 = vsel %vm557, %v527, 0.0
      %v590 = vadd.f32 %v588, %v589
      %v591 = vsel %vm557, %v530, 0.0
      %v592 = vadd.f32 %v590, %v591
      %v593 = vsel %vm557, %v535, 0.0
      %v594 = vadd.f32 %v592, %v593
      %v595 = vsel %vm557, %v538, 0.0
      %v596 = vadd.f32 %v594, %v595
      %v597 = vsel %vm557, %v543, 0.0
      %v598 = vadd.f32 %v596, %v597
      %v599 = vsel %vm557, %v546, 0.0
      %v600 = vadd.f32 %v598, %v599
      %v601 = vsel %vm557, %v551, 0.0
      %v602 = vadd.f32 %v600, %v601
      %v603 = vsel %vm557, %v554, 0.0
      %v604 = vadd.f32 %v602, %v603
      %v605 = vrot.slane %v604, 4
      %v606 = vadd.f32 %v604, %v605
      %v607 = vrot.slane %v606, 2
      %v608 = vadd.f32 %v606, %v607
      %v609 = vrot.slane %v608, 1
      %v610 = vadd.f32 %v608, %v609
      %vm611 = vcmask 253952
      %612 = vst.msk [vmem:[%s231] sm:$0x1] %vm611, %v610
      %v613 = vmul.f32 %v495, %v495
      %v614 = vmul.f32 %v498, %v498
      %v615 = vmul.f32 %v503, %v503
      %v616 = vmul.f32 %v506, %v506
      %v617 = vmul.f32 %v511, %v511
      %v618 = vmul.f32 %v514, %v514
      %v619 = vmul.f32 %v519, %v519
      %v620 = vmul.f32 %v522, %v522
      %v621 = vmul.f32 %v527, %v527
      %v622 = vmul.f32 %v530, %v530
      %v623 = vmul.f32 %v535, %v535
      %v624 = vmul.f32 %v538, %v538
      %v625 = vmul.f32 %v543, %v543
      %v626 = vmul.f32 %v546, %v546
      %v627 = vmul.f32 %v551, %v551
      %v628 = vmul.f32 %v554, %v554
      %v629 = vsel %vm557, %v613, 0.0
      %v630 = vsel %vm557, %v614, 0.0
      %v631 = vadd.f32 %v629, %v630
      %v632 = vsel %vm557, %v615, 0.0
      %v633 = vadd.f32 %v631, %v632
      %v634 = vsel %vm557, %v616, 0.0
      %v635 = vadd.f32 %v633, %v634
      %v636 = vsel %vm557, %v617, 0.0
      %v637 = vadd.f32 %v635, %v636
      %v638 = vsel %vm557, %v618, 0.0
      %v639 = vadd.f32 %v637, %v638
      %v640 = vsel %vm557, %v619, 0.0
      %v641 = vadd.f32 %v639, %v640
      %v642 = vsel %vm557, %v620, 0.0
      %v643 = vadd.f32 %v641, %v642
      %v644 = vsel %vm557, %v621, 0.0
      %v645 = vadd.f32 %v643, %v644
      %v646 = vsel %vm557, %v622, 0.0
      %v647 = vadd.f32 %v645, %v646
      %v648 = vsel %vm557, %v623, 0.0
      %v649 = vadd.f32 %v647, %v648
      %v650 = vsel %vm557, %v624, 0.0
      %v651 = vadd.f32 %v649, %v650
      %v652 = vsel %vm557, %v625, 0.0
      %v653 = vadd.f32 %v651, %v652
      %v654 = vsel %vm557, %v626, 0.0
      %v655 = vadd.f32 %v653, %v654
      %v656 = vsel %vm557, %v627, 0.0
      %v657 = vadd.f32 %v655, %v656
      %v658 = vsel %vm557, %v628, 0.0
      %v659 = vadd.f32 %v657, %v658
      %v660 = vrot.slane %v659, 4
      %v661 = vadd.f32 %v659, %v660
      %v662 = vrot.slane %v661, 2
      %v663 = vadd.f32 %v661, %v662
      %v664 = vrot.slane %v663, 1
      %v665 = vadd.f32 %v663, %v664
      %666 = vst.msk [vmem:[%s234] sm:$0x1] %vm611, %v665
      %p667 = scmp.lt.s32.totalorder %s16, 3
      %s668 = scalar_select %p667, %s16, 3
      %s669 = smul.addr %s668, 16
      %s670 = smul.addr %s669, 8
      %s671 = scalar_lea.vmem %s2, %s670
      %p672 = scmp.lt.s32.totalorder %s16, 3
      %s673 = scalar_select %p672, %s16, 3
      %s674 = scalar_lea.vmem %s3, %s673
      %p675 = scmp.lt.s32.totalorder %s16, 3
      %s676 = scalar_select %p675, %s16, 3
      %s677 = scalar_lea.vmem %s4, %s676
      // Predicated region
      $region29: #{netg_forward.13} parent=27 // pred_check
        %p678 = pneg %p86
      $region30: #{netg_forward.13} parent=27 // pred_check_branch
        %680 = sbr.rel (%p678) target = $region32
      $region31: #{netg_forward.13} parent=27 // pred_region
        _
      $region32: #{netg_forward.13} parent=27 // pred_fallthru
        _
      // Predicated region
      $region33: #{netg_forward.13} parent=27 // pred_check
        %p681 = pneg %p112
      $region34: #{netg_forward.13} parent=27 // pred_check_branch
        %683 = sbr.rel (%p681) target = $region36
      $region35: #{netg_forward.13} parent=27 // pred_region
        _
      $region36: #{netg_forward.13} parent=27 // pred_fallthru
        _
      // Predicated region
      $region37: #{netg_forward.13} parent=27 // pred_check
        %p684 = pneg %p138
      $region38: #{netg_forward.13} parent=27 // pred_check_branch
        %686 = sbr.rel (%p684) target = $region40
      $region39: #{netg_forward.13} parent=27 // pred_region
        _
      $region40: #{netg_forward.13} parent=27 // pred_fallthru
        _
    $region28: #{netg_forward.13} parent=5 // pred_fallthru
      _
    %p687 = scmp.le.s32.totalorder 2, %s11
    // Predicated region
    $region41: #{netg_forward.13} parent=5 // pred_check
      %p688 = pneg %p687
    $region42: #{netg_forward.13} parent=5 // pred_check_branch
      %690 = sbr.rel (%p688) target = $region44
    $region43: #{netg_forward.13} parent=5 // pred_region
      %s691 = ssub.s32 %s11, 2
      // Predicated region
      $region45: #{netg_forward.13} parent=43 // pred_check
        %p692 = pneg %p92
      $region46: #{netg_forward.13} parent=43 // pred_check_branch
        %694 = sbr.rel (%p692) target = $region48
      $region47: #{netg_forward.13} parent=43 // pred_region
        %p695 = scmp.lt.s32.totalorder %s17, 3
        %s696 = scalar_select %p695, %s17, 3
        %s697 = smul.addr %s696, 16
        %s698 = smul.addr %s697, 8
        %s699 = scalar_lea.vmem %s2, %s698
      $region48: #{netg_forward.13} parent=43 // pred_fallthru
        _
      // Predicated region
      $region49: #{netg_forward.13} parent=43 // pred_check
        %p700 = pneg %p118
      $region50: #{netg_forward.13} parent=43 // pred_check_branch
        %702 = sbr.rel (%p700) target = $region52
      $region51: #{netg_forward.13} parent=43 // pred_region
        %p703 = scmp.lt.s32.totalorder %s17, 3
        %s704 = scalar_select %p703, %s17, 3
        %s705 = scalar_lea.vmem %s3, %s704
      $region52: #{netg_forward.13} parent=43 // pred_fallthru
        _
      // Predicated region
      $region53: #{netg_forward.13} parent=43 // pred_check
        %p706 = pneg %p144
      $region54: #{netg_forward.13} parent=43 // pred_check_branch
        %708 = sbr.rel (%p706) target = $region56
      $region55: #{netg_forward.13} parent=43 // pred_region
        %p709 = scmp.lt.s32.totalorder %s17, 3
        %s710 = scalar_select %p709, %s17, 3
        %s711 = scalar_lea.vmem %s4, %s710
      $region56: #{netg_forward.13} parent=43 // pred_fallthru
        _
    $region44: #{netg_forward.13} parent=5 // pred_fallthru
      _
  $region6: #{netg_forward.13} parent=0 // loop_footer
    %s15 = sadd.s32 1, %s11
  $region7: #{netg_forward.13} parent=0 // loop_footer_branch
    %10 = sbr.rel target = $region3
  $region8: #{netg_forward.13} parent=0 // loop_exit
    _

// kernel: netg_forward.14
$region0: #{netg_forward.14}
  #allocation0 [shape = 'u32[]', space=smem, size = 0x4, offset = 0x4, fixed_abs, tag = 'smem constant byte address 0x4 - core index']
  #allocation1 [shape = 'u32[144,128]{1,0:T(1,128)}', space=vmem, size = 0x12000, scoped, tag = 'internal scratch']
  %s0 = inlined_call_operand.vmem [shape: f32[64,256], index: 0, kind: input, shape index: {}]
  %s1 = inlined_call_operand.vmem [shape: f32[1,256], index: 1, kind: input, shape index: {}]
  %s2 = inlined_call_operand.vmem [shape: f32[1,256], index: 2, kind: input, shape index: {}]
  %s3 = inlined_call_operand.vmem [shape: f32[64,256], index: 3, kind: output, shape index: {}]
  %s4 = sld [smem:[#allocation0]]
  $region22: #{netg_forward.14} parent=0
    _
  %s6 = ssub.s32 1, %s4
  %s7 = scalar_select 0, %s6, %s4
  // Predicated region
  $region2: #{netg_forward.14} parent=0 // pred_check
    _
  $region3: #{netg_forward.14} parent=0 // pred_check_branch
    %9 = sbr.rel (0) target = $region5
  $region4: #{netg_forward.14} parent=0 // pred_region
    _
  $region5: #{netg_forward.14} parent=0 // pred_fallthru
    _
  // Predicated region
  $region6: #{netg_forward.14} parent=0 // pred_check
    _
  $region7: #{netg_forward.14} parent=0 // pred_check_branch
    %11 = sbr.rel (0) target = $region9
  $region8: #{netg_forward.14} parent=0 // pred_region
    _
  $region9: #{netg_forward.14} parent=0 // pred_fallthru
    _
  // Predicated region
  $region10: #{netg_forward.14} parent=0 // pred_check
    _
  $region11: #{netg_forward.14} parent=0 // pred_check_branch
    %13 = sbr.rel (0) target = $region13
  $region12: #{netg_forward.14} parent=0 // pred_region
    _
  $region13: #{netg_forward.14} parent=0 // pred_fallthru
    _
  %v14 = vld [vmem:[%s0] sm:$0xff]
  %v15 = vld [vmem:[%s0 + $0x8] sm:$0xff]
  %v16 = vld [vmem:[%s0 + $0x10] sm:$0xff]
  %v17 = vld [vmem:[%s0 + $0x18] sm:$0xff]
  %v18 = vld [vmem:[%s0 + $0x20] sm:$0xff]
  %v19 = vld [vmem:[%s0 + $0x28] sm:$0xff]
  %v20 = vld [vmem:[%s0 + $0x30] sm:$0xff]
  %v21 = vld [vmem:[%s0 + $0x38] sm:$0xff]
  %v22 = vld [vmem:[%s0 + $0x40] sm:$0xff]
  %v23 = vld [vmem:[%s0 + $0x48] sm:$0xff]
  %v24 = vld [vmem:[%s0 + $0x50] sm:$0xff]
  %v25 = vld [vmem:[%s0 + $0x58] sm:$0xff]
  %v26 = vld [vmem:[%s0 + $0x60] sm:$0xff]
  %v27 = vld [vmem:[%s0 + $0x68] sm:$0xff]
  %v28 = vld [vmem:[%s0 + $0x70] sm:$0xff]
  %v29 = vld [vmem:[%s0 + $0x78] sm:$0xff]
  %v30 = vld [vmem:[%s1] sm:$0x3]
  %v32 = vlaneseq
  %v33 = vshrl.u32 %v32, 7
  %v34 = vsub.s32 0, %v33
  %v35 = vrot.slane %v30, %v34
  %v36 = vlaneseq
  %v37 = vshrl.u32 %v36, 7
  %v38 = vsub.s32 1, %v37
  %v39 = vrot.slane %v30, %v38
  %v42 = vmul.f32 %v14, %v35
  %v43 = vmul.f32 %v15, %v39
  %v44 = vmul.f32 %v16, %v35
  %v45 = vmul.f32 %v17, %v39
  %v46 = vmul.f32 %v18, %v35
  %v47 = vmul.f32 %v19, %v39
  %v48 = vmul.f32 %v20, %v35
  %v49 = vmul.f32 %v21, %v39
  %v50 = vmul.f32 %v22, %v35
  %v51 = vmul.f32 %v23, %v39
  %v52 = vmul.f32 %v24, %v35
  %v53 = vmul.f32 %v25, %v39
  %v54 = vmul.f32 %v26, %v35
  %v55 = vmul.f32 %v27, %v39
  %v56 = vmul.f32 %v28, %v35
  %v57 = vmul.f32 %v29, %v39
  %v58 = vld [vmem:[%s2] sm:$0x3]
  %v60 = vlaneseq
  %v61 = vshrl.u32 %v60, 7
  %v62 = vsub.s32 0, %v61
  %v63 = vrot.slane %v58, %v62
  %v64 = vlaneseq
  %v65 = vshrl.u32 %v64, 7
  %v66 = vsub.s32 1, %v65
  %v67 = vrot.slane %v58, %v66
  %v70 = vadd.f32 %v42, %v63
  %v71 = vadd.f32 %v43, %v67
  %v72 = vadd.f32 %v44, %v63
  %v73 = vadd.f32 %v45, %v67
  %v74 = vadd.f32 %v46, %v63
  %v75 = vadd.f32 %v47, %v67
  %v76 = vadd.f32 %v48, %v63
  %v77 = vadd.f32 %v49, %v67
  %v78 = vadd.f32 %v50, %v63
  %v79 = vadd.f32 %v51, %v67
  %v80 = vadd.f32 %v52, %v63
  %v81 = vadd.f32 %v53, %v67
  %v82 = vadd.f32 %v54, %v63
  %v83 = vadd.f32 %v55, %v67
  %v84 = vadd.f32 %v56, %v63
  %v85 = vadd.f32 %v57, %v67
  %v86 = vmax.f32 %v70, 0.0
  %v87 = vmax.f32 %v71, 0.0
  %v88 = vmax.f32 %v72, 0.0
  %v89 = vmax.f32 %v73, 0.0
  %v90 = vmax.f32 %v74, 0.0
  %v91 = vmax.f32 %v75, 0.0
  %v92 = vmax.f32 %v76, 0.0
  %v93 = vmax.f32 %v77, 0.0
  %v94 = vmax.f32 %v78, 0.0
  %v95 = vmax.f32 %v79, 0.0
  %v96 = vmax.f32 %v80, 0.0
  %v97 = vmax.f32 %v81, 0.0
  %v98 = vmax.f32 %v82, 0.0
  %v99 = vmax.f32 %v83, 0.0
  %v100 = vmax.f32 %v84, 0.0
  %v101 = vmax.f32 %v85, 0.0
  %102 = vst [vmem:[%s3] sm:$0xff] %v86
  %103 = vst [vmem:[%s3 + $0x8] sm:$0xff] %v87
  %104 = vst [vmem:[%s3 + $0x10] sm:$0xff] %v88
  %105 = vst [vmem:[%s3 + $0x18] sm:$0xff] %v89
  %106 = vst [vmem:[%s3 + $0x20] sm:$0xff] %v90
  %107 = vst [vmem:[%s3 + $0x28] sm:$0xff] %v91
  %108 = vst [vmem:[%s3 + $0x30] sm:$0xff] %v92
  %109 = vst [vmem:[%s3 + $0x38] sm:$0xff] %v93
  %110 = vst [vmem:[%s3 + $0x40] sm:$0xff] %v94
  %111 = vst [vmem:[%s3 + $0x48] sm:$0xff] %v95
  %112 = vst [vmem:[%s3 + $0x50] sm:$0xff] %v96
  %113 = vst [vmem:[%s3 + $0x58] sm:$0xff] %v97
  %114 = vst [vmem:[%s3 + $0x60] sm:$0xff] %v98
  %115 = vst [vmem:[%s3 + $0x68] sm:$0xff] %v99
  %116 = vst [vmem:[%s3 + $0x70] sm:$0xff] %v100
  %117 = vst [vmem:[%s3 + $0x78] sm:$0xff] %v101
  // Predicated region
  $region14: #{netg_forward.14} parent=0 // pred_check
    _
  $region15: #{netg_forward.14} parent=0 // pred_check_branch
    %119 = sbr.rel (0) target = $region17
  $region16: #{netg_forward.14} parent=0 // pred_region
    _
  $region17: #{netg_forward.14} parent=0 // pred_fallthru
    _
  // Predicated region
  $region18: #{netg_forward.14} parent=0 // pred_check
    _
  $region19: #{netg_forward.14} parent=0 // pred_check_branch
    %121 = sbr.rel (0) target = $region21
  $region20: #{netg_forward.14} parent=0 // pred_region
    _
  $region21: #{netg_forward.14} parent=0 // pred_fallthru
    _

// kernel: netg_forward.15
$region0: #{netg_forward.15}
  #allocation0 [shape = 'u32[]', space=smem, size = 0x4, offset = 0x4, fixed_abs, tag = 'smem constant byte address 0x4 - core index']
  #allocation1 [shape = 'u32[144,128]{1,0:T(1,128)}', space=vmem, size = 0x12000, scoped, tag = 'internal scratch']
  %s0 = inlined_call_operand.vmem [shape: bf16[4,512,128], index: 0, kind: input, shape index: {}]
  %s1 = inlined_call_operand.vmem [shape: bf16[4,128,128], index: 1, kind: input, shape index: {}]
  %s2 = inlined_call_operand.vmem [shape: f32[4,512,16], index: 2, kind: output, shape index: {0}]
  %s3 = inlined_call_operand.vmem [shape: f32[4,1,16], index: 3, kind: output, shape index: {1}]
  %s4 = inlined_call_operand.vmem [shape: f32[4,1,16], index: 4, kind: output, shape index: {2}]
  %5 = xla_tuple %s2, %s3, %s4
  %s6 = sld [smem:[#allocation0]]
  $region57: #{netg_forward.15} parent=0
    _
  %s8 = ssub.s32 1, %s6
  %s9 = scalar_select 0, %s8, %s6
  loop: start=0, step=1, limit=6
  $region2: #{netg_forward.15} parent=0 // loop_pre_header
    _
  $region3: #{netg_forward.15} parent=0 // loop_header
    %s11 = sphi 0, %s15
    %p12 = scmp.ge.s32.totalorder %s11, 6
    %s21 = sphi 0, %s23
    %s24 = sphi 0, %s21
    %s25 = sphi 0, %s24
    %s41 = sphi 0, %s25
    %s47 = sphi 0, %s49
    %s50 = sphi 0, %s47
    %s51 = sphi 0, %s50
    %s67 = sphi 0, %s51
    %s73 = sphi 0, %s75
    %s76 = sphi 0, %s73
    %s77 = sphi 0, %s76
    %s93 = sphi 0, %s77
    %s99 = sphi 0, %s101
    %s102 = sphi 0, %s99
    %s103 = sphi 0, %s102
    %s119 = sphi 0, %s103
    %s125 = sphi 0, %s127
    %s128 = sphi 0, %s125
    %s129 = sphi 0, %s128
    %s145 = sphi 0, %s129
  $region4: #{netg_forward.15} parent=0 // loop_header_branch
    %14 = sbr.rel (%p12) target = $region8
  $region5: #{netg_forward.15} parent=0 // loop_body
    %s16 = ssub.s32 %s11, 1
    %s17 = ssub.s32 %s11, 2
    %s18 = sadd.s32 %s11, 1
    %s19 = ssub.s32 %s11, %s18
    %p20 = scmp.eq.s32.totalorder %s19, 0
    %s22 = sadd.s32 %s21, 1
    %s23 = scalar_select %p20, %s21, %s22
    %p26 = pneg %p20
    %p27 = scmp.eq.s32.totalorder %s11, 3
    %p28 = por %p26, %p27
    %p29 = scmp.ne.s32.totalorder %s21, %s24
    %p30 = scmp.eq.s32.totalorder %s11, 0
    %p31 = por %p29, %p30
    %p32 = scmp.ne.s32.totalorder %s21, %s24
    %p33 = scmp.eq.s32.totalorder %s16, 3
    %p34 = por %p32, %p33
    %p35 = scmp.ne.s32.totalorder %s24, %s25
    %p36 = scmp.eq.s32.totalorder %s16, 0
    %p37 = por %p35, %p36
    %p38 = scmp.ne.s32.totalorder %s24, %s25
    %p39 = scmp.eq.s32.totalorder %s17, 3
    %p40 = por %p38, %p39
    %p42 = scmp.ne.s32.totalorder %s25, %s41
    %p43 = scmp.eq.s32.totalorder %s17, 0
    %p44 = por %p42, %p43
    %s45 = ssub.s32 %s11, %s18
    %p46 = scmp.eq.s32.totalorder %s45, 0
    %s48 = sadd.s32 %s47, 1
    %s49 = scalar_select %p46, %s47, %s48
    %p52 = pneg %p46
    %p53 = scmp.eq.s32.totalorder %s11, 3
    %p54 = por %p52, %p53
    %p55 = scmp.ne.s32.totalorder %s47, %s50
    %p56 = scmp.eq.s32.totalorder %s11, 0
    %p57 = por %p55, %p56
    %p58 = scmp.ne.s32.totalorder %s47, %s50
    %p59 = scmp.eq.s32.totalorder %s16, 3
    %p60 = por %p58, %p59
    %p61 = scmp.ne.s32.totalorder %s50, %s51
    %p62 = scmp.eq.s32.totalorder %s16, 0
    %p63 = por %p61, %p62
    %p64 = scmp.ne.s32.totalorder %s50, %s51
    %p65 = scmp.eq.s32.totalorder %s17, 3
    %p66 = por %p64, %p65
    %p68 = scmp.ne.s32.totalorder %s51, %s67
    %p69 = scmp.eq.s32.totalorder %s17, 0
    %p70 = por %p68, %p69
    %s71 = ssub.s32 %s11, %s18
    %p72 = scmp.eq.s32.totalorder %s71, 0
    %s74 = sadd.s32 %s73, 1
    %s75 = scalar_select %p72, %s73, %s74
    %p78 = pneg %p72
    %p79 = scmp.eq.s32.totalorder %s11, 3
    %p80 = por %p78, %p79
    %p81 = scmp.ne.s32.totalorder %s73, %s76
    %p82 = scmp.eq.s32.totalorder %s11, 0
    %p83 = por %p81, %p82
    %p84 = scmp.ne.s32.totalorder %s73, %s76
    %p85 = scmp.eq.s32.totalorder %s16, 3
    %p86 = por %p84, %p85
    %p87 = scmp.ne.s32.totalorder %s76, %s77
    %p88 = scmp.eq.s32.totalorder %s16, 0
    %p89 = por %p87, %p88
    %p90 = scmp.ne.s32.totalorder %s76, %s77
    %p91 = scmp.eq.s32.totalorder %s17, 3
    %p92 = por %p90, %p91
    %p94 = scmp.ne.s32.totalorder %s77, %s93
    %p95 = scmp.eq.s32.totalorder %s17, 0
    %p96 = por %p94, %p95
    %s97 = ssub.s32 %s11, %s18
    %p98 = scmp.eq.s32.totalorder %s97, 0
    %s100 = sadd.s32 %s99, 1
    %s101 = scalar_select %p98, %s99, %s100
    %p104 = pneg %p98
    %p105 = scmp.eq.s32.totalorder %s11, 3
    %p106 = por %p104, %p105
    %p107 = scmp.ne.s32.totalorder %s99, %s102
    %p108 = scmp.eq.s32.totalorder %s11, 0
    %p109 = por %p107, %p108
    %p110 = scmp.ne.s32.totalorder %s99, %s102
    %p111 = scmp.eq.s32.totalorder %s16, 3
    %p112 = por %p110, %p111
    %p113 = scmp.ne.s32.totalorder %s102, %s103
    %p114 = scmp.eq.s32.totalorder %s16, 0
    %p115 = por %p113, %p114
    %p116 = scmp.ne.s32.totalorder %s102, %s103
    %p117 = scmp.eq.s32.totalorder %s17, 3
    %p118 = por %p116, %p117
    %p120 = scmp.ne.s32.totalorder %s103, %s119
    %p121 = scmp.eq.s32.totalorder %s17, 0
    %p122 = por %p120, %p121
    %s123 = ssub.s32 %s11, %s18
    %p124 = scmp.eq.s32.totalorder %s123, 0
    %s126 = sadd.s32 %s125, 1
    %s127 = scalar_select %p124, %s125, %s126
    %p130 = pneg %p124
    %p131 = scmp.eq.s32.totalorder %s11, 3
    %p132 = por %p130, %p131
    %p133 = scmp.ne.s32.totalorder %s125, %s128
    %p134 = scmp.eq.s32.totalorder %s11, 0
    %p135 = por %p133, %p134
    %p136 = scmp.ne.s32.totalorder %s125, %s128
    %p137 = scmp.eq.s32.totalorder %s16, 3
    %p138 = por %p136, %p137
    %p139 = scmp.ne.s32.totalorder %s128, %s129
    %p140 = scmp.eq.s32.totalorder %s16, 0
    %p141 = por %p139, %p140
    %p142 = scmp.ne.s32.totalorder %s128, %s129
    %p143 = scmp.eq.s32.totalorder %s17, 3
    %p144 = por %p142, %p143
    %p146 = scmp.ne.s32.totalorder %s129, %s145
    %p147 = scmp.eq.s32.totalorder %s17, 0
    %p148 = por %p146, %p147
    %p149 = scmp.le.s32.totalorder 1, %s11
    %p150 = scmp.lt.s32.totalorder %s11, 5
    %p151 = pnand %p149, %p150
    %p152 = pneg %p151
    // Predicated region
    $region9: #{netg_forward.15} parent=5 // pred_check
      _
    $region10: #{netg_forward.15} parent=5 // pred_check_branch
      %154 = sbr.rel (%p151) target = $region12
    $region11: #{netg_forward.15} parent=5 // pred_region
      %s155 = ssub.s32 %s11, 1
    $region12: #{netg_forward.15} parent=5 // pred_fallthru
      _
    %p156 = scmp.lt.s32.totalorder %s11, 4
    // Predicated region
    $region13: #{netg_forward.15} parent=5 // pred_check
      %p157 = pneg %p156
    $region14: #{netg_forward.15} parent=5 // pred_check_branch
      %159 = sbr.rel (%p157) target = $region16
    $region15: #{netg_forward.15} parent=5 // pred_region
      // Predicated region
      $region17: #{netg_forward.15} parent=15 // pred_check
        %p160 = pneg %p31
      $region18: #{netg_forward.15} parent=15 // pred_check_branch
        %162 = sbr.rel (%p160) target = $region20
      $region19: #{netg_forward.15} parent=15 // pred_region
        %p163 = scmp.lt.s32.totalorder %s11, 3
        %s164 = scalar_select %p163, %s11, 3
        %s165 = smul.addr %s164, 64
        %s166 = smul.addr %s165, 4
        %s167 = scalar_lea.vmem %s0, %s166
      $region20: #{netg_forward.15} parent=15 // pred_fallthru
        _
      // Predicated region
      $region21: #{netg_forward.15} parent=15 // pred_check
        %p168 = pneg %p57
      $region22: #{netg_forward.15} parent=15 // pred_check_branch
        %170 = sbr.rel (%p168) target = $region24
      $region23: #{netg_forward.15} parent=15 // pred_region
        %p171 = scmp.lt.s32.totalorder %s11, 3
        %s172 = scalar_select %p171, %s11, 3
        %s173 = smul.addr %s172, 16
        %s174 = smul.addr %s173, 4
        %s175 = scalar_lea.vmem %s1, %s174
      $region24: #{netg_forward.15} parent=15 // pred_fallthru
        _
    $region16: #{netg_forward.15} parent=5 // pred_fallthru
      _
    %p176 = scmp.le.s32.totalorder 1, %s11
    %p177 = scmp.lt.s32.totalorder %s11, 5
    %p178 = pnand %p176, %p177
    %p179 = pneg %p178
    // Predicated region
    $region25: #{netg_forward.15} parent=5 // pred_check
      _
    $region26: #{netg_forward.15} parent=5 // pred_check_branch
      %181 = sbr.rel (%p178) target = $region28
    $region27: #{netg_forward.15} parent=5 // pred_region
      %s182 = ssub.s32 %s11, 1
      %p183 = scmp.lt.s32.totalorder %s16, 3
      %s184 = scalar_select %p183, %s16, 3
      %s185 = smul.addr %s184, 64
      %s186 = smul.addr %s185, 4
      %s187 = scalar_lea.vmem %s0, %s186
      %p188 = pneg %p37
      %p189 = pneg %p34
      %p190 = scmp.lt.s32.totalorder %s16, 3
      %s191 = scalar_select %p190, %s16, 3
      %s192 = smul.addr %s191, 16
      %s193 = smul.addr %s192, 4
      %s194 = scalar_lea.vmem %s1, %s193
      %p195 = pneg %p63
      %p196 = pneg %p60
      %p197 = pneg %p89
      %p198 = pneg %p86
      %p199 = scmp.lt.s32.totalorder %s16, 3
      %s200 = scalar_select %p199, %s16, 3
      %s201 = smul.addr %s200, 64
      %s202 = smul.addr %s201, 8
      %s203 = scalar_lea.vmem %s2, %s202
      %p204 = pneg %p115
      %p205 = pneg %p112
      %p206 = scmp.lt.s32.totalorder %s16, 3
      %s207 = scalar_select %p206, %s16, 3
      %s208 = scalar_lea.vmem %s3, %s207
      %p209 = pneg %p141
      %p210 = pneg %p138
      %p211 = scmp.lt.s32.totalorder %s16, 3
      %s212 = scalar_select %p211, %s16, 3
      %s213 = scalar_lea.vmem %s4, %s212
      %p214 = scmp.lt.s32.totalorder %s16, 3
      %s215 = scalar_select %p214, %s16, 3
      %s216 = smul.addr %s215, 64
      %s217 = smul.addr %s216, 4
      %s218 = scalar_lea.vmem %s0, %s217
      %p219 = scmp.lt.s32.totalorder %s16, 3
      %s220 = scalar_select %p219, %s16, 3
      %s221 = smul.addr %s220, 16
      %s222 = smul.addr %s221, 4
      %s223 = scalar_lea.vmem %s1, %s222
      %p224 = scmp.lt.s32.totalorder %s16, 3
      %s225 = scalar_select %p224, %s16, 3
      %s226 = smul.addr %s225, 64
      %s227 = smul.addr %s226, 8
      %s228 = scalar_lea.vmem %s2, %s227
      %p229 = scmp.lt.s32.totalorder %s16, 3
      %s230 = scalar_select %p229, %s16, 3
      %s231 = scalar_lea.vmem %s3, %s230
      %p232 = scmp.lt.s32.totalorder %s16, 3
      %s233 = scalar_select %p232, %s16, 3
      %s234 = scalar_lea.vmem %s4, %s233
      %v236 = vld [vmem:[%s218] sm:$0xf]
      %v237 = vld [vmem:[%s218 + $0x4] sm:$0xf]
      %v238 = vld [vmem:[%s218 + $0x8] sm:$0xf]
      %v239 = vld [vmem:[%s218 + $0xc] sm:$0xf]
      %v240 = vld [vmem:[%s218 + $0x10] sm:$0xf]
      %v241 = vld [vmem:[%s218 + $0x14] sm:$0xf]
      %v242 = vld [vmem:[%s218 + $0x18] sm:$0xf]
      %v243 = vld [vmem:[%s218 + $0x1c] sm:$0xf]
      %v244 = vld [vmem:[%s218 + $0x20] sm:$0xf]
      %v245 = vld [vmem:[%s218 + $0x24] sm:$0xf]
      %v246 = vld [vmem:[%s218 + $0x28] sm:$0xf]
      %v247 = vld [vmem:[%s218 + $0x2c] sm:$0xf]
      %v248 = vld [vmem:[%s218 + $0x30] sm:$0xf]
      %v249 = vld [vmem:[%s218 + $0x34] sm:$0xf]
      %v250 = vld [vmem:[%s218 + $0x38] sm:$0xf]
      %v251 = vld [vmem:[%s218 + $0x3c] sm:$0xf]
      %v252 = vld [vmem:[%s218 + $0x40] sm:$0xf]
      %v253 = vld [vmem:[%s218 + $0x44] sm:$0xf]
      %v254 = vld [vmem:[%s218 + $0x48] sm:$0xf]
      %v255 = vld [vmem:[%s218 + $0x4c] sm:$0xf]
      %v256 = vld [vmem:[%s218 + $0x50] sm:$0xf]
      %v257 = vld [vmem:[%s218 + $0x54] sm:$0xf]
      %v258 = vld [vmem:[%s218 + $0x58] sm:$0xf]
      %v259 = vld [vmem:[%s218 + $0x5c] sm:$0xf]
      %v260 = vld [vmem:[%s218 + $0x60] sm:$0xf]
      %v261 = vld [vmem:[%s218 + $0x64] sm:$0xf]
      %v262 = vld [vmem:[%s218 + $0x68] sm:$0xf]
      %v263 = vld [vmem:[%s218 + $0x6c] sm:$0xf]
      %v264 = vld [vmem:[%s218 + $0x70] sm:$0xf]
      %v265 = vld [vmem:[%s218 + $0x74] sm:$0xf]
      %v266 = vld [vmem:[%s218 + $0x78] sm:$0xf]
      %v267 = vld [vmem:[%s218 + $0x7c] sm:$0xf]
      %v268 = vld [vmem:[%s218 + $0x80] sm:$0xf]
      %v269 = vld [vmem:[%s218 + $0x84] sm:$0xf]
      %v270 = vld [vmem:[%s218 + $0x88] sm:$0xf]
      %v271 = vld [vmem:[%s218 + $0x8c] sm:$0xf]
      %v272 = vld [vmem:[%s218 + $0x90] sm:$0xf]
      %v273 = vld [vmem:[%s218 + $0x94] sm:$0xf]
      %v274 = vld [vmem:[%s218 + $0x98] sm:$0xf]
      %v275 = vld [vmem:[%s218 + $0x9c] sm:$0xf]
      %v276 = vld [vmem:[%s218 + $0xa0] sm:$0xf]
      %v277 = vld [vmem:[%s218 + $0xa4] sm:$0xf]
      %v278 = vld [vmem:[%s218 + $0xa8] sm:$0xf]
      %v279 = vld [vmem:[%s218 + $0xac] sm:$0xf]
      %v280 = vld [vmem:[%s218 + $0xb0] sm:$0xf]
      %v281 = vld [vmem:[%s218 + $0xb4] sm:$0xf]
      %v282 = vld [vmem:[%s218 + $0xb8] sm:$0xf]
      %v283 = vld [vmem:[%s218 + $0xbc] sm:$0xf]
      %v284 = vld [vmem:[%s218 + $0xc0] sm:$0xf]
      %v285 = vld [vmem:[%s218 + $0xc4] sm:$0xf]
      %v286 = vld [vmem:[%s218 + $0xc8] sm:$0xf]
      %v287 = vld [vmem:[%s218 + $0xcc] sm:$0xf]
      %v288 = vld [vmem:[%s218 + $0xd0] sm:$0xf]
      %v289 = vld [vmem:[%s218 + $0xd4] sm:$0xf]
      %v290 = vld [vmem:[%s218 + $0xd8] sm:$0xf]
      %v291 = vld [vmem:[%s218 + $0xdc] sm:$0xf]
      %v292 = vld [vmem:[%s218 + $0xe0] sm:$0xf]
      %v293 = vld [vmem:[%s218 + $0xe4] sm:$0xf]
      %v294 = vld [vmem:[%s218 + $0xe8] sm:$0xf]
      %v295 = vld [vmem:[%s218 + $0xec] sm:$0xf]
      %v296 = vld [vmem:[%s218 + $0xf0] sm:$0xf]
      %v297 = vld [vmem:[%s218 + $0xf4] sm:$0xf]
      %v298 = vld [vmem:[%s218 + $0xf8] sm:$0xf]
      %v299 = vld [vmem:[%s218 + $0xfc] sm:$0xf]
      %v300 = vld [vmem:[%s223] sm:$0xf]
      %v301 = vld [vmem:[%s223 + $0x4] sm:$0xf]
      %v302 = vld [vmem:[%s223 + $0x8] sm:$0xf]
      %v303 = vld [vmem:[%s223 + $0xc] sm:$0xf]
      %v304 = vld [vmem:[%s223 + $0x10] sm:$0xf]
      %v305 = vld [vmem:[%s223 + $0x14] sm:$0xf]
      %v306 = vld [vmem:[%s223 + $0x18] sm:$0xf]
      %v307 = vld [vmem:[%s223 + $0x1c] sm:$0xf]
      %v308 = vld [vmem:[%s223 + $0x20] sm:$0xf]
      %v309 = vld [vmem:[%s223 + $0x24] sm:$0xf]
      %v310 = vld [vmem:[%s223 + $0x28] sm:$0xf]
      %v311 = vld [vmem:[%s223 + $0x2c] sm:$0xf]
      %v312 = vld [vmem:[%s223 + $0x30] sm:$0xf]
      %v313 = vld [vmem:[%s223 + $0x34] sm:$0xf]
      %v314 = vld [vmem:[%s223 + $0x38] sm:$0xf]
      %v315 = vld [vmem:[%s223 + $0x3c] sm:$0xf]
      %v380 = vunpack.c.l.b16 %v236
      %v381 = vunpack.c.l.b16 %v237
      %v382 = vunpack.c.l.b16 %v238
      %v383 = vunpack.c.l.b16 %v239
      %v384 = vunpack.c.l.b16 %v240
      %v385 = vunpack.c.l.b16 %v241
      %v386 = vunpack.c.l.b16 %v242
      %v387 = vunpack.c.l.b16 %v243
      %v388 = vunpack.c.l.b16 %v244
      %v389 = vunpack.c.l.b16 %v245
      %v390 = vunpack.c.l.b16 %v246
      %v391 = vunpack.c.l.b16 %v247
      %v392 = vunpack.c.l.b16 %v248
      %v393 = vunpack.c.l.b16 %v249
      %v394 = vunpack.c.l.b16 %v250
      %v395 = vunpack.c.l.b16 %v251
      %v396 = vunpack.c.l.b16 %v252
      %v397 = vunpack.c.l.b16 %v253
      %v398 = vunpack.c.l.b16 %v254
      %v399 = vunpack.c.l.b16 %v255
      %v400 = vunpack.c.l.b16 %v256
      %v401 = vunpack.c.l.b16 %v257
      %v402 = vunpack.c.l.b16 %v258
      %v403 = vunpack.c.l.b16 %v259
      %v404 = vunpack.c.l.b16 %v260
      %v405 = vunpack.c.l.b16 %v261
      %v406 = vunpack.c.l.b16 %v262
      %v407 = vunpack.c.l.b16 %v263
      %v408 = vunpack.c.l.b16 %v264
      %v409 = vunpack.c.l.b16 %v265
      %v410 = vunpack.c.l.b16 %v266
      %v411 = vunpack.c.l.b16 %v267
      %v412 = vunpack.c.l.b16 %v268
      %v413 = vunpack.c.l.b16 %v269
      %v414 = vunpack.c.l.b16 %v270
      %v415 = vunpack.c.l.b16 %v271
      %v416 = vunpack.c.l.b16 %v272
      %v417 = vunpack.c.l.b16 %v273
      %v418 = vunpack.c.l.b16 %v274
      %v419 = vunpack.c.l.b16 %v275
      %v420 = vunpack.c.l.b16 %v276
      %v421 = vunpack.c.l.b16 %v277
      %v422 = vunpack.c.l.b16 %v278
      %v423 = vunpack.c.l.b16 %v279
      %v424 = vunpack.c.l.b16 %v280
      %v425 = vunpack.c.l.b16 %v281
      %v426 = vunpack.c.l.b16 %v282
      %v427 = vunpack.c.l.b16 %v283
      %v428 = vunpack.c.l.b16 %v284
      %v429 = vunpack.c.l.b16 %v285
      %v430 = vunpack.c.l.b16 %v286
      %v431 = vunpack.c.l.b16 %v287
      %v432 = vunpack.c.l.b16 %v288
      %v433 = vunpack.c.l.b16 %v289
      %v434 = vunpack.c.l.b16 %v290
      %v435 = vunpack.c.l.b16 %v291
      %v436 = vunpack.c.l.b16 %v292
      %v437 = vunpack.c.l.b16 %v293
      %v438 = vunpack.c.l.b16 %v294
      %v439 = vunpack.c.l.b16 %v295
      %v440 = vunpack.c.l.b16 %v296
      %v441 = vunpack.c.l.b16 %v297
      %v442 = vunpack.c.l.b16 %v298
      %v443 = vunpack.c.l.b16 %v299
      %v444 = vpack.c.b16 %v381, %v380
      %v445 = vpack.c.b16 %v383, %v382
      %v446 = vpack.c.b16 %v385, %v384
      %v447 = vpack.c.b16 %v387, %v386
      %v448 = vpack.c.b16 %v389, %v388
      %v449 = vpack.c.b16 %v391, %v390
      %v450 = vpack.c.b16 %v393, %v392
      %v451 = vpack.c.b16 %v395, %v394
      %v452 = vpack.c.b16 %v397, %v396
      %v453 = vpack.c.b16 %v399, %v398
      %v454 = vpack.c.b16 %v401, %v400
      %v455 = vpack.c.b16 %v403, %v402
      %v456 = vpack.c.b16 %v405, %v404
      %v457 = vpack.c.b16 %v407, %v406
      %v458 = vpack.c.b16 %v409, %v408
      %v459 = vpack.c.b16 %v411, %v410
      %v460 = vpack.c.b16 %v413, %v412
      %v461 = vpack.c.b16 %v415, %v414
      %v462 = vpack.c.b16 %v417, %v416
      %v463 = vpack.c.b16 %v419, %v418
      %v464 = vpack.c.b16 %v421, %v420
      %v465 = vpack.c.b16 %v423, %v422
      %v466 = vpack.c.b16 %v425, %v424
      %v467 = vpack.c.b16 %v427, %v426
      %v468 = vpack.c.b16 %v429, %v428
      %v469 = vpack.c.b16 %v431, %v430
      %v470 = vpack.c.b16 %v433, %v432
      %v471 = vpack.c.b16 %v435, %v434
      %v472 = vpack.c.b16 %v437, %v436
      %v473 = vpack.c.b16 %v439, %v438
      %v474 = vpack.c.b16 %v441, %v440
      %v475 = vpack.c.b16 %v443, %v442
      %v524 = vunpack.c.l.b16 %v300
      %v525 = vunpack.c.l.b16 %v301
      %v526 = vunpack.c.l.b16 %v302
      %v527 = vunpack.c.l.b16 %v303
      %v528 = vunpack.c.l.b16 %v304
      %v529 = vunpack.c.l.b16 %v305
      %v530 = vunpack.c.l.b16 %v306
      %v531 = vunpack.c.l.b16 %v307
      %v532 = vunpack.c.l.b16 %v308
      %v533 = vunpack.c.l.b16 %v309
      %v534 = vunpack.c.l.b16 %v310
      %v535 = vunpack.c.l.b16 %v311
      %v536 = vunpack.c.l.b16 %v312
      %v537 = vunpack.c.l.b16 %v313
      %v538 = vunpack.c.l.b16 %v314
      %v539 = vunpack.c.l.b16 %v315
      %v540 = vpack.c.b16 %v525, %v524
      %v541 = vpack.c.b16 %v527, %v526
      %v542 = vpack.c.b16 %v529, %v528
      %v543 = vpack.c.b16 %v531, %v530
      %v544 = vpack.c.b16 %v533, %v532
      %v545 = vpack.c.b16 %v535, %v534
      %v546 = vpack.c.b16 %v537, %v536
      %v547 = vpack.c.b16 %v539, %v538
      %556 = vmatprep.subr.bf16.mxu0 0
      %557 = vmatpush1.bf16.msra.mxu0 %v540
      %558 = vmatprep.subr.bf16.mxu0 0
      %559 = vmatpush1.bf16.msra.mxu0 %v541
      %560 = vmatprep.subr.bf16.mxu0 0
      %561 = vmatpush1.bf16.msra.mxu0 %v542
      %562 = vmatprep.subr.bf16.mxu0 0
      %563 = vmatpush1.bf16.msra.mxu0 %v543
      %564 = vmatprep.subr.bf16.mxu0 0
      %565 = vmatpush1.bf16.msra.mxu0 %v544
      %566 = vmatprep.subr.bf16.mxu0 0
      %567 = vmatpush1.bf16.msra.mxu0 %v545
      %568 = vmatprep.subr.bf16.mxu0 0
      %569 = vmatpush1.bf16.msra.mxu0 %v546
      %570 = vmatprep.subr.bf16.mxu0 0
      %571 = vmatpush1.bf16.msra.mxu0 %v547
      %572 = vmatprep.subr.bf16.mxu0 0
      %573 = vmatpush1.bf16.msra.mxu0 0
      %574 = vmatprep.subr.bf16.mxu0 0
      %575 = vmatpush1.bf16.msra.mxu0 0
      %576 = vmatprep.subr.bf16.mxu0 0
      %577 = vmatpush1.bf16.msra.mxu0 0
      %578 = vmatprep.subr.bf16.mxu0 0
      %579 = vmatpush1.bf16.msra.mxu0 0
      %580 = vmatprep.subr.bf16.mxu0 0
      %581 = vmatpush1.bf16.msra.mxu0 0
      %582 = vmatprep.subr.bf16.mxu0 0
      %583 = vmatpush1.bf16.msra.mxu0 0
      %584 = vmatprep.subr.bf16.mxu0 0
      %585 = vmatpush1.bf16.msra.mxu0 0
      %586 = vmatprep.subr.bf16.mxu0 0
      %587 = vmatpush1.bf16.msra.mxu0 0
      %588 = vmatprep.mubr.bf16.mxu0 0
      %589 = vmatmul.mubr.bf16.gmra.mrb[0].mxu0 %v444
      %v590 = vpop.f32.mrb[0].mxu0
      %v591 = vadd.f32 0.0, %v590
      %v592 = vpop.f32.mrb[0].mxu0
      %v593 = vpop.f32.mrb[0].mxu0
      %v594 = vadd.f32 0.0, %v593
      %v595 = vpop.f32.mrb[0].mxu0
      %596 = vmatprep.mubr.bf16.mxu0 0
      %597 = vmatmul.mubr.bf16.gmra.mrb[0].mxu0 %v445
      %v598 = vpop.f32.mrb[0].mxu0
      %v599 = vadd.f32 0.0, %v598
      %v600 = vpop.f32.mrb[0].mxu0
      %v601 = vpop.f32.mrb[0].mxu0
      %v602 = vadd.f32 0.0, %v601
      %v603 = vpop.f32.mrb[0].mxu0
      %604 = vmatprep.mubr.bf16.mxu0 0
      %605 = vmatmul.mubr.bf16.gmra.mrb[0].mxu0 %v446
      %v606 = vpop.f32.mrb[0].mxu0
      %v607 = vadd.f32 0.0, %v606
      %v608 = vpop.f32.mrb[0].mxu0
      %v609 = vpop.f32.mrb[0].mxu0
      %v610 = vadd.f32 0.0, %v609
      %v611 = vpop.f32.mrb[0].mxu0
      %612 = vmatprep.mubr.bf16.mxu0 0
      %613 = vmatmul.mubr.bf16.gmra.mrb[0].mxu0 %v447
      %v614 = vpop.f32.mrb[0].mxu0
      %v615 = vadd.f32 0.0, %v614
      %v616 = vpop.f32.mrb[0].mxu0
      %v617 = vpop.f32.mrb[0].mxu0
      %v618 = vadd.f32 0.0, %v617
      %v619 = vpop.f32.mrb[0].mxu0
      %620 = vmatprep.mubr.bf16.mxu0 0
      %621 = vmatmul.mubr.bf16.gmra.mrb[0].mxu0 %v448
      %v622 = vpop.f32.mrb[0].mxu0
      %v623 = vadd.f32 0.0, %v622
      %v624 = vpop.f32.mrb[0].mxu0
      %v625 = vpop.f32.mrb[0].mxu0
      %v626 = vadd.f32 0.0, %v625
      %v627 = vpop.f32.mrb[0].mxu0
      %628 = vmatprep.mubr.bf16.mxu0 0
      %629 = vmatmul.mubr.bf16.gmra.mrb[0].mxu0 %v449
      %v630 = vpop.f32.mrb[0].mxu0
      %v631 = vadd.f32 0.0, %v630
      %v632 = vpop.f32.mrb[0].mxu0
      %v633 = vpop.f32.mrb[0].mxu0
      %v634 = vadd.f32 0.0, %v633
      %v635 = vpop.f32.mrb[0].mxu0
      %636 = vmatprep.mubr.bf16.mxu0 0
      %637 = vmatmul.mubr.bf16.gmra.mrb[0].mxu0 %v450
      %v638 = vpop.f32.mrb[0].mxu0
      %v639 = vadd.f32 0.0, %v638
      %v640 = vpop.f32.mrb[0].mxu0
      %v641 = vpop.f32.mrb[0].mxu0
      %v642 = vadd.f32 0.0, %v641
      %v643 = vpop.f32.mrb[0].mxu0
      %644 = vmatprep.mubr.bf16.mxu0 0
      %645 = vmatmul.mubr.bf16.gmra.mrb[0].mxu0 %v451
      %v646 = vpop.f32.mrb[0].mxu0
      %v647 = vadd.f32 0.0, %v646
      %v648 = vpop.f32.mrb[0].mxu0
      %v649 = vpop.f32.mrb[0].mxu0
      %v650 = vadd.f32 0.0, %v649
      %v651 = vpop.f32.mrb[0].mxu0
      %652 = vmatprep.mubr.bf16.mxu0 0
      %653 = vmatmul.mubr.bf16.gmra.mrb[0].mxu0 %v452
      %v654 = vpop.f32.mrb[0].mxu0
      %v655 = vadd.f32 0.0, %v654
      %v656 = vpop.f32.mrb[0].mxu0
      %v657 = vpop.f32.mrb[0].mxu0
      %v658 = vadd.f32 0.0, %v657
      %v659 = vpop.f32.mrb[0].mxu0
      %660 = vmatprep.mubr.bf16.mxu0 0
      %661 = vmatmul.mubr.bf16.gmra.mrb[0].mxu0 %v453
      %v662 = vpop.f32.mrb[0].mxu0
      %v663 = vadd.f32 0.0, %v662
      %v664 = vpop.f32.mrb[0].mxu0
      %v665 = vpop.f32.mrb[0].mxu0
      %v666 = vadd.f32 0.0, %v665
      %v667 = vpop.f32.mrb[0].mxu0
      %668 = vmatprep.mubr.bf16.mxu0 0
      %669 = vmatmul.mubr.bf16.gmra.mrb[0].mxu0 %v454
      %v670 = vpop.f32.mrb[0].mxu0
      %v671 = vadd.f32 0.0, %v670
      %v672 = vpop.f32.mrb[0].mxu0
      %v673 = vpop.f32.mrb[0].mxu0
      %v674 = vadd.f32 0.0, %v673
      %v675 = vpop.f32.mrb[0].mxu0
      %676 = vmatprep.mubr.bf16.mxu0 0
      %677 = vmatmul.mubr.bf16.gmra.mrb[0].mxu0 %v455
      %v678 = vpop.f32.mrb[0].mxu0
      %v679 = vadd.f32 0.0, %v678
      %v680 = vpop.f32.mrb[0].mxu0
      %v681 = vpop.f32.mrb[0].mxu0
      %v682 = vadd.f32 0.0, %v681
      %v683 = vpop.f32.mrb[0].mxu0
      %684 = vmatprep.mubr.bf16.mxu0 0
      %685 = vmatmul.mubr.bf16.gmra.mrb[0].mxu0 %v456
      %v686 = vpop.f32.mrb[0].mxu0
      %v687 = vadd.f32 0.0, %v686
      %v688 = vpop.f32.mrb[0].mxu0
      %v689 = vpop.f32.mrb[0].mxu0
      %v690 = vadd.f32 0.0, %v689
      %v691 = vpop.f32.mrb[0].mxu0
      %692 = vmatprep.mubr.bf16.mxu0 0
      %693 = vmatmul.mubr.bf16.gmra.mrb[0].mxu0 %v457
      %v694 = vpop.f32.mrb[0].mxu0
      %v695 = vadd.f32 0.0, %v694
      %v696 = vpop.f32.mrb[0].mxu0
      %v697 = vpop.f32.mrb[0].mxu0
      %v698 = vadd.f32 0.0, %v697
      %v699 = vpop.f32.mrb[0].mxu0
      %700 = vmatprep.mubr.bf16.mxu0 0
      %701 = vmatmul.mubr.bf16.gmra.mrb[0].mxu0 %v458
      %v702 = vpop.f32.mrb[0].mxu0
      %v703 = vadd.f32 0.0, %v702
      %v704 = vpop.f32.mrb[0].mxu0
      %v705 = vpop.f32.mrb[0].mxu0
      %v706 = vadd.f32 0.0, %v705
      %v707 = vpop.f32.mrb[0].mxu0
      %708 = vmatprep.mubr.bf16.mxu0 0
      %709 = vmatmul.mubr.bf16.gmra.mrb[0].mxu0 %v459
      %v710 = vpop.f32.mrb[0].mxu0
      %v711 = vadd.f32 0.0, %v710
      %v712 = vpop.f32.mrb[0].mxu0
      %v713 = vpop.f32.mrb[0].mxu0
      %v714 = vadd.f32 0.0, %v713
      %v715 = vpop.f32.mrb[0].mxu0
      %716 = vmatprep.mubr.bf16.mxu0 0
      %717 = vmatmul.mubr.bf16.gmra.mrb[0].mxu0 %v460
      %v718 = vpop.f32.mrb[0].mxu0
      %v719 = vadd.f32 0.0, %v718
      %v720 = vpop.f32.mrb[0].mxu0
      %v721 = vpop.f32.mrb[0].mxu0
      %v722 = vadd.f32 0.0, %v721
      %v723 = vpop.f32.mrb[0].mxu0
      %724 = vmatprep.mubr.bf16.mxu0 0
      %725 = vmatmul.mubr.bf16.gmra.mrb[0].mxu0 %v461
      %v726 = vpop.f32.mrb[0].mxu0
      %v727 = vadd.f32 0.0, %v726
      %v728 = vpop.f32.mrb[0].mxu0
      %v729 = vpop.f32.mrb[0].mxu0
      %v730 = vadd.f32 0.0, %v729
      %v731 = vpop.f32.mrb[0].mxu0
      %732 = vmatprep.mubr.bf16.mxu0 0
      %733 = vmatmul.mubr.bf16.gmra.mrb[0].mxu0 %v462
      %v734 = vpop.f32.mrb[0].mxu0
      %v735 = vadd.f32 0.0, %v734
      %v736 = vpop.f32.mrb[0].mxu0
      %v737 = vpop.f32.mrb[0].mxu0
      %v738 = vadd.f32 0.0, %v737
      %v739 = vpop.f32.mrb[0].mxu0
      %740 = vmatprep.mubr.bf16.mxu0 0
      %741 = vmatmul.mubr.bf16.gmra.mrb[0].mxu0 %v463
      %v742 = vpop.f32.mrb[0].mxu0
      %v743 = vadd.f32 0.0, %v742
      %v744 = vpop.f32.mrb[0].mxu0
      %v745 = vpop.f32.mrb[0].mxu0
      %v746 = vadd.f32 0.0, %v745
      %v747 = vpop.f32.mrb[0].mxu0
      %748 = vmatprep.mubr.bf16.mxu0 0
      %749 = vmatmul.mubr.bf16.gmra.mrb[0].mxu0 %v464
      %v750 = vpop.f32.mrb[0].mxu0
      %v751 = vadd.f32 0.0, %v750
      %v752 = vpop.f32.mrb[0].mxu0
      %v753 = vpop.f32.mrb[0].mxu0
      %v754 = vadd.f32 0.0, %v753
      %v755 = vpop.f32.mrb[0].mxu0
      %756 = vmatprep.mubr.bf16.mxu0 0
      %757 = vmatmul.mubr.bf16.gmra.mrb[0].mxu0 %v465
      %v758 = vpop.f32.mrb[0].mxu0
      %v759 = vadd.f32 0.0, %v758
      %v760 = vpop.f32.mrb[0].mxu0
      %v761 = vpop.f32.mrb[0].mxu0
      %v762 = vadd.f32 0.0, %v761
      %v763 = vpop.f32.mrb[0].mxu0
      %764 = vmatprep.mubr.bf16.mxu0 0
      %765 = vmatmul.mubr.bf16.gmra.mrb[0].mxu0 %v466
      %v766 = vpop.f32.mrb[0].mxu0
      %v767 = vadd.f32 0.0, %v766
      %v768 = vpop.f32.mrb[0].mxu0
      %v769 = vpop.f32.mrb[0].mxu0
      %v770 = vadd.f32 0.0, %v769
      %v771 = vpop.f32.mrb[0].mxu0
      %772 = vmatprep.mubr.bf16.mxu0 0
      %773 = vmatmul.mubr.bf16.gmra.mrb[0].mxu0 %v467
      %v774 = vpop.f32.mrb[0].mxu0
      %v775 = vadd.f32 0.0, %v774
      %v776 = vpop.f32.mrb[0].mxu0
      %v777 = vpop.f32.mrb[0].mxu0
      %v778 = vadd.f32 0.0, %v777
      %v779 = vpop.f32.mrb[0].mxu0
      %780 = vmatprep.mubr.bf16.mxu0 0
      %781 = vmatmul.mubr.bf16.gmra.mrb[0].mxu0 %v468
      %v782 = vpop.f32.mrb[0].mxu0
      %v783 = vadd.f32 0.0, %v782
      %v784 = vpop.f32.mrb[0].mxu0
      %v785 = vpop.f32.mrb[0].mxu0
      %v786 = vadd.f32 0.0, %v785
      %v787 = vpop.f32.mrb[0].mxu0
      %788 = vmatprep.mubr.bf16.mxu0 0
      %789 = vmatmul.mubr.bf16.gmra.mrb[0].mxu0 %v469
      %v790 = vpop.f32.mrb[0].mxu0
      %v791 = vadd.f32 0.0, %v790
      %v792 = vpop.f32.mrb[0].mxu0
      %v793 = vpop.f32.mrb[0].mxu0
      %v794 = vadd.f32 0.0, %v793
      %v795 = vpop.f32.mrb[0].mxu0
      %796 = vmatprep.mubr.bf16.mxu0 0
      %797 = vmatmul.mubr.bf16.gmra.mrb[0].mxu0 %v470
      %v798 = vpop.f32.mrb[0].mxu0
      %v799 = vadd.f32 0.0, %v798
      %v800 = vpop.f32.mrb[0].mxu0
      %v801 = vpop.f32.mrb[0].mxu0
      %v802 = vadd.f32 0.0, %v801
      %v803 = vpop.f32.mrb[0].mxu0
      %804 = vmatprep.mubr.bf16.mxu0 0
      %805 = vmatmul.mubr.bf16.gmra.mrb[0].mxu0 %v471
      %v806 = vpop.f32.mrb[0].mxu0
      %v807 = vadd.f32 0.0, %v806
      %v808 = vpop.f32.mrb[0].mxu0
      %v809 = vpop.f32.mrb[0].mxu0
      %v810 = vadd.f32 0.0, %v809
      %v811 = vpop.f32.mrb[0].mxu0
      %812 = vmatprep.mubr.bf16.mxu0 0
      %813 = vmatmul.mubr.bf16.gmra.mrb[0].mxu0 %v472
      %v814 = vpop.f32.mrb[0].mxu0
      %v815 = vadd.f32 0.0, %v814
      %v816 = vpop.f32.mrb[0].mxu0
      %v817 = vpop.f32.mrb[0].mxu0
      %v818 = vadd.f32 0.0, %v817
      %v819 = vpop.f32.mrb[0].mxu0
      %820 = vmatprep.mubr.bf16.mxu0 0
      %821 = vmatmul.mubr.bf16.gmra.mrb[0].mxu0 %v473
      %v822 = vpop.f32.mrb[0].mxu0
      %v823 = vadd.f32 0.0, %v822
      %v824 = vpop.f32.mrb[0].mxu0
      %v825 = vpop.f32.mrb[0].mxu0
      %v826 = vadd.f32 0.0, %v825
      %v827 = vpop.f32.mrb[0].mxu0
      %828 = vmatprep.mubr.bf16.mxu0 0
      %829 = vmatmul.mubr.bf16.gmra.mrb[0].mxu0 %v474
      %v830 = vpop.f32.mrb[0].mxu0
      %v831 = vadd.f32 0.0, %v830
      %v832 = vpop.f32.mrb[0].mxu0
      %v833 = vpop.f32.mrb[0].mxu0
      %v834 = vadd.f32 0.0, %v833
      %v835 = vpop.f32.mrb[0].mxu0
      %836 = vmatprep.mubr.bf16.mxu0 0
      %837 = vmatmul.mubr.bf16.gmra.mrb[0].mxu0 %v475
      %v838 = vpop.f32.mrb[0].mxu0
      %v839 = vadd.f32 0.0, %v838
      %v840 = vpop.f32.mrb[0].mxu0
      %v841 = vpop.f32.mrb[0].mxu0
      %v842 = vadd.f32 0.0, %v841
      %v843 = vpop.f32.mrb[0].mxu0
      %844 = vdwg.mxu0
      %vm845 = vcmask 130048
      %846 = vst.msk [vmem:[%s228] sm:$0xff] %vm845, %v591
      %847 = vst.msk [vmem:[%s228 + $0x8] sm:$0xff] %vm845, %v594
      %848 = vst.msk [vmem:[%s228 + $0x10] sm:$0xff] %vm845, %v599
      %849 = vst.msk [vmem:[%s228 + $0x18] sm:$0xff] %vm845, %v602
      %850 = vst.msk [vmem:[%s228 + $0x20] sm:$0xff] %vm845, %v607
      %851 = vst.msk [vmem:[%s228 + $0x28] sm:$0xff] %vm845, %v610
      %852 = vst.msk [vmem:[%s228 + $0x30] sm:$0xff] %vm845, %v615
      %853 = vst.msk [vmem:[%s228 + $0x38] sm:$0xff] %vm845, %v618
      %854 = vst.msk [vmem:[%s228 + $0x40] sm:$0xff] %vm845, %v623
      %855 = vst.msk [vmem:[%s228 + $0x48] sm:$0xff] %vm845, %v626
      %856 = vst.msk [vmem:[%s228 + $0x50] sm:$0xff] %vm845, %v631
      %857 = vst.msk [vmem:[%s228 + $0x58] sm:$0xff] %vm845, %v634
      %858 = vst.msk [vmem:[%s228 + $0x60] sm:$0xff] %vm845, %v639
      %859 = vst.msk [vmem:[%s228 + $0x68] sm:$0xff] %vm845, %v642
      %860 = vst.msk [vmem:[%s228 + $0x70] sm:$0xff] %vm845, %v647
      %861 = vst.msk [vmem:[%s228 + $0x78] sm:$0xff] %vm845, %v650
      %862 = vst.msk [vmem:[%s228 + $0x80] sm:$0xff] %vm845, %v655
      %863 = vst.msk [vmem:[%s228 + $0x88] sm:$0xff] %vm845, %v658
      %864 = vst.msk [vmem:[%s228 + $0x90] sm:$0xff] %vm845, %v663
      %865 = vst.msk [vmem:[%s228 + $0x98] sm:$0xff] %vm845, %v666
      %866 = vst.msk [vmem:[%s228 + $0xa0] sm:$0xff] %vm845, %v671
      %867 = vst.msk [vmem:[%s228 + $0xa8] sm:$0xff] %vm845, %v674
      %868 = vst.msk [vmem:[%s228 + $0xb0] sm:$0xff] %vm845, %v679
      %869 = vst.msk [vmem:[%s228 + $0xb8] sm:$0xff] %vm845, %v682
      %870 = vst.msk [vmem:[%s228 + $0xc0] sm:$0xff] %vm845, %v687
      %871 = vst.msk [vmem:[%s228 + $0xc8] sm:$0xff] %vm845, %v690
      %872 = vst.msk [vmem:[%s228 + $0xd0] sm:$0xff] %vm845, %v695
      %873 = vst.msk [vmem:[%s228 + $0xd8] sm:$0xff] %vm845, %v698
      %874 = vst.msk [vmem:[%s228 + $0xe0] sm:$0xff] %vm845, %v703
      %875 = vst.msk [vmem:[%s228 + $0xe8] sm:$0xff] %vm845, %v706
      %876 = vst.msk [vmem:[%s228 + $0xf0] sm:$0xff] %vm845, %v711
      %877 = vst.msk [vmem:[%s228 + $0xf8] sm:$0xff] %vm845, %v714
      %878 = vst.msk [vmem:[%s228 + $0x100] sm:$0xff] %vm845, %v719
      %879 = vst.msk [vmem:[%s228 + $0x108] sm:$0xff] %vm845, %v722
      %880 = vst.msk [vmem:[%s228 + $0x110] sm:$0xff] %vm845, %v727
      %881 = vst.msk [vmem:[%s228 + $0x118] sm:$0xff] %vm845, %v730
      %882 = vst.msk [vmem:[%s228 + $0x120] sm:$0xff] %vm845, %v735
      %883 = vst.msk [vmem:[%s228 + $0x128] sm:$0xff] %vm845, %v738
      %884 = vst.msk [vmem:[%s228 + $0x130] sm:$0xff] %vm845, %v743
      %885 = vst.msk [vmem:[%s228 + $0x138] sm:$0xff] %vm845, %v746
      %886 = vst.msk [vmem:[%s228 + $0x140] sm:$0xff] %vm845, %v751
      %887 = vst.msk [vmem:[%s228 + $0x148] sm:$0xff] %vm845, %v754
      %888 = vst.msk [vmem:[%s228 + $0x150] sm:$0xff] %vm845, %v759
      %889 = vst.msk [vmem:[%s228 + $0x158] sm:$0xff] %vm845, %v762
      %890 = vst.msk [vmem:[%s228 + $0x160] sm:$0xff] %vm845, %v767
      %891 = vst.msk [vmem:[%s228 + $0x168] sm:$0xff] %vm845, %v770
      %892 = vst.msk [vmem:[%s228 + $0x170] sm:$0xff] %vm845, %v775
      %893 = vst.msk [vmem:[%s228 + $0x178] sm:$0xff] %vm845, %v778
      %894 = vst.msk [vmem:[%s228 + $0x180] sm:$0xff] %vm845, %v783
      %895 = vst.msk [vmem:[%s228 + $0x188] sm:$0xff] %vm845, %v786
      %896 = vst.msk [vmem:[%s228 + $0x190] sm:$0xff] %vm845, %v791
      %897 = vst.msk [vmem:[%s228 + $0x198] sm:$0xff] %vm845, %v794
      %898 = vst.msk [vmem:[%s228 + $0x1a0] sm:$0xff] %vm845, %v799
      %899 = vst.msk [vmem:[%s228 + $0x1a8] sm:$0xff] %vm845, %v802
      %900 = vst.msk [vmem:[%s228 + $0x1b0] sm:$0xff] %vm845, %v807
      %901 = vst.msk [vmem:[%s228 + $0x1b8] sm:$0xff] %vm845, %v810
      %902 = vst.msk [vmem:[%s228 + $0x1c0] sm:$0xff] %vm845, %v815
      %903 = vst.msk [vmem:[%s228 + $0x1c8] sm:$0xff] %vm845, %v818
      %904 = vst.msk [vmem:[%s228 + $0x1d0] sm:$0xff] %vm845, %v823
      %905 = vst.msk [vmem:[%s228 + $0x1d8] sm:$0xff] %vm845, %v826
      %906 = vst.msk [vmem:[%s228 + $0x1e0] sm:$0xff] %vm845, %v831
      %907 = vst.msk [vmem:[%s228 + $0x1e8] sm:$0xff] %vm845, %v834
      %908 = vst.msk [vmem:[%s228 + $0x1f0] sm:$0xff] %vm845, %v839
      %909 = vst.msk [vmem:[%s228 + $0x1f8] sm:$0xff] %vm845, %v842
      %v910 = vsel %vm845, %v591, 0.0
      %v911 = vsel %vm845, %v594, 0.0
      %v912 = vadd.f32 %v910, %v911
      %v913 = vsel %vm845, %v599, 0.0
      %v914 = vadd.f32 %v912, %v913
      %v915 = vsel %vm845, %v602, 0.0
      %v916 = vadd.f32 %v914, %v915
      %v917 = vsel %vm845, %v607, 0.0
      %v918 = vadd.f32 %v916, %v917
      %v919 = vsel %vm845, %v610, 0.0
      %v920 = vadd.f32 %v918, %v919
      %v921 = vsel %vm845, %v615, 0.0
      %v922 = vadd.f32 %v920, %v921
      %v923 = vsel %vm845, %v618, 0.0
      %v924 = vadd.f32 %v922, %v923
      %v925 = vsel %vm845, %v623, 0.0
      %v926 = vadd.f32 %v924, %v925
      %v927 = vsel %vm845, %v626, 0.0
      %v928 = vadd.f32 %v926, %v927
      %v929 = vsel %vm845, %v631, 0.0
      %v930 = vadd.f32 %v928, %v929
      %v931 = vsel %vm845, %v634, 0.0
      %v932 = vadd.f32 %v930, %v931
      %v933 = vsel %vm845, %v639, 0.0
      %v934 = vadd.f32 %v932, %v933
      %v935 = vsel %vm845, %v642, 0.0
      %v936 = vadd.f32 %v934, %v935
      %v937 = vsel %vm845, %v647, 0.0
      %v938 = vadd.f32 %v936, %v937
      %v939 = vsel %vm845, %v650, 0.0
      %v940 = vadd.f32 %v938, %v939
      %v941 = vsel %vm845, %v655, 0.0
      %v942 = vadd.f32 %v940, %v941
      %v943 = vsel %vm845, %v658, 0.0
      %v944 = vadd.f32 %v942, %v943
      %v945 = vsel %vm845, %v663, 0.0
      %v946 = vadd.f32 %v944, %v945
      %v947 = vsel %vm845, %v666, 0.0
      %v948 = vadd.f32 %v946, %v947
      %v949 = vsel %vm845, %v671, 0.0
      %v950 = vadd.f32 %v948, %v949
      %v951 = vsel %vm845, %v674, 0.0
      %v952 = vadd.f32 %v950, %v951
      %v953 = vsel %vm845, %v679, 0.0
      %v954 = vadd.f32 %v952, %v953
      %v955 = vsel %vm845, %v682, 0.0
      %v956 = vadd.f32 %v954, %v955
      %v957 = vsel %vm845, %v687, 0.0
      %v958 = vadd.f32 %v956, %v957
      %v959 = vsel %vm845, %v690, 0.0
      %v960 = vadd.f32 %v958, %v959
      %v961 = vsel %vm845, %v695, 0.0
      %v962 = vadd.f32 %v960, %v961
      %v963 = vsel %vm845, %v698, 0.0
      %v964 = vadd.f32 %v962, %v963
      %v965 = vsel %vm845, %v703, 0.0
      %v966 = vadd.f32 %v964, %v965
      %v967 = vsel %vm845, %v706, 0.0
      %v968 = vadd.f32 %v966, %v967
      %v969 = vsel %vm845, %v711, 0.0
      %v970 = vadd.f32 %v968, %v969
      %v971 = vsel %vm845, %v714, 0.0
      %v972 = vadd.f32 %v970, %v971
      %v973 = vsel %vm845, %v719, 0.0
      %v974 = vadd.f32 %v972, %v973
      %v975 = vsel %vm845, %v722, 0.0
      %v976 = vadd.f32 %v974, %v975
      %v977 = vsel %vm845, %v727, 0.0
      %v978 = vadd.f32 %v976, %v977
      %v979 = vsel %vm845, %v730, 0.0
      %v980 = vadd.f32 %v978, %v979
      %v981 = vsel %vm845, %v735, 0.0
      %v982 = vadd.f32 %v980, %v981
      %v983 = vsel %vm845, %v738, 0.0
      %v984 = vadd.f32 %v982, %v983
      %v985 = vsel %vm845, %v743, 0.0
      %v986 = vadd.f32 %v984, %v985
      %v987 = vsel %vm845, %v746, 0.0
      %v988 = vadd.f32 %v986, %v987
      %v989 = vsel %vm845, %v751, 0.0
      %v990 = vadd.f32 %v988, %v989
      %v991 = vsel %vm845, %v754, 0.0
      %v992 = vadd.f32 %v990, %v991
      %v993 = vsel %vm845, %v759, 0.0
      %v994 = vadd.f32 %v992, %v993
      %v995 = vsel %vm845, %v762, 0.0
      %v996 = vadd.f32 %v994, %v995
      %v997 = vsel %vm845, %v767, 0.0
      %v998 = vadd.f32 %v996, %v997
      %v999 = vsel %vm845, %v770, 0.0
      %v1000 = vadd.f32 %v998, %v999
      %v1001 = vsel %vm845, %v775, 0.0
      %v1002 = vadd.f32 %v1000, %v1001
      %v1003 = vsel %vm845, %v778, 0.0
      %v1004 = vadd.f32 %v1002, %v1003
      %v1005 = vsel %vm845, %v783, 0.0
      %v1006 = vadd.f32 %v1004, %v1005
      %v1007 = vsel %vm845, %v786, 0.0
      %v1008 = vadd.f32 %v1006, %v1007
      %v1009 = vsel %vm845, %v791, 0.0
      %v1010 = vadd.f32 %v1008, %v1009
      %v1011 = vsel %vm845, %v794, 0.0
      %v1012 = vadd.f32 %v1010, %v1011
      %v1013 = vsel %vm845, %v799, 0.0
      %v1014 = vadd.f32 %v1012, %v1013
      %v1015 = vsel %vm845, %v802, 0.0
      %v1016 = vadd.f32 %v1014, %v1015
      %v1017 = vsel %vm845, %v807, 0.0
      %v1018 = vadd.f32 %v1016, %v1017
      %v1019 = vsel %vm845, %v810, 0.0
      %v1020 = vadd.f32 %v1018, %v1019
      %v1021 = vsel %vm845, %v815, 0.0
      %v1022 = vadd.f32 %v1020, %v1021
      %v1023 = vsel %vm845, %v818, 0.0
      %v1024 = vadd.f32 %v1022, %v1023
      %v1025 = vsel %vm845, %v823, 0.0
      %v1026 = vadd.f32 %v1024, %v1025
      %v1027 = vsel %vm845, %v826, 0.0
      %v1028 = vadd.f32 %v1026, %v1027
      %v1029 = vsel %vm845, %v831, 0.0
      %v1030 = vadd.f32 %v1028, %v1029
      %v1031 = vsel %vm845, %v834, 0.0
      %v1032 = vadd.f32 %v1030, %v1031
      %v1033 = vsel %vm845, %v839, 0.0
      %v1034 = vadd.f32 %v1032, %v1033
      %v1035 = vsel %vm845, %v842, 0.0
      %v1036 = vadd.f32 %v1034, %v1035
      %v1037 = vrot.slane %v1036, 4
      %v1038 = vadd.f32 %v1036, %v1037
      %v1039 = vrot.slane %v1038, 2
      %v1040 = vadd.f32 %v1038, %v1039
      %v1041 = vrot.slane %v1040, 1
      %v1042 = vadd.f32 %v1040, %v1041
      %vm1043 = vcmask 122880
      %1044 = vst.msk [vmem:[%s231] sm:$0x1] %vm1043, %v1042
      %v1045 = vmul.f32 %v591, %v591
      %v1046 = vmul.f32 %v594, %v594
      %v1047 = vmul.f32 %v599, %v599
      %v1048 = vmul.f32 %v602, %v602
      %v1049 = vmul.f32 %v607, %v607
      %v1050 = vmul.f32 %v610, %v610
      %v1051 = vmul.f32 %v615, %v615
      %v1052 = vmul.f32 %v618, %v618
      %v1053 = vmul.f32 %v623, %v623
      %v1054 = vmul.f32 %v626, %v626
      %v1055 = vmul.f32 %v631, %v631
      %v1056 = vmul.f32 %v634, %v634
      %v1057 = vmul.f32 %v639, %v639
      %v1058 = vmul.f32 %v642, %v642
      %v1059 = vmul.f32 %v647, %v647
      %v1060 = vmul.f32 %v650, %v650
      %v1061 = vmul.f32 %v655, %v655
      %v1062 = vmul.f32 %v658, %v658
      %v1063 = vmul.f32 %v663, %v663
      %v1064 = vmul.f32 %v666, %v666
      %v1065 = vmul.f32 %v671, %v671
      %v1066 = vmul.f32 %v674, %v674
      %v1067 = vmul.f32 %v679, %v679
      %v1068 = vmul.f32 %v682, %v682
      %v1069 = vmul.f32 %v687, %v687
      %v1070 = vmul.f32 %v690, %v690
      %v1071 = vmul.f32 %v695, %v695
      %v1072 = vmul.f32 %v698, %v698
      %v1073 = vmul.f32 %v703, %v703
      %v1074 = vmul.f32 %v706, %v706
      %v1075 = vmul.f32 %v711, %v711
      %v1076 = vmul.f32 %v714, %v714
      %v1077 = vmul.f32 %v719, %v719
      %v1078 = vmul.f32 %v722, %v722
      %v1079 = vmul.f32 %v727, %v727
      %v1080 = vmul.f32 %v730, %v730
      %v1081 = vmul.f32 %v735, %v735
      %v1082 = vmul.f32 %v738, %v738
      %v1083 = vmul.f32 %v743, %v743
      %v1084 = vmul.f32 %v746, %v746
      %v1085 = vmul.f32 %v751, %v751
      %v1086 = vmul.f32 %v754, %v754
      %v1087 = vmul.f32 %v759, %v759
      %v1088 = vmul.f32 %v762, %v762
      %v1089 = vmul.f32 %v767, %v767
      %v1090 = vmul.f32 %v770, %v770
      %v1091 = vmul.f32 %v775, %v775
      %v1092 = vmul.f32 %v778, %v778
      %v1093 = vmul.f32 %v783, %v783
      %v1094 = vmul.f32 %v786, %v786
      %v1095 = vmul.f32 %v791, %v791
      %v1096 = vmul.f32 %v794, %v794
      %v1097 = vmul.f32 %v799, %v799
      %v1098 = vmul.f32 %v802, %v802
      %v1099 = vmul.f32 %v807, %v807
      %v1100 = vmul.f32 %v810, %v810
      %v1101 = vmul.f32 %v815, %v815
      %v1102 = vmul.f32 %v818, %v818
      %v1103 = vmul.f32 %v823, %v823
      %v1104 = vmul.f32 %v826, %v826
      %v1105 = vmul.f32 %v831, %v831
      %v1106 = vmul.f32 %v834, %v834
      %v1107 = vmul.f32 %v839, %v839
      %v1108 = vmul.f32 %v842, %v842
      %v1109 = vsel %vm845, %v1045, 0.0
      %v1110 = vsel %vm845, %v1046, 0.0
      %v1111 = vadd.f32 %v1109, %v1110
      %v1112 = vsel %vm845, %v1047, 0.0
      %v1113 = vadd.f32 %v1111, %v1112
      %v1114 = vsel %vm845, %v1048, 0.0
      %v1115 = vadd.f32 %v1113, %v1114
      %v1116 = vsel %vm845, %v1049, 0.0
      %v1117 = vadd.f32 %v1115, %v1116
      %v1118 = vsel %vm845, %v1050, 0.0
      %v1119 = vadd.f32 %v1117, %v1118
      %v1120 = vsel %vm845, %v1051, 0.0
      %v1121 = vadd.f32 %v1119, %v1120
      %v1122 = vsel %vm845, %v1052, 0.0
      %v1123 = vadd.f32 %v1121, %v1122
      %v1124 = vsel %vm845, %v1053, 0.0
      %v1125 = vadd.f32 %v1123, %v1124
      %v1126 = vsel %vm845, %v1054, 0.0
      %v1127 = vadd.f32 %v1125, %v1126
      %v1128 = vsel %vm845, %v1055, 0.0
      %v1129 = vadd.f32 %v1127, %v1128
      %v1130 = vsel %vm845, %v1056, 0.0
      %v1131 = vadd.f32 %v1129, %v1130
      %v1132 = vsel %vm845, %v1057, 0.0
      %v1133 = vadd.f32 %v1131, %v1132
      %v1134 = vsel %vm845, %v1058, 0.0
      %v1135 = vadd.f32 %v1133, %v1134
      %v1136 = vsel %vm845, %v1059, 0.0
      %v1137 = vadd.f32 %v1135, %v1136
      %v1138 = vsel %vm845, %v1060, 0.0
      %v1139 = vadd.f32 %v1137, %v1138
      %v1140 = vsel %vm845, %v1061, 0.0
      %v1141 = vadd.f32 %v1139, %v1140
      %v1142 = vsel %vm845, %v1062, 0.0
      %v1143 = vadd.f32 %v1141, %v1142
      %v1144 = vsel %vm845, %v1063, 0.0
      %v1145 = vadd.f32 %v1143, %v1144
      %v1146 = vsel %vm845, %v1064, 0.0
      %v1147 = vadd.f32 %v1145, %v1146
      %v1148 = vsel %vm845, %v1065, 0.0
      %v1149 = vadd.f32 %v1147, %v1148
      %v1150 = vsel %vm845, %v1066, 0.0
      %v1151 = vadd.f32 %v1149, %v1150
      %v1152 = vsel %vm845, %v1067, 0.0
      %v1153 = vadd.f32 %v1151, %v1152
      %v1154 = vsel %vm845, %v1068, 0.0
      %v1155 = vadd.f32 %v1153, %v1154
      %v1156 = vsel %vm845, %v1069, 0.0
      %v1157 = vadd.f32 %v1155, %v1156
      %v1158 = vsel %vm845, %v1070, 0.0
      %v1159 = vadd.f32 %v1157, %v1158
      %v1160 = vsel %vm845, %v1071, 0.0
      %v1161 = vadd.f32 %v1159, %v1160
      %v1162 = vsel %vm845, %v1072, 0.0
      %v1163 = vadd.f32 %v1161, %v1162
      %v1164 = vsel %vm845, %v1073, 0.0
      %v1165 = vadd.f32 %v1163, %v1164
      %v1166 = vsel %vm845, %v1074, 0.0
      %v1167 = vadd.f32 %v1165, %v1166
      %v1168 = vsel %vm845, %v1075, 0.0
      %v1169 = vadd.f32 %v1167, %v1168
      %v1170 = vsel %vm845, %v1076, 0.0
      %v1171 = vadd.f32 %v1169, %v1170
      %v1172 = vsel %vm845, %v1077, 0.0
      %v1173 = vadd.f32 %v1171, %v1172
      %v1174 = vsel %vm845, %v1078, 0.0
      %v1175 = vadd.f32 %v1173, %v1174
      %v1176 = vsel %vm845, %v1079, 0.0
      %v1177 = vadd.f32 %v1175, %v1176
      %v1178 = vsel %vm845, %v1080, 0.0
      %v1179 = vadd.f32 %v1177, %v1178
      %v1180 = vsel %vm845, %v1081, 0.0
      %v1181 = vadd.f32 %v1179, %v1180
      %v1182 = vsel %vm845, %v1082, 0.0
      %v1183 = vadd.f32 %v1181, %v1182
      %v1184 = vsel %vm845, %v1083, 0.0
      %v1185 = vadd.f32 %v1183, %v1184
      %v1186 = vsel %vm845, %v1084, 0.0
      %v1187 = vadd.f32 %v1185, %v1186
      %v1188 = vsel %vm845, %v1085, 0.0
      %v1189 = vadd.f32 %v1187, %v1188
      %v1190 = vsel %vm845, %v1086, 0.0
      %v1191 = vadd.f32 %v1189, %v1190
      %v1192 = vsel %vm845, %v1087, 0.0
      %v1193 = vadd.f32 %v1191, %v1192
      %v1194 = vsel %vm845, %v1088, 0.0
      %v1195 = vadd.f32 %v1193, %v1194
      %v1196 = vsel %vm845, %v1089, 0.0
      %v1197 = vadd.f32 %v1195, %v1196
      %v1198 = vsel %vm845, %v1090, 0.0
      %v1199 = vadd.f32 %v1197, %v1198
      %v1200 = vsel %vm845, %v1091, 0.0
      %v1201 = vadd.f32 %v1199, %v1200
      %v1202 = vsel %vm845, %v1092, 0.0
      %v1203 = vadd.f32 %v1201, %v1202
      %v1204 = vsel %vm845, %v1093, 0.0
      %v1205 = vadd.f32 %v1203, %v1204
      %v1206 = vsel %vm845, %v1094, 0.0
      %v1207 = vadd.f32 %v1205, %v1206
      %v1208 = vsel %vm845, %v1095, 0.0
      %v1209 = vadd.f32 %v1207, %v1208
      %v1210 = vsel %vm845, %v1096, 0.0
      %v1211 = vadd.f32 %v1209, %v1210
      %v1212 = vsel %vm845, %v1097, 0.0
      %v1213 = vadd.f32 %v1211, %v1212
      %v1214 = vsel %vm845, %v1098, 0.0
      %v1215 = vadd.f32 %v1213, %v1214
      %v1216 = vsel %vm845, %v1099, 0.0
      %v1217 = vadd.f32 %v1215, %v1216
      %v1218 = vsel %vm845, %v1100, 0.0
      %v1219 = vadd.f32 %v1217, %v1218
      %v1220 = vsel %vm845, %v1101, 0.0
      %v1221 = vadd.f32 %v1219, %v1220
      %v1222 = vsel %vm845, %v1102, 0.0
      %v1223 = vadd.f32 %v1221, %v1222
      %v1224 = vsel %vm845, %v1103, 0.0
      %v1225 = vadd.f32 %v1223, %v1224
      %v1226 = vsel %vm845, %v1104, 0.0
      %v1227 = vadd.f32 %v1225, %v1226
      %v1228 = vsel %vm845, %v1105, 0.0
      %v1229 = vadd.f32 %v1227, %v1228
      %v1230 = vsel %vm845, %v1106, 0.0
      %v1231 = vadd.f32 %v1229, %v1230
      %v1232 = vsel %vm845, %v1107, 0.0
      %v1233 = vadd.f32 %v1231, %v1232
      %v1234 = vsel %vm845, %v1108, 0.0
      %v1235 = vadd.f32 %v1233, %v1234
      %v1236 = vrot.slane %v1235, 4
      %v1237 = vadd.f32 %v1235, %v1236
      %v1238 = vrot.slane %v1237, 2
      %v1239 = vadd.f32 %v1237, %v1238
      %v1240 = vrot.slane %v1239, 1
      %v1241 = vadd.f32 %v1239, %v1240
      %1242 = vst.msk [vmem:[%s234] sm:$0x1] %vm1043, %v1241
      %p1243 = scmp.lt.s32.totalorder %s16, 3
      %s1244 = scalar_select %p1243, %s16, 3
      %s1245 = smul.addr %s1244, 64
      %s1246 = smul.addr %s1245, 8
      %s1247 = scalar_lea.vmem %s2, %s1246
      %p1248 = scmp.lt.s32.totalorder %s16, 3
      %s1249 = scalar_select %p1248, %s16, 3
      %s1250 = scalar_lea.vmem %s3, %s1249
      %p1251 = scmp.lt.s32.totalorder %s16, 3
      %s1252 = scalar_select %p1251, %s16, 3
      %s1253 = scalar_lea.vmem %s4, %s1252
      // Predicated region
      $region29: #{netg_forward.15} parent=27 // pred_check
        %p1254 = pneg %p86
      $region30: #{netg_forward.15} parent=27 // pred_check_branch
        %1256 = sbr.rel (%p1254) target = $region32
      $region31: #{netg_forward.15} parent=27 // pred_region
        _
      $region32: #{netg_forward.15} parent=27 // pred_fallthru
        _
      // Predicated region
      $region33: #{netg_forward.15} parent=27 // pred_check
        %p1257 = pneg %p112
      $region34: #{netg_forward.15} parent=27 // pred_check_branch
        %1259 = sbr.rel (%p1257) target = $region36
      $region35: #{netg_forward.15} parent=27 // pred_region
        _
      $region36: #{netg_forward.15} parent=27 // pred_fallthru
        _
      // Predicated region
      $region37: #{netg_forward.15} parent=27 // pred_check
        %p1260 = pneg %p138
      $region38: #{netg_forward.15} parent=27 // pred_check_branch
        %1262 = sbr.rel (%p1260) target = $region40
      $region39: #{netg_forward.15} parent=27 // pred_region
        _
      $region40: #{netg_forward.15} parent=27 // pred_fallthru
        _
    $region28: #{netg_forward.15} parent=5 // pred_fallthru
      _
    %p1263 = scmp.le.s32.totalorder 2, %s11
    // Predicated region
    $region41: #{netg_forward.15} parent=5 // pred_check
      %p1264 = pneg %p1263
    $region42: #{netg_forward.15} parent=5 // pred_check_branch
      %1266 = sbr.rel (%p1264) target = $region44
    $region43: #{netg_forward.15} parent=5 // pred_region
      %s1267 = ssub.s32 %s11, 2
      // Predicated region
      $region45: #{netg_forward.15} parent=43 // pred_check
        %p1268 = pneg %p92
      $region46: #{netg_forward.15} parent=43 // pred_check_branch
        %1270 = sbr.rel (%p1268) target = $region48
      $region47: #{netg_forward.15} parent=43 // pred_region
        %p1271 = scmp.lt.s32.totalorder %s17, 3
        %s1272 = scalar_select %p1271, %s17, 3
        %s1273 = smul.addr %s1272, 64
        %s1274 = smul.addr %s1273, 8
        %s1275 = scalar_lea.vmem %s2, %s1274
      $region48: #{netg_forward.15} parent=43 // pred_fallthru
        _
      // Predicated region
      $region49: #{netg_forward.15} parent=43 // pred_check
        %p1276 = pneg %p118
      $region50: #{netg_forward.15} parent=43 // pred_check_branch
        %1278 = sbr.rel (%p1276) target = $region52
      $region51: #{netg_forward.15} parent=43 // pred_region
        %p1279 = scmp.lt.s32.totalorder %s17, 3
        %s1280 = scalar_select %p1279, %s17, 3
        %s1281 = scalar_lea.vmem %s3, %s1280
      $region52: #{netg_forward.15} parent=43 // pred_fallthru
        _
      // Predicated region
      $region53: #{netg_forward.15} parent=43 // pred_check
        %p1282 = pneg %p144
      $region54: #{netg_forward.15} parent=43 // pred_check_branch
        %1284 = sbr.rel (%p1282) target = $region56
      $region55: #{netg_forward.15} parent=43 // pred_region
        %p1285 = scmp.lt.s32.totalorder %s17, 3
        %s1286 = scalar_select %p1285, %s17, 3
        %s1287 = scalar_lea.vmem %s4, %s1286
      $region56: #{netg_forward.15} parent=43 // pred_fallthru
        _
    $region44: #{netg_forward.15} parent=5 // pred_fallthru
      _
  $region6: #{netg_forward.15} parent=0 // loop_footer
    %s15 = sadd.s32 1, %s11
  $region7: #{netg_forward.15} parent=0 // loop_footer_branch
    %10 = sbr.rel target = $region3
  $region8: #{netg_forward.15} parent=0 // loop_exit
    _

// kernel: tile.78
$region0: #{tile.78}
  #allocation0 [shape = 's32[1]{0}', space=sflag, size = 0x4, scoped, tag = 'scoped memory for tile.78']
  %s0 = inlined_call_operand.vmem [shape: f32[16], index: 0, kind: input, shape index: {}]
  %s1 = inlined_call_operand.vmem [shape: f32[16,16], index: 1, kind: output, shape index: {}]
  // Predicated region
  $region2: #{tile.78} parent=0 // pred_check
    _
  $region3: #{tile.78} parent=0 // pred_check_branch
    %3 = sbr.rel (0) target = $region5
  $region4: #{tile.78} parent=0 // pred_region
    _
  $region5: #{tile.78} parent=0 // pred_fallthru
    _
  %v4 = vld [vmem:[%s0] ss:$0 sm:$0xff]
  %5 = vst [vmem:[%s1] sm:$0xff] %v4
  %s6 = scalar_lea.vmem %s1, 8
  %7 = vst [vmem:[%s6] sm:$0xff] %v4

// kernel: tile.79
$region0: #{tile.79}
  %s0 = inlined_call_operand.vmem [shape: f32[16,16], index: 0, kind: input, shape index: {}]
  %s1 = inlined_call_operand.vmem [shape: f32[1,256], index: 1, kind: output, shape index: {}]
  $region1: #{tile.79} parent=0
    #allocation0 [shape = 'u8[8192]{0}', space=vmem, size = 0x2000, scoped, tag = 'scoped mem for output reshape']
    %s2 = smov 3
    %v3 = vld [vmem:[%s0] ss:$8 sm:%s2]
    %vm4 = vcmask 130048
    %5 = vst.msk [vmem:[#allocation0] ss:$8 sm:$0x3] %vm4, %v3
    %s6 = scalar_lea.vmem %s0, 7
    %s7 = smov 3
    %v8 = vld [vmem:[%s6] ss:$8 sm:%s7]
    %9 = vrot.lane.b32.xlu0 %v8, 112
    %v10 = vpop.permute.xlu0 %9
    %vm11 = vcmask 1048448
    %12 = vst.msk [vmem:[#allocation0] ss:$8 sm:$0x3] %vm11, %v10
    %s13 = scalar_lea.vmem %s0, 6
    %s14 = smov 3
    %v15 = vld [vmem:[%s13] ss:$8 sm:%s14]
    %16 = vrot.lane.b32.xlu0 %v15, 96
    %v17 = vpop.permute.xlu0 %16
    %vm18 = vcmask 917248
    %19 = vst.msk [vmem:[#allocation0] ss:$8 sm:$0x3] %vm18, %v17
    %s20 = scalar_lea.vmem %s0, 5
    %s21 = smov 3
    %v22 = vld [vmem:[%s20] ss:$8 sm:%s21]
    %23 = vrot.lane.b32.xlu0 %v22, 80
    %v24 = vpop.permute.xlu0 %23
    %vm25 = vcmask 786048
    %26 = vst.msk [vmem:[#allocation0] ss:$8 sm:$0x3] %vm25, %v24
    %s27 = scalar_lea.vmem %s0, 4
    %s28 = smov 3
    %v29 = vld [vmem:[%s27] ss:$8 sm:%s28]
    %30 = vrot.lane.b32.xlu0 %v29, 64
    %v31 = vpop.permute.xlu0 %30
    %vm32 = vcmask 654848
    %33 = vst.msk [vmem:[#allocation0] ss:$8 sm:$0x3] %vm32, %v31
    %s34 = scalar_lea.vmem %s0, 3
    %s35 = smov 3
    %v36 = vld [vmem:[%s34] ss:$8 sm:%s35]
    %37 = vrot.lane.b32.xlu0 %v36, 48
    %v38 = vpop.permute.xlu0 %37
    %vm39 = vcmask 523648
    %40 = vst.msk [vmem:[#allocation0] ss:$8 sm:$0x3] %vm39, %v38
    %s41 = scalar_lea.vmem %s0, 2
    %s42 = smov 3
    %v43 = vld [vmem:[%s41] ss:$8 sm:%s42]
    %44 = vrot.lane.b32.xlu0 %v43, 32
    %v45 = vpop.permute.xlu0 %44
    %vm46 = vcmask 392448
    %47 = vst.msk [vmem:[#allocation0] ss:$8 sm:$0x3] %vm46, %v45
    %s48 = scalar_lea.vmem %s0, 1
    %s49 = smov 3
    %v50 = vld [vmem:[%s48] ss:$8 sm:%s49]
    %51 = vrot.lane.b32.xlu0 %v50, 16
    %v52 = vpop.permute.xlu0 %51
    %vm53 = vcmask 261248
    %54 = vst.msk [vmem:[#allocation0] ss:$8 sm:$0x3] %vm53, %v52
    %s56 = sshllo.u32 0, 1
    %v58 = vld [vmem:[#allocation0] sm:%s56]
    %s59 = sshllo.u32 0, 1
    %60 = vst [vmem:[%s1] sm:%s59] %v58
    %s61 = scalar_lea.vmem [#allocation0], 8
    %v62 = vld [vmem:[%s61] sm:%s56]
    %s63 = sshllo.u32 0, 1
    %s64 = scalar_lea.vmem %s1, 1
    %65 = vst [vmem:[%s64] sm:%s63] %v62

// kernel: netg_forward.16
$region0: #{netg_forward.16}
  #allocation0 [shape = 'u32[]', space=smem, size = 0x4, offset = 0x4, fixed_abs, tag = 'smem constant byte address 0x4 - core index']
  #allocation1 [shape = 'u32[144,128]{1,0:T(1,128)}', space=vmem, size = 0x12000, scoped, tag = 'internal scratch']
  %s0 = inlined_call_operand.vmem [shape: f32[128,256], index: 0, kind: input, shape index: {}]
  %s1 = inlined_call_operand.vmem [shape: f32[1,256], index: 1, kind: input, shape index: {}]
  %s2 = inlined_call_operand.vmem [shape: f32[1,256], index: 2, kind: input, shape index: {}]
  %s3 = inlined_call_operand.vmem [shape: f32[128,256], index: 3, kind: output, shape index: {}]
  %s4 = sld [smem:[#allocation0]]
  $region22: #{netg_forward.16} parent=0
    _
  %s6 = ssub.s32 1, %s4
  %s7 = scalar_select 0, %s6, %s4
  // Predicated region
  $region2: #{netg_forward.16} parent=0 // pred_check
    _
  $region3: #{netg_forward.16} parent=0 // pred_check_branch
    %9 = sbr.rel (0) target = $region5
  $region4: #{netg_forward.16} parent=0 // pred_region
    _
  $region5: #{netg_forward.16} parent=0 // pred_fallthru
    _
  // Predicated region
  $region6: #{netg_forward.16} parent=0 // pred_check
    _
  $region7: #{netg_forward.16} parent=0 // pred_check_branch
    %11 = sbr.rel (0) target = $region9
  $region8: #{netg_forward.16} parent=0 // pred_region
    _
  $region9: #{netg_forward.16} parent=0 // pred_fallthru
    _
  // Predicated region
  $region10: #{netg_forward.16} parent=0 // pred_check
    _
  $region11: #{netg_forward.16} parent=0 // pred_check_branch
    %13 = sbr.rel (0) target = $region13
  $region12: #{netg_forward.16} parent=0 // pred_region
    _
  $region13: #{netg_forward.16} parent=0 // pred_fallthru
    _
  %v14 = vld [vmem:[%s0] sm:$0xff]
  %v15 = vld [vmem:[%s0 + $0x8] sm:$0xff]
  %v16 = vld [vmem:[%s0 + $0x10] sm:$0xff]
  %v17 = vld [vmem:[%s0 + $0x18] sm:$0xff]
  %v18 = vld [vmem:[%s0 + $0x20] sm:$0xff]
  %v19 = vld [vmem:[%s0 + $0x28] sm:$0xff]
  %v20 = vld [vmem:[%s0 + $0x30] sm:$0xff]
  %v21 = vld [vmem:[%s0 + $0x38] sm:$0xff]
  %v22 = vld [vmem:[%s0 + $0x40] sm:$0xff]
  %v23 = vld [vmem:[%s0 + $0x48] sm:$0xff]
  %v24 = vld [vmem:[%s0 + $0x50] sm:$0xff]
  %v25 = vld [vmem:[%s0 + $0x58] sm:$0xff]
  %v26 = vld [vmem:[%s0 + $0x60] sm:$0xff]
  %v27 = vld [vmem:[%s0 + $0x68] sm:$0xff]
  %v28 = vld [vmem:[%s0 + $0x70] sm:$0xff]
  %v29 = vld [vmem:[%s0 + $0x78] sm:$0xff]
  %v30 = vld [vmem:[%s0 + $0x80] sm:$0xff]
  %v31 = vld [vmem:[%s0 + $0x88] sm:$0xff]
  %v32 = vld [vmem:[%s0 + $0x90] sm:$0xff]
  %v33 = vld [vmem:[%s0 + $0x98] sm:$0xff]
  %v34 = vld [vmem:[%s0 + $0xa0] sm:$0xff]
  %v35 = vld [vmem:[%s0 + $0xa8] sm:$0xff]
  %v36 = vld [vmem:[%s0 + $0xb0] sm:$0xff]
  %v37 = vld [vmem:[%s0 + $0xb8] sm:$0xff]
  %v38 = vld [vmem:[%s0 + $0xc0] sm:$0xff]
  %v39 = vld [vmem:[%s0 + $0xc8] sm:$0xff]
  %v40 = vld [vmem:[%s0 + $0xd0] sm:$0xff]
  %v41 = vld [vmem:[%s0 + $0xd8] sm:$0xff]
  %v42 = vld [vmem:[%s0 + $0xe0] sm:$0xff]
  %v43 = vld [vmem:[%s0 + $0xe8] sm:$0xff]
  %v44 = vld [vmem:[%s0 + $0xf0] sm:$0xff]
  %v45 = vld [vmem:[%s0 + $0xf8] sm:$0xff]
  %v46 = vld [vmem:[%s1] sm:$0x3]
  %v48 = vlaneseq
  %v49 = vshrl.u32 %v48, 7
  %v50 = vsub.s32 0, %v49
  %v51 = vrot.slane %v46, %v50
  %v52 = vlaneseq
  %v53 = vshrl.u32 %v52, 7
  %v54 = vsub.s32 1, %v53
  %v55 = vrot.slane %v46, %v54
  %v58 = vmul.f32 %v14, %v51
  %v59 = vmul.f32 %v15, %v55
  %v60 = vmul.f32 %v16, %v51
  %v61 = vmul.f32 %v17, %v55
  %v62 = vmul.f32 %v18, %v51
  %v63 = vmul.f32 %v19, %v55
  %v64 = vmul.f32 %v20, %v51
  %v65 = vmul.f32 %v21, %v55
  %v66 = vmul.f32 %v22, %v51
  %v67 = vmul.f32 %v23, %v55
  %v68 = vmul.f32 %v24, %v51
  %v69 = vmul.f32 %v25, %v55
  %v70 = vmul.f32 %v26, %v51
  %v71 = vmul.f32 %v27, %v55
  %v72 = vmul.f32 %v28, %v51
  %v73 = vmul.f32 %v29, %v55
  %v74 = vmul.f32 %v30, %v51
  %v75 = vmul.f32 %v31, %v55
  %v76 = vmul.f32 %v32, %v51
  %v77 = vmul.f32 %v33, %v55
  %v78 = vmul.f32 %v34, %v51
  %v79 = vmul.f32 %v35, %v55
  %v80 = vmul.f32 %v36, %v51
  %v81 = vmul.f32 %v37, %v55
  %v82 = vmul.f32 %v38, %v51
  %v83 = vmul.f32 %v39, %v55
  %v84 = vmul.f32 %v40, %v51
  %v85 = vmul.f32 %v41, %v55
  %v86 = vmul.f32 %v42, %v51
  %v87 = vmul.f32 %v43, %v55
  %v88 = vmul.f32 %v44, %v51
  %v89 = vmul.f32 %v45, %v55
  %v90 = vld [vmem:[%s2] sm:$0x3]
  %v92 = vlaneseq
  %v93 = vshrl.u32 %v92, 7
  %v94 = vsub.s32 0, %v93
  %v95 = vrot.slane %v90, %v94
  %v96 = vlaneseq
  %v97 = vshrl.u32 %v96, 7
  %v98 = vsub.s32 1, %v97
  %v99 = vrot.slane %v90, %v98
  %v102 = vadd.f32 %v58, %v95
  %v103 = vadd.f32 %v59, %v99
  %v104 = vadd.f32 %v60, %v95
  %v105 = vadd.f32 %v61, %v99
  %v106 = vadd.f32 %v62, %v95
  %v107 = vadd.f32 %v63, %v99
  %v108 = vadd.f32 %v64, %v95
  %v109 = vadd.f32 %v65, %v99
  %v110 = vadd.f32 %v66, %v95
  %v111 = vadd.f32 %v67, %v99
  %v112 = vadd.f32 %v68, %v95
  %v113 = vadd.f32 %v69, %v99
  %v114 = vadd.f32 %v70, %v95
  %v115 = vadd.f32 %v71, %v99
  %v116 = vadd.f32 %v72, %v95
  %v117 = vadd.f32 %v73, %v99
  %v118 = vadd.f32 %v74, %v95
  %v119 = vadd.f32 %v75, %v99
  %v120 = vadd.f32 %v76, %v95
  %v121 = vadd.f32 %v77, %v99
  %v122 = vadd.f32 %v78, %v95
  %v123 = vadd.f32 %v79, %v99
  %v124 = vadd.f32 %v80, %v95
  %v125 = vadd.f32 %v81, %v99
  %v126 = vadd.f32 %v82, %v95
  %v127 = vadd.f32 %v83, %v99
  %v128 = vadd.f32 %v84, %v95
  %v129 = vadd.f32 %v85, %v99
  %v130 = vadd.f32 %v86, %v95
  %v131 = vadd.f32 %v87, %v99
  %v132 = vadd.f32 %v88, %v95
  %v133 = vadd.f32 %v89, %v99
  %v134 = vmax.f32 %v102, 0.0
  %v135 = vmax.f32 %v103, 0.0
  %v136 = vmax.f32 %v104, 0.0
  %v137 = vmax.f32 %v105, 0.0
  %v138 = vmax.f32 %v106, 0.0
  %v139 = vmax.f32 %v107, 0.0
  %v140 = vmax.f32 %v108, 0.0
  %v141 = vmax.f32 %v109, 0.0
  %v142 = vmax.f32 %v110, 0.0
  %v143 = vmax.f32 %v111, 0.0
  %v144 = vmax.f32 %v112, 0.0
  %v145 = vmax.f32 %v113, 0.0
  %v146 = vmax.f32 %v114, 0.0
  %v147 = vmax.f32 %v115, 0.0
  %v148 = vmax.f32 %v116, 0.0
  %v149 = vmax.f32 %v117, 0.0
  %v150 = vmax.f32 %v118, 0.0
  %v151 = vmax.f32 %v119, 0.0
  %v152 = vmax.f32 %v120, 0.0
  %v153 = vmax.f32 %v121, 0.0
  %v154 = vmax.f32 %v122, 0.0
  %v155 = vmax.f32 %v123, 0.0
  %v156 = vmax.f32 %v124, 0.0
  %v157 = vmax.f32 %v125, 0.0
  %v158 = vmax.f32 %v126, 0.0
  %v159 = vmax.f32 %v127, 0.0
  %v160 = vmax.f32 %v128, 0.0
  %v161 = vmax.f32 %v129, 0.0
  %v162 = vmax.f32 %v130, 0.0
  %v163 = vmax.f32 %v131, 0.0
  %v164 = vmax.f32 %v132, 0.0
  %v165 = vmax.f32 %v133, 0.0
  %166 = vst [vmem:[%s3] sm:$0xff] %v134
  %167 = vst [vmem:[%s3 + $0x8] sm:$0xff] %v135
  %168 = vst [vmem:[%s3 + $0x10] sm:$0xff] %v136
  %169 = vst [vmem:[%s3 + $0x18] sm:$0xff] %v137
  %170 = vst [vmem:[%s3 + $0x20] sm:$0xff] %v138
  %171 = vst [vmem:[%s3 + $0x28] sm:$0xff] %v139
  %172 = vst [vmem:[%s3 + $0x30] sm:$0xff] %v140
  %173 = vst [vmem:[%s3 + $0x38] sm:$0xff] %v141
  %174 = vst [vmem:[%s3 + $0x40] sm:$0xff] %v142
  %175 = vst [vmem:[%s3 + $0x48] sm:$0xff] %v143
  %176 = vst [vmem:[%s3 + $0x50] sm:$0xff] %v144
  %177 = vst [vmem:[%s3 + $0x58] sm:$0xff] %v145
  %178 = vst [vmem:[%s3 + $0x60] sm:$0xff] %v146
  %179 = vst [vmem:[%s3 + $0x68] sm:$0xff] %v147
  %180 = vst [vmem:[%s3 + $0x70] sm:$0xff] %v148
  %181 = vst [vmem:[%s3 + $0x78] sm:$0xff] %v149
  %182 = vst [vmem:[%s3 + $0x80] sm:$0xff] %v150
  %183 = vst [vmem:[%s3 + $0x88] sm:$0xff] %v151
  %184 = vst [vmem:[%s3 + $0x90] sm:$0xff] %v152
  %185 = vst [vmem:[%s3 + $0x98] sm:$0xff] %v153
  %186 = vst [vmem:[%s3 + $0xa0] sm:$0xff] %v154
  %187 = vst [vmem:[%s3 + $0xa8] sm:$0xff] %v155
  %188 = vst [vmem:[%s3 + $0xb0] sm:$0xff] %v156
  %189 = vst [vmem:[%s3 + $0xb8] sm:$0xff] %v157
  %190 = vst [vmem:[%s3 + $0xc0] sm:$0xff] %v158
  %191 = vst [vmem:[%s3 + $0xc8] sm:$0xff] %v159
  %192 = vst [vmem:[%s3 + $0xd0] sm:$0xff] %v160
  %193 = vst [vmem:[%s3 + $0xd8] sm:$0xff] %v161
  %194 = vst [vmem:[%s3 + $0xe0] sm:$0xff] %v162
  %195 = vst [vmem:[%s3 + $0xe8] sm:$0xff] %v163
  %196 = vst [vmem:[%s3 + $0xf0] sm:$0xff] %v164
  %197 = vst [vmem:[%s3 + $0xf8] sm:$0xff] %v165
  // Predicated region
  $region14: #{netg_forward.16} parent=0 // pred_check
    _
  $region15: #{netg_forward.16} parent=0 // pred_check_branch
    %199 = sbr.rel (0) target = $region17
  $region16: #{netg_forward.16} parent=0 // pred_region
    _
  $region17: #{netg_forward.16} parent=0 // pred_fallthru
    _
  // Predicated region
  $region18: #{netg_forward.16} parent=0 // pred_check
    _
  $region19: #{netg_forward.16} parent=0 // pred_check_branch
    %201 = sbr.rel (0) target = $region21
  $region20: #{netg_forward.16} parent=0 // pred_region
    _
  $region21: #{netg_forward.16} parent=0 // pred_fallthru
    _

// kernel: netg_forward.17
$region0: #{netg_forward.17}
  #allocation0 [shape = 'u32[]', space=smem, size = 0x4, offset = 0x4, fixed_abs, tag = 'smem constant byte address 0x4 - core index']
  #allocation1 [shape = 'u32[144,128]{1,0:T(1,128)}', space=vmem, size = 0x12000, scoped, tag = 'internal scratch']
  %s0 = inlined_call_operand.vmem [shape: bf16[9,2048,128], index: 0, kind: input, shape index: {}]
  %s1 = inlined_call_operand.vmem [shape: bf16[9,128,128], index: 1, kind: input, shape index: {}]
  %s2 = inlined_call_operand.vmem [shape: f32[9,2048,3], index: 2, kind: output, shape index: {}]
  %s3 = sld [smem:[#allocation0]]
  $region41: #{netg_forward.17} parent=0
    _
  %s5 = ssub.s32 1, %s3
  %s6 = scalar_select 0, %s5, %s3
  loop: start=0, step=1, limit=38
  $region2: #{netg_forward.17} parent=0 // loop_pre_header
    _
  $region3: #{netg_forward.17} parent=0 // loop_header
    %s8 = sphi 0, %s12
    %p9 = scmp.ge.s32.totalorder %s8, 38
    %s15 = sphi 0, %s27
    %s16 = sphi 0, %s23
    %s17 = sphi 0, %s15
    %s18 = sphi 0, %s16
    %s19 = sphi 0, %s17
    %s20 = sphi 0, %s18
    %s32 = sphi 0, %s34
    %s35 = sphi 0, %s32
    %s36 = sphi 0, %s35
    %s52 = sphi 0, %s36
    %s58 = sphi 0, %s60
    %s61 = sphi 0, %s58
    %s62 = sphi 0, %s61
    %s78 = sphi 0, %s62
    %s86 = sphi 0, %s88
    %s89 = sphi 0, %s86
    %s90 = sphi 0, %s89
    %s106 = sphi 0, %s90
  $region4: #{netg_forward.17} parent=0 // loop_header_branch
    %11 = sbr.rel (%p9) target = $region8
  $region5: #{netg_forward.17} parent=0 // loop_body
    %s13 = ssub.s32 %s8, 1
    %s14 = ssub.s32 %s8, 2
    %s21 = sadd.s32 1, %s16
    %p22 = scmp.ge.s32.totalorder %s21, 4
    %s23 = scalar_select %p22, 0, %s21
    %s24 = sadd.s32 1, %s15
    %s25 = scalar_select %p22, %s24, %s15
    %p26 = scmp.ge.s32.totalorder %s25, 9
    %s27 = scalar_select %p26, 0, %s25
    %s28 = ssub.s32 %s15, %s27
    %s29 = ssub.s32 %s16, %s23
    %s30 = sor.u32 %s28, %s29
    %p31 = scmp.eq.s32.totalorder %s30, 0
    %s33 = sadd.s32 %s32, 1
    %s34 = scalar_select %p31, %s32, %s33
    %p37 = pneg %p31
    %p38 = scmp.eq.s32.totalorder %s8, 35
    %p39 = por %p37, %p38
    %p40 = scmp.ne.s32.totalorder %s32, %s35
    %p41 = scmp.eq.s32.totalorder %s8, 0
    %p42 = por %p40, %p41
    %p43 = scmp.ne.s32.totalorder %s32, %s35
    %p44 = scmp.eq.s32.totalorder %s13, 35
    %p45 = por %p43, %p44
    %p46 = scmp.ne.s32.totalorder %s35, %s36
    %p47 = scmp.eq.s32.totalorder %s13, 0
    %p48 = por %p46, %p47
    %p49 = scmp.ne.s32.totalorder %s35, %s36
    %p50 = scmp.eq.s32.totalorder %s14, 35
    %p51 = por %p49, %p50
    %p53 = scmp.ne.s32.totalorder %s36, %s52
    %p54 = scmp.eq.s32.totalorder %s14, 0
    %p55 = por %p53, %p54
    %s56 = ssub.s32 %s15, %s27
    %p57 = scmp.eq.s32.totalorder %s56, 0
    %s59 = sadd.s32 %s58, 1
    %s60 = scalar_select %p57, %s58, %s59
    %p63 = pneg %p57
    %p64 = scmp.eq.s32.totalorder %s8, 35
    %p65 = por %p63, %p64
    %p66 = scmp.ne.s32.totalorder %s58, %s61
    %p67 = scmp.eq.s32.totalorder %s8, 0
    %p68 = por %p66, %p67
    %p69 = scmp.ne.s32.totalorder %s58, %s61
    %p70 = scmp.eq.s32.totalorder %s13, 35
    %p71 = por %p69, %p70
    %p72 = scmp.ne.s32.totalorder %s61, %s62
    %p73 = scmp.eq.s32.totalorder %s13, 0
    %p74 = por %p72, %p73
    %p75 = scmp.ne.s32.totalorder %s61, %s62
    %p76 = scmp.eq.s32.totalorder %s14, 35
    %p77 = por %p75, %p76
    %p79 = scmp.ne.s32.totalorder %s62, %s78
    %p80 = scmp.eq.s32.totalorder %s14, 0
    %p81 = por %p79, %p80
    %s82 = ssub.s32 %s15, %s27
    %s83 = ssub.s32 %s16, %s23
    %s84 = sor.u32 %s82, %s83
    %p85 = scmp.eq.s32.totalorder %s84, 0
    %s87 = sadd.s32 %s86, 1
    %s88 = scalar_select %p85, %s86, %s87
    %p91 = pneg %p85
    %p92 = scmp.eq.s32.totalorder %s8, 35
    %p93 = por %p91, %p92
    %p94 = scmp.ne.s32.totalorder %s86, %s89
    %p95 = scmp.eq.s32.totalorder %s8, 0
    %p96 = por %p94, %p95
    %p97 = scmp.ne.s32.totalorder %s86, %s89
    %p98 = scmp.eq.s32.totalorder %s13, 35
    %p99 = por %p97, %p98
    %p100 = scmp.ne.s32.totalorder %s89, %s90
    %p101 = scmp.eq.s32.totalorder %s13, 0
    %p102 = por %p100, %p101
    %p103 = scmp.ne.s32.totalorder %s89, %s90
    %p104 = scmp.eq.s32.totalorder %s14, 35
    %p105 = por %p103, %p104
    %p107 = scmp.ne.s32.totalorder %s90, %s106
    %p108 = scmp.eq.s32.totalorder %s14, 0
    %p109 = por %p107, %p108
    %p110 = scmp.le.s32.totalorder 1, %s8
    %p111 = scmp.lt.s32.totalorder %s8, 37
    %p112 = pnand %p110, %p111
    %p113 = pneg %p112
    // Predicated region
    $region9: #{netg_forward.17} parent=5 // pred_check
      _
    $region10: #{netg_forward.17} parent=5 // pred_check_branch
      %115 = sbr.rel (%p112) target = $region12
    $region11: #{netg_forward.17} parent=5 // pred_region
      %s116 = ssub.s32 %s8, 1
    $region12: #{netg_forward.17} parent=5 // pred_fallthru
      _
    %p117 = scmp.lt.s32.totalorder %s8, 36
    // Predicated region
    $region13: #{netg_forward.17} parent=5 // pred_check
      %p118 = pneg %p117
    $region14: #{netg_forward.17} parent=5 // pred_check_branch
      %120 = sbr.rel (%p118) target = $region16
    $region15: #{netg_forward.17} parent=5 // pred_region
      // Predicated region
      $region17: #{netg_forward.17} parent=15 // pred_check
        %p121 = pneg %p42
      $region18: #{netg_forward.17} parent=15 // pred_check_branch
        %123 = sbr.rel (%p121) target = $region20
      $region19: #{netg_forward.17} parent=15 // pred_region
        %s124 = smul.u32 64, %s16
        %p125 = scmp.lt.s32.totalorder %s15, 8
        %s126 = scalar_select %p125, %s15, 8
        %p127 = scmp.lt.s32.totalorder %s124, 255
        %s128 = scalar_select %p127, %s124, 255
        %s129 = smul.addr %s126, 256
        %s130 = sadd.s32 %s128, %s129
        %s131 = smul.addr %s130, 4
        %s132 = scalar_lea.vmem %s0, %s131
        %s133 = smul.u32 64, %s16
      $region20: #{netg_forward.17} parent=15 // pred_fallthru
        _
      // Predicated region
      $region21: #{netg_forward.17} parent=15 // pred_check
        %p134 = pneg %p68
      $region22: #{netg_forward.17} parent=15 // pred_check_branch
        %136 = sbr.rel (%p134) target = $region24
      $region23: #{netg_forward.17} parent=15 // pred_region
        %p137 = scmp.lt.s32.totalorder %s15, 8
        %s138 = scalar_select %p137, %s15, 8
        %s139 = smul.addr %s138, 16
        %s140 = smul.addr %s139, 4
        %s141 = scalar_lea.vmem %s1, %s140
      $region24: #{netg_forward.17} parent=15 // pred_fallthru
        _
    $region16: #{netg_forward.17} parent=5 // pred_fallthru
      _
    %p142 = scmp.le.s32.totalorder 1, %s8
    %p143 = scmp.lt.s32.totalorder %s8, 37
    %p144 = pnand %p142, %p143
    %p145 = pneg %p144
    // Predicated region
    $region25: #{netg_forward.17} parent=5 // pred_check
      _
    $region26: #{netg_forward.17} parent=5 // pred_check_branch
      %147 = sbr.rel (%p144) target = $region28
    $region27: #{netg_forward.17} parent=5 // pred_region
      %s148 = ssub.s32 %s8, 1
      %s149 = smul.u32 64, %s18
      %p150 = scmp.lt.s32.totalorder %s17, 8
      %s151 = scalar_select %p150, %s17, 8
      %p152 = scmp.lt.s32.totalorder %s149, 255
      %s153 = scalar_select %p152, %s149, 255
      %s154 = smul.addr %s151, 256
      %s155 = sadd.s32 %s153, %s154
      %s156 = smul.addr %s155, 4
      %s157 = scalar_lea.vmem %s0, %s156
      %p158 = pneg %p48
      %p159 = pneg %p45
      %p160 = scmp.lt.s32.totalorder %s17, 8
      %s161 = scalar_select %p160, %s17, 8
      %s162 = smul.addr %s161, 16
      %s163 = smul.addr %s162, 4
      %s164 = scalar_lea.vmem %s1, %s163
      %p165 = pneg %p74
      %p166 = pneg %p71
      %p167 = pneg %p102
      %p168 = pneg %p99
      %s169 = smul.u32 64, %s18
      %p170 = scmp.lt.s32.totalorder %s17, 8
      %s171 = scalar_select %p170, %s17, 8
      %p172 = scmp.lt.s32.totalorder %s169, 255
      %s173 = scalar_select %p172, %s169, 255
      %s174 = smul.addr %s171, 256
      %s175 = sadd.s32 %s173, %s174
      %s176 = smul.addr %s175, 8
      %s177 = scalar_lea.vmem %s2, %s176
      %s178 = smul.u32 64, %s18
      %p179 = scmp.lt.s32.totalorder %s17, 8
      %s180 = scalar_select %p179, %s17, 8
      %p181 = scmp.lt.s32.totalorder %s178, 255
      %s182 = scalar_select %p181, %s178, 255
      %s183 = smul.addr %s180, 256
      %s184 = sadd.s32 %s182, %s183
      %s185 = smul.addr %s184, 4
      %s186 = scalar_lea.vmem %s0, %s185
      %s187 = smul.u32 64, %s18
      %p188 = scmp.lt.s32.totalorder %s17, 8
      %s189 = scalar_select %p188, %s17, 8
      %s190 = smul.addr %s189, 16
      %s191 = smul.addr %s190, 4
      %s192 = scalar_lea.vmem %s1, %s191
      %s193 = smul.u32 64, %s18
      %p194 = scmp.lt.s32.totalorder %s17, 8
      %s195 = scalar_select %p194, %s17, 8
      %p196 = scmp.lt.s32.totalorder %s193, 255
      %s197 = scalar_select %p196, %s193, 255
      %s198 = smul.addr %s195, 256
      %s199 = sadd.s32 %s197, %s198
      %s200 = smul.addr %s199, 8
      %s201 = scalar_lea.vmem %s2, %s200
      %s202 = smul.u32 64, %s18
      %v204 = vld [vmem:[%s186] sm:$0xf]
      %v205 = vld [vmem:[%s186 + $0x4] sm:$0xf]
      %v206 = vld [vmem:[%s186 + $0x8] sm:$0xf]
      %v207 = vld [vmem:[%s186 + $0xc] sm:$0xf]
      %v208 = vld [vmem:[%s186 + $0x10] sm:$0xf]
      %v209 = vld [vmem:[%s186 + $0x14] sm:$0xf]
      %v210 = vld [vmem:[%s186 + $0x18] sm:$0xf]
      %v211 = vld [vmem:[%s186 + $0x1c] sm:$0xf]
      %v212 = vld [vmem:[%s186 + $0x20] sm:$0xf]
      %v213 = vld [vmem:[%s186 + $0x24] sm:$0xf]
      %v214 = vld [vmem:[%s186 + $0x28] sm:$0xf]
      %v215 = vld [vmem:[%s186 + $0x2c] sm:$0xf]
      %v216 = vld [vmem:[%s186 + $0x30] sm:$0xf]
      %v217 = vld [vmem:[%s186 + $0x34] sm:$0xf]
      %v218 = vld [vmem:[%s186 + $0x38] sm:$0xf]
      %v219 = vld [vmem:[%s186 + $0x3c] sm:$0xf]
      %v220 = vld [vmem:[%s186 + $0x40] sm:$0xf]
      %v221 = vld [vmem:[%s186 + $0x44] sm:$0xf]
      %v222 = vld [vmem:[%s186 + $0x48] sm:$0xf]
      %v223 = vld [vmem:[%s186 + $0x4c] sm:$0xf]
      %v224 = vld [vmem:[%s186 + $0x50] sm:$0xf]
      %v225 = vld [vmem:[%s186 + $0x54] sm:$0xf]
      %v226 = vld [vmem:[%s186 + $0x58] sm:$0xf]
      %v227 = vld [vmem:[%s186 + $0x5c] sm:$0xf]
      %v228 = vld [vmem:[%s186 + $0x60] sm:$0xf]
      %v229 = vld [vmem:[%s186 + $0x64] sm:$0xf]
      %v230 = vld [vmem:[%s186 + $0x68] sm:$0xf]
      %v231 = vld [vmem:[%s186 + $0x6c] sm:$0xf]
      %v232 = vld [vmem:[%s186 + $0x70] sm:$0xf]
      %v233 = vld [vmem:[%s186 + $0x74] sm:$0xf]
      %v234 = vld [vmem:[%s186 + $0x78] sm:$0xf]
      %v235 = vld [vmem:[%s186 + $0x7c] sm:$0xf]
      %v236 = vld [vmem:[%s186 + $0x80] sm:$0xf]
      %v237 = vld [vmem:[%s186 + $0x84] sm:$0xf]
      %v238 = vld [vmem:[%s186 + $0x88] sm:$0xf]
      %v239 = vld [vmem:[%s186 + $0x8c] sm:$0xf]
      %v240 = vld [vmem:[%s186 + $0x90] sm:$0xf]
      %v241 = vld [vmem:[%s186 + $0x94] sm:$0xf]
      %v242 = vld [vmem:[%s186 + $0x98] sm:$0xf]
      %v243 = vld [vmem:[%s186 + $0x9c] sm:$0xf]
      %v244 = vld [vmem:[%s186 + $0xa0] sm:$0xf]
      %v245 = vld [vmem:[%s186 + $0xa4] sm:$0xf]
      %v246 = vld [vmem:[%s186 + $0xa8] sm:$0xf]
      %v247 = vld [vmem:[%s186 + $0xac] sm:$0xf]
      %v248 = vld [vmem:[%s186 + $0xb0] sm:$0xf]
      %v249 = vld [vmem:[%s186 + $0xb4] sm:$0xf]
      %v250 = vld [vmem:[%s186 + $0xb8] sm:$0xf]
      %v251 = vld [vmem:[%s186 + $0xbc] sm:$0xf]
      %v252 = vld [vmem:[%s186 + $0xc0] sm:$0xf]
      %v253 = vld [vmem:[%s186 + $0xc4] sm:$0xf]
      %v254 = vld [vmem:[%s186 + $0xc8] sm:$0xf]
      %v255 = vld [vmem:[%s186 + $0xcc] sm:$0xf]
      %v256 = vld [vmem:[%s186 + $0xd0] sm:$0xf]
      %v257 = vld [vmem:[%s186 + $0xd4] sm:$0xf]
      %v258 = vld [vmem:[%s186 + $0xd8] sm:$0xf]
      %v259 = vld [vmem:[%s186 + $0xdc] sm:$0xf]
      %v260 = vld [vmem:[%s186 + $0xe0] sm:$0xf]
      %v261 = vld [vmem:[%s186 + $0xe4] sm:$0xf]
      %v262 = vld [vmem:[%s186 + $0xe8] sm:$0xf]
      %v263 = vld [vmem:[%s186 + $0xec] sm:$0xf]
      %v264 = vld [vmem:[%s186 + $0xf0] sm:$0xf]
      %v265 = vld [vmem:[%s186 + $0xf4] sm:$0xf]
      %v266 = vld [vmem:[%s186 + $0xf8] sm:$0xf]
      %v267 = vld [vmem:[%s186 + $0xfc] sm:$0xf]
      %v268 = vld [vmem:[%s192] sm:$0xf]
      %v269 = vld [vmem:[%s192 + $0x4] sm:$0xf]
      %v270 = vld [vmem:[%s192 + $0x8] sm:$0xf]
      %v271 = vld [vmem:[%s192 + $0xc] sm:$0xf]
      %v272 = vld [vmem:[%s192 + $0x10] sm:$0xf]
      %v273 = vld [vmem:[%s192 + $0x14] sm:$0xf]
      %v274 = vld [vmem:[%s192 + $0x18] sm:$0xf]
      %v275 = vld [vmem:[%s192 + $0x1c] sm:$0xf]
      %v276 = vld [vmem:[%s192 + $0x20] sm:$0xf]
      %v277 = vld [vmem:[%s192 + $0x24] sm:$0xf]
      %v278 = vld [vmem:[%s192 + $0x28] sm:$0xf]
      %v279 = vld [vmem:[%s192 + $0x2c] sm:$0xf]
      %v280 = vld [vmem:[%s192 + $0x30] sm:$0xf]
      %v281 = vld [vmem:[%s192 + $0x34] sm:$0xf]
      %v282 = vld [vmem:[%s192 + $0x38] sm:$0xf]
      %v283 = vld [vmem:[%s192 + $0x3c] sm:$0xf]
      %v348 = vunpack.c.l.b16 %v204
      %v349 = vunpack.c.l.b16 %v205
      %v350 = vunpack.c.l.b16 %v206
      %v351 = vunpack.c.l.b16 %v207
      %v352 = vunpack.c.l.b16 %v208
      %v353 = vunpack.c.l.b16 %v209
      %v354 = vunpack.c.l.b16 %v210
      %v355 = vunpack.c.l.b16 %v211
      %v356 = vunpack.c.l.b16 %v212
      %v357 = vunpack.c.l.b16 %v213
      %v358 = vunpack.c.l.b16 %v214
      %v359 = vunpack.c.l.b16 %v215
      %v360 = vunpack.c.l.b16 %v216
      %v361 = vunpack.c.l.b16 %v217
      %v362 = vunpack.c.l.b16 %v218
      %v363 = vunpack.c.l.b16 %v219
      %v364 = vunpack.c.l.b16 %v220
      %v365 = vunpack.c.l.b16 %v221
      %v366 = vunpack.c.l.b16 %v222
      %v367 = vunpack.c.l.b16 %v223
      %v368 = vunpack.c.l.b16 %v224
      %v369 = vunpack.c.l.b16 %v225
      %v370 = vunpack.c.l.b16 %v226
      %v371 = vunpack.c.l.b16 %v227
      %v372 = vunpack.c.l.b16 %v228
      %v373 = vunpack.c.l.b16 %v229
      %v374 = vunpack.c.l.b16 %v230
      %v375 = vunpack.c.l.b16 %v231
      %v376 = vunpack.c.l.b16 %v232
      %v377 = vunpack.c.l.b16 %v233
      %v378 = vunpack.c.l.b16 %v234
      %v379 = vunpack.c.l.b16 %v235
      %v380 = vunpack.c.l.b16 %v236
      %v381 = vunpack.c.l.b16 %v237
      %v382 = vunpack.c.l.b16 %v238
      %v383 = vunpack.c.l.b16 %v239
      %v384 = vunpack.c.l.b16 %v240
      %v385 = vunpack.c.l.b16 %v241
      %v386 = vunpack.c.l.b16 %v242
      %v387 = vunpack.c.l.b16 %v243
      %v388 = vunpack.c.l.b16 %v244
      %v389 = vunpack.c.l.b16 %v245
      %v390 = vunpack.c.l.b16 %v246
      %v391 = vunpack.c.l.b16 %v247
      %v392 = vunpack.c.l.b16 %v248
      %v393 = vunpack.c.l.b16 %v249
      %v394 = vunpack.c.l.b16 %v250
      %v395 = vunpack.c.l.b16 %v251
      %v396 = vunpack.c.l.b16 %v252
      %v397 = vunpack.c.l.b16 %v253
      %v398 = vunpack.c.l.b16 %v254
      %v399 = vunpack.c.l.b16 %v255
      %v400 = vunpack.c.l.b16 %v256
      %v401 = vunpack.c.l.b16 %v257
      %v402 = vunpack.c.l.b16 %v258
      %v403 = vunpack.c.l.b16 %v259
      %v404 = vunpack.c.l.b16 %v260
      %v405 = vunpack.c.l.b16 %v261
      %v406 = vunpack.c.l.b16 %v262
      %v407 = vunpack.c.l.b16 %v263
      %v408 = vunpack.c.l.b16 %v264
      %v409 = vunpack.c.l.b16 %v265
      %v410 = vunpack.c.l.b16 %v266
      %v411 = vunpack.c.l.b16 %v267
      %v412 = vpack.c.b16 %v349, %v348
      %v413 = vpack.c.b16 %v351, %v350
      %v414 = vpack.c.b16 %v353, %v352
      %v415 = vpack.c.b16 %v355, %v354
      %v416 = vpack.c.b16 %v357, %v356
      %v417 = vpack.c.b16 %v359, %v358
      %v418 = vpack.c.b16 %v361, %v360
      %v419 = vpack.c.b16 %v363, %v362
      %v420 = vpack.c.b16 %v365, %v364
      %v421 = vpack.c.b16 %v367, %v366
      %v422 = vpack.c.b16 %v369, %v368
      %v423 = vpack.c.b16 %v371, %v370
      %v424 = vpack.c.b16 %v373, %v372
      %v425 = vpack.c.b16 %v375, %v374
      %v426 = vpack.c.b16 %v377, %v376
      %v427 = vpack.c.b16 %v379, %v378
      %v428 = vpack.c.b16 %v381, %v380
      %v429 = vpack.c.b16 %v383, %v382
      %v430 = vpack.c.b16 %v385, %v384
      %v431 = vpack.c.b16 %v387, %v386
      %v432 = vpack.c.b16 %v389, %v388
      %v433 = vpack.c.b16 %v391, %v390
      %v434 = vpack.c.b16 %v393, %v392
      %v435 = vpack.c.b16 %v395, %v394
      %v436 = vpack.c.b16 %v397, %v396
      %v437 = vpack.c.b16 %v399, %v398
      %v438 = vpack.c.b16 %v401, %v400
      %v439 = vpack.c.b16 %v403, %v402
      %v440 = vpack.c.b16 %v405, %v404
      %v441 = vpack.c.b16 %v407, %v406
      %v442 = vpack.c.b16 %v409, %v408
      %v443 = vpack.c.b16 %v411, %v410
      %v492 = vunpack.c.l.b16 %v268
      %v493 = vunpack.c.l.b16 %v269
      %v494 = vunpack.c.l.b16 %v270
      %v495 = vunpack.c.l.b16 %v271
      %v496 = vunpack.c.l.b16 %v272
      %v497 = vunpack.c.l.b16 %v273
      %v498 = vunpack.c.l.b16 %v274
      %v499 = vunpack.c.l.b16 %v275
      %v500 = vunpack.c.l.b16 %v276
      %v501 = vunpack.c.l.b16 %v277
      %v502 = vunpack.c.l.b16 %v278
      %v503 = vunpack.c.l.b16 %v279
      %v504 = vunpack.c.l.b16 %v280
      %v505 = vunpack.c.l.b16 %v281
      %v506 = vunpack.c.l.b16 %v282
      %v507 = vunpack.c.l.b16 %v283
      %v508 = vpack.c.b16 %v493, %v492
      %v509 = vpack.c.b16 %v495, %v494
      %v510 = vpack.c.b16 %v497, %v496
      %v511 = vpack.c.b16 %v499, %v498
      %v512 = vpack.c.b16 %v501, %v500
      %v513 = vpack.c.b16 %v503, %v502
      %v514 = vpack.c.b16 %v505, %v504
      %v515 = vpack.c.b16 %v507, %v506
      %524 = vmatprep.subr.bf16.mxu0 0
      %525 = vmatpush1.bf16.msra.mxu0 %v508
      %526 = vmatprep.subr.bf16.mxu0 0
      %527 = vmatpush1.bf16.msra.mxu0 %v509
      %528 = vmatprep.subr.bf16.mxu0 0
      %529 = vmatpush1.bf16.msra.mxu0 %v510
      %530 = vmatprep.subr.bf16.mxu0 0
      %531 = vmatpush1.bf16.msra.mxu0 %v511
      %532 = vmatprep.subr.bf16.mxu0 0
      %533 = vmatpush1.bf16.msra.mxu0 %v512
      %534 = vmatprep.subr.bf16.mxu0 0
      %535 = vmatpush1.bf16.msra.mxu0 %v513
      %536 = vmatprep.subr.bf16.mxu0 0
      %537 = vmatpush1.bf16.msra.mxu0 %v514
      %538 = vmatprep.subr.bf16.mxu0 0
      %539 = vmatpush1.bf16.msra.mxu0 %v515
      %540 = vmatprep.subr.bf16.mxu0 0
      %541 = vmatpush1.bf16.msra.mxu0 0
      %542 = vmatprep.subr.bf16.mxu0 0
      %543 = vmatpush1.bf16.msra.mxu0 0
      %544 = vmatprep.subr.bf16.mxu0 0
      %545 = vmatpush1.bf16.msra.mxu0 0
      %546 = vmatprep.subr.bf16.mxu0 0
      %547 = vmatpush1.bf16.msra.mxu0 0
      %548 = vmatprep.subr.bf16.mxu0 0
      %549 = vmatpush1.bf16.msra.mxu0 0
      %550 = vmatprep.subr.bf16.mxu0 0
      %551 = vmatpush1.bf16.msra.mxu0 0
      %552 = vmatprep.subr.bf16.mxu0 0
      %553 = vmatpush1.bf16.msra.mxu0 0
      %554 = vmatprep.subr.bf16.mxu0 0
      %555 = vmatpush1.bf16.msra.mxu0 0
      %556 = vmatprep.mubr.bf16.mxu0 0
      %557 = vmatmul.mubr.bf16.gmra.mrb[0].mxu0 %v412
      %v558 = vpop.f32.mrb[0].mxu0
      %v559 = vadd.f32 0.0, %v558
      %v560 = vpop.f32.mrb[0].mxu0
      %v561 = vpop.f32.mrb[0].mxu0
      %v562 = vadd.f32 0.0, %v561
      %v563 = vpop.f32.mrb[0].mxu0
      %564 = vmatprep.mubr.bf16.mxu0 0
      %565 = vmatmul.mubr.bf16.gmra.mrb[0].mxu0 %v413
      %v566 = vpop.f32.mrb[0].mxu0
      %v567 = vadd.f32 0.0, %v566
      %v568 = vpop.f32.mrb[0].mxu0
      %v569 = vpop.f32.mrb[0].mxu0
      %v570 = vadd.f32 0.0, %v569
      %v571 = vpop.f32.mrb[0].mxu0
      %572 = vmatprep.mubr.bf16.mxu0 0
      %573 = vmatmul.mubr.bf16.gmra.mrb[0].mxu0 %v414
      %v574 = vpop.f32.mrb[0].mxu0
      %v575 = vadd.f32 0.0, %v574
      %v576 = vpop.f32.mrb[0].mxu0
      %v577 = vpop.f32.mrb[0].mxu0
      %v578 = vadd.f32 0.0, %v577
      %v579 = vpop.f32.mrb[0].mxu0
      %580 = vmatprep.mubr.bf16.mxu0 0
      %581 = vmatmul.mubr.bf16.gmra.mrb[0].mxu0 %v415
      %v582 = vpop.f32.mrb[0].mxu0
      %v583 = vadd.f32 0.0, %v582
      %v584 = vpop.f32.mrb[0].mxu0
      %v585 = vpop.f32.mrb[0].mxu0
      %v586 = vadd.f32 0.0, %v585
      %v587 = vpop.f32.mrb[0].mxu0
      %588 = vmatprep.mubr.bf16.mxu0 0
      %589 = vmatmul.mubr.bf16.gmra.mrb[0].mxu0 %v416
      %v590 = vpop.f32.mrb[0].mxu0
      %v591 = vadd.f32 0.0, %v590
      %v592 = vpop.f32.mrb[0].mxu0
      %v593 = vpop.f32.mrb[0].mxu0
      %v594 = vadd.f32 0.0, %v593
      %v595 = vpop.f32.mrb[0].mxu0
      %596 = vmatprep.mubr.bf16.mxu0 0
      %597 = vmatmul.mubr.bf16.gmra.mrb[0].mxu0 %v417
      %v598 = vpop.f32.mrb[0].mxu0
      %v599 = vadd.f32 0.0, %v598
      %v600 = vpop.f32.mrb[0].mxu0
      %v601 = vpop.f32.mrb[0].mxu0
      %v602 = vadd.f32 0.0, %v601
      %v603 = vpop.f32.mrb[0].mxu0
      %604 = vmatprep.mubr.bf16.mxu0 0
      %605 = vmatmul.mubr.bf16.gmra.mrb[0].mxu0 %v418
      %v606 = vpop.f32.mrb[0].mxu0
      %v607 = vadd.f32 0.0, %v606
      %v608 = vpop.f32.mrb[0].mxu0
      %v609 = vpop.f32.mrb[0].mxu0
      %v610 = vadd.f32 0.0, %v609
      %v611 = vpop.f32.mrb[0].mxu0
      %612 = vmatprep.mubr.bf16.mxu0 0
      %613 = vmatmul.mubr.bf16.gmra.mrb[0].mxu0 %v419
      %v614 = vpop.f32.mrb[0].mxu0
      %v615 = vadd.f32 0.0, %v614
      %v616 = vpop.f32.mrb[0].mxu0
      %v617 = vpop.f32.mrb[0].mxu0
      %v618 = vadd.f32 0.0, %v617
      %v619 = vpop.f32.mrb[0].mxu0
      %620 = vmatprep.mubr.bf16.mxu0 0
      %621 = vmatmul.mubr.bf16.gmra.mrb[0].mxu0 %v420
      %v622 = vpop.f32.mrb[0].mxu0
      %v623 = vadd.f32 0.0, %v622
      %v624 = vpop.f32.mrb[0].mxu0
      %v625 = vpop.f32.mrb[0].mxu0
      %v626 = vadd.f32 0.0, %v625
      %v627 = vpop.f32.mrb[0].mxu0
      %628 = vmatprep.mubr.bf16.mxu0 0
      %629 = vmatmul.mubr.bf16.gmra.mrb[0].mxu0 %v421
      %v630 = vpop.f32.mrb[0].mxu0
      %v631 = vadd.f32 0.0, %v630
      %v632 = vpop.f32.mrb[0].mxu0
      %v633 = vpop.f32.mrb[0].mxu0
      %v634 = vadd.f32 0.0, %v633
      %v635 = vpop.f32.mrb[0].mxu0
      %636 = vmatprep.mubr.bf16.mxu0 0
      %637 = vmatmul.mubr.bf16.gmra.mrb[0].mxu0 %v422
      %v638 = vpop.f32.mrb[0].mxu0
      %v639 = vadd.f32 0.0, %v638
      %v640 = vpop.f32.mrb[0].mxu0
      %v641 = vpop.f32.mrb[0].mxu0
      %v642 = vadd.f32 0.0, %v641
      %v643 = vpop.f32.mrb[0].mxu0
      %644 = vmatprep.mubr.bf16.mxu0 0
      %645 = vmatmul.mubr.bf16.gmra.mrb[0].mxu0 %v423
      %v646 = vpop.f32.mrb[0].mxu0
      %v647 = vadd.f32 0.0, %v646
      %v648 = vpop.f32.mrb[0].mxu0
      %v649 = vpop.f32.mrb[0].mxu0
      %v650 = vadd.f32 0.0, %v649
      %v651 = vpop.f32.mrb[0].mxu0
      %652 = vmatprep.mubr.bf16.mxu0 0
      %653 = vmatmul.mubr.bf16.gmra.mrb[0].mxu0 %v424
      %v654 = vpop.f32.mrb[0].mxu0
      %v655 = vadd.f32 0.0, %v654
      %v656 = vpop.f32.mrb[0].mxu0
      %v657 = vpop.f32.mrb[0].mxu0
      %v658 = vadd.f32 0.0, %v657
      %v659 = vpop.f32.mrb[0].mxu0
      %660 = vmatprep.mubr.bf16.mxu0 0
      %661 = vmatmul.mubr.bf16.gmra.mrb[0].mxu0 %v425
      %v662 = vpop.f32.mrb[0].mxu0
      %v663 = vadd.f32 0.0, %v662
      %v664 = vpop.f32.mrb[0].mxu0
      %v665 = vpop.f32.mrb[0].mxu0
      %v666 = vadd.f32 0.0, %v665
      %v667 = vpop.f32.mrb[0].mxu0
      %668 = vmatprep.mubr.bf16.mxu0 0
      %669 = vmatmul.mubr.bf16.gmra.mrb[0].mxu0 %v426
      %v670 = vpop.f32.mrb[0].mxu0
      %v671 = vadd.f32 0.0, %v670
      %v672 = vpop.f32.mrb[0].mxu0
      %v673 = vpop.f32.mrb[0].mxu0
      %v674 = vadd.f32 0.0, %v673
      %v675 = vpop.f32.mrb[0].mxu0
      %676 = vmatprep.mubr.bf16.mxu0 0
      %677 = vmatmul.mubr.bf16.gmra.mrb[0].mxu0 %v427
      %v678 = vpop.f32.mrb[0].mxu0
      %v679 = vadd.f32 0.0, %v678
      %v680 = vpop.f32.mrb[0].mxu0
      %v681 = vpop.f32.mrb[0].mxu0
      %v682 = vadd.f32 0.0, %v681
      %v683 = vpop.f32.mrb[0].mxu0
      %684 = vmatprep.mubr.bf16.mxu0 0
      %685 = vmatmul.mubr.bf16.gmra.mrb[0].mxu0 %v428
      %v686 = vpop.f32.mrb[0].mxu0
      %v687 = vadd.f32 0.0, %v686
      %v688 = vpop.f32.mrb[0].mxu0
      %v689 = vpop.f32.mrb[0].mxu0
      %v690 = vadd.f32 0.0, %v689
      %v691 = vpop.f32.mrb[0].mxu0
      %692 = vmatprep.mubr.bf16.mxu0 0
      %693 = vmatmul.mubr.bf16.gmra.mrb[0].mxu0 %v429
      %v694 = vpop.f32.mrb[0].mxu0
      %v695 = vadd.f32 0.0, %v694
      %v696 = vpop.f32.mrb[0].mxu0
      %v697 = vpop.f32.mrb[0].mxu0
      %v698 = vadd.f32 0.0, %v697
      %v699 = vpop.f32.mrb[0].mxu0
      %700 = vmatprep.mubr.bf16.mxu0 0
      %701 = vmatmul.mubr.bf16.gmra.mrb[0].mxu0 %v430
      %v702 = vpop.f32.mrb[0].mxu0
      %v703 = vadd.f32 0.0, %v702
      %v704 = vpop.f32.mrb[0].mxu0
      %v705 = vpop.f32.mrb[0].mxu0
      %v706 = vadd.f32 0.0, %v705
      %v707 = vpop.f32.mrb[0].mxu0
      %708 = vmatprep.mubr.bf16.mxu0 0
      %709 = vmatmul.mubr.bf16.gmra.mrb[0].mxu0 %v431
      %v710 = vpop.f32.mrb[0].mxu0
      %v711 = vadd.f32 0.0, %v710
      %v712 = vpop.f32.mrb[0].mxu0
      %v713 = vpop.f32.mrb[0].mxu0
      %v714 = vadd.f32 0.0, %v713
      %v715 = vpop.f32.mrb[0].mxu0
      %716 = vmatprep.mubr.bf16.mxu0 0
      %717 = vmatmul.mubr.bf16.gmra.mrb[0].mxu0 %v432
      %v718 = vpop.f32.mrb[0].mxu0
      %v719 = vadd.f32 0.0, %v718
      %v720 = vpop.f32.mrb[0].mxu0
      %v721 = vpop.f32.mrb[0].mxu0
      %v722 = vadd.f32 0.0, %v721
      %v723 = vpop.f32.mrb[0].mxu0
      %724 = vmatprep.mubr.bf16.mxu0 0
      %725 = vmatmul.mubr.bf16.gmra.mrb[0].mxu0 %v433
      %v726 = vpop.f32.mrb[0].mxu0
      %v727 = vadd.f32 0.0, %v726
      %v728 = vpop.f32.mrb[0].mxu0
      %v729 = vpop.f32.mrb[0].mxu0
      %v730 = vadd.f32 0.0, %v729
      %v731 = vpop.f32.mrb[0].mxu0
      %732 = vmatprep.mubr.bf16.mxu0 0
      %733 = vmatmul.mubr.bf16.gmra.mrb[0].mxu0 %v434
      %v734 = vpop.f32.mrb[0].mxu0
      %v735 = vadd.f32 0.0, %v734
      %v736 = vpop.f32.mrb[0].mxu0
      %v737 = vpop.f32.mrb[0].mxu0
      %v738 = vadd.f32 0.0, %v737
      %v739 = vpop.f32.mrb[0].mxu0
      %740 = vmatprep.mubr.bf16.mxu0 0
      %741 = vmatmul.mubr.bf16.gmra.mrb[0].mxu0 %v435
      %v742 = vpop.f32.mrb[0].mxu0
      %v743 = vadd.f32 0.0, %v742
      %v744 = vpop.f32.mrb[0].mxu0
      %v745 = vpop.f32.mrb[0].mxu0
      %v746 = vadd.f32 0.0, %v745
      %v747 = vpop.f32.mrb[0].mxu0
      %748 = vmatprep.mubr.bf16.mxu0 0
      %749 = vmatmul.mubr.bf16.gmra.mrb[0].mxu0 %v436
      %v750 = vpop.f32.mrb[0].mxu0
      %v751 = vadd.f32 0.0, %v750
      %v752 = vpop.f32.mrb[0].mxu0
      %v753 = vpop.f32.mrb[0].mxu0
      %v754 = vadd.f32 0.0, %v753
      %v755 = vpop.f32.mrb[0].mxu0
      %756 = vmatprep.mubr.bf16.mxu0 0
      %757 = vmatmul.mubr.bf16.gmra.mrb[0].mxu0 %v437
      %v758 = vpop.f32.mrb[0].mxu0
      %v759 = vadd.f32 0.0, %v758
      %v760 = vpop.f32.mrb[0].mxu0
      %v761 = vpop.f32.mrb[0].mxu0
      %v762 = vadd.f32 0.0, %v761
      %v763 = vpop.f32.mrb[0].mxu0
      %764 = vmatprep.mubr.bf16.mxu0 0
      %765 = vmatmul.mubr.bf16.gmra.mrb[0].mxu0 %v438
      %v766 = vpop.f32.mrb[0].mxu0
      %v767 = vadd.f32 0.0, %v766
      %v768 = vpop.f32.mrb[0].mxu0
      %v769 = vpop.f32.mrb[0].mxu0
      %v770 = vadd.f32 0.0, %v769
      %v771 = vpop.f32.mrb[0].mxu0
      %772 = vmatprep.mubr.bf16.mxu0 0
      %773 = vmatmul.mubr.bf16.gmra.mrb[0].mxu0 %v439
      %v774 = vpop.f32.mrb[0].mxu0
      %v775 = vadd.f32 0.0, %v774
      %v776 = vpop.f32.mrb[0].mxu0
      %v777 = vpop.f32.mrb[0].mxu0
      %v778 = vadd.f32 0.0, %v777
      %v779 = vpop.f32.mrb[0].mxu0
      %780 = vmatprep.mubr.bf16.mxu0 0
      %781 = vmatmul.mubr.bf16.gmra.mrb[0].mxu0 %v440
      %v782 = vpop.f32.mrb[0].mxu0
      %v783 = vadd.f32 0.0, %v782
      %v784 = vpop.f32.mrb[0].mxu0
      %v785 = vpop.f32.mrb[0].mxu0
      %v786 = vadd.f32 0.0, %v785
      %v787 = vpop.f32.mrb[0].mxu0
      %788 = vmatprep.mubr.bf16.mxu0 0
      %789 = vmatmul.mubr.bf16.gmra.mrb[0].mxu0 %v441
      %v790 = vpop.f32.mrb[0].mxu0
      %v791 = vadd.f32 0.0, %v790
      %v792 = vpop.f32.mrb[0].mxu0
      %v793 = vpop.f32.mrb[0].mxu0
      %v794 = vadd.f32 0.0, %v793
      %v795 = vpop.f32.mrb[0].mxu0
      %796 = vmatprep.mubr.bf16.mxu0 0
      %797 = vmatmul.mubr.bf16.gmra.mrb[0].mxu0 %v442
      %v798 = vpop.f32.mrb[0].mxu0
      %v799 = vadd.f32 0.0, %v798
      %v800 = vpop.f32.mrb[0].mxu0
      %v801 = vpop.f32.mrb[0].mxu0
      %v802 = vadd.f32 0.0, %v801
      %v803 = vpop.f32.mrb[0].mxu0
      %804 = vmatprep.mubr.bf16.mxu0 0
      %805 = vmatmul.mubr.bf16.gmra.mrb[0].mxu0 %v443
      %v806 = vpop.f32.mrb[0].mxu0
      %v807 = vadd.f32 0.0, %v806
      %v808 = vpop.f32.mrb[0].mxu0
      %v809 = vpop.f32.mrb[0].mxu0
      %v810 = vadd.f32 0.0, %v809
      %v811 = vpop.f32.mrb[0].mxu0
      %812 = vdwg.mxu0
      %v813 = vtanh.pop %v559
      %v814 = vtanh.pop %v562
      %v815 = vtanh.pop %v567
      %v816 = vtanh.pop %v570
      %v817 = vtanh.pop %v575
      %v818 = vtanh.pop %v578
      %v819 = vtanh.pop %v583
      %v820 = vtanh.pop %v586
      %v821 = vtanh.pop %v591
      %v822 = vtanh.pop %v594
      %v823 = vtanh.pop %v599
      %v824 = vtanh.pop %v602
      %v825 = vtanh.pop %v607
      %v826 = vtanh.pop %v610
      %v827 = vtanh.pop %v615
      %v828 = vtanh.pop %v618
      %v829 = vtanh.pop %v623
      %v830 = vtanh.pop %v626
      %v831 = vtanh.pop %v631
      %v832 = vtanh.pop %v634
      %v833 = vtanh.pop %v639
      %v834 = vtanh.pop %v642
      %v835 = vtanh.pop %v647
      %v836 = vtanh.pop %v650
      %v837 = vtanh.pop %v655
      %v838 = vtanh.pop %v658
      %v839 = vtanh.pop %v663
      %v840 = vtanh.pop %v666
      %v841 = vtanh.pop %v671
      %v842 = vtanh.pop %v674
      %v843 = vtanh.pop %v679
      %v844 = vtanh.pop %v682
      %v845 = vtanh.pop %v687
      %v846 = vtanh.pop %v690
      %v847 = vtanh.pop %v695
      %v848 = vtanh.pop %v698
      %v849 = vtanh.pop %v703
      %v850 = vtanh.pop %v706
      %v851 = vtanh.pop %v711
      %v852 = vtanh.pop %v714
      %v853 = vtanh.pop %v719
      %v854 = vtanh.pop %v722
      %v855 = vtanh.pop %v727
      %v856 = vtanh.pop %v730
      %v857 = vtanh.pop %v735
      %v858 = vtanh.pop %v738
      %v859 = vtanh.pop %v743
      %v860 = vtanh.pop %v746
      %v861 = vtanh.pop %v751
      %v862 = vtanh.pop %v754
      %v863 = vtanh.pop %v759
      %v864 = vtanh.pop %v762
      %v865 = vtanh.pop %v767
      %v866 = vtanh.pop %v770
      %v867 = vtanh.pop %v775
      %v868 = vtanh.pop %v778
      %v869 = vtanh.pop %v783
      %v870 = vtanh.pop %v786
      %v871 = vtanh.pop %v791
      %v872 = vtanh.pop %v794
      %v873 = vtanh.pop %v799
      %v874 = vtanh.pop %v802
      %v875 = vtanh.pop %v807
      %v876 = vtanh.pop %v810
      %vm877 = vcmask 23552
      %878 = vst.msk [vmem:[%s201] sm:$0xff] %vm877, %v813
      %879 = vst.msk [vmem:[%s201 + $0x8] sm:$0xff] %vm877, %v814
      %880 = vst.msk [vmem:[%s201 + $0x10] sm:$0xff] %vm877, %v815
      %881 = vst.msk [vmem:[%s201 + $0x18] sm:$0xff] %vm877, %v816
      %882 = vst.msk [vmem:[%s201 + $0x20] sm:$0xff] %vm877, %v817
      %883 = vst.msk [vmem:[%s201 + $0x28] sm:$0xff] %vm877, %v818
      %884 = vst.msk [vmem:[%s201 + $0x30] sm:$0xff] %vm877, %v819
      %885 = vst.msk [vmem:[%s201 + $0x38] sm:$0xff] %vm877, %v820
      %886 = vst.msk [vmem:[%s201 + $0x40] sm:$0xff] %vm877, %v821
      %887 = vst.msk [vmem:[%s201 + $0x48] sm:$0xff] %vm877, %v822
      %888 = vst.msk [vmem:[%s201 + $0x50] sm:$0xff] %vm877, %v823
      %889 = vst.msk [vmem:[%s201 + $0x58] sm:$0xff] %vm877, %v824
      %890 = vst.msk [vmem:[%s201 + $0x60] sm:$0xff] %vm877, %v825
      %891 = vst.msk [vmem:[%s201 + $0x68] sm:$0xff] %vm877, %v826
      %892 = vst.msk [vmem:[%s201 + $0x70] sm:$0xff] %vm877, %v827
      %893 = vst.msk [vmem:[%s201 + $0x78] sm:$0xff] %vm877, %v828
      %894 = vst.msk [vmem:[%s201 + $0x80] sm:$0xff] %vm877, %v829
      %895 = vst.msk [vmem:[%s201 + $0x88] sm:$0xff] %vm877, %v830
      %896 = vst.msk [vmem:[%s201 + $0x90] sm:$0xff] %vm877, %v831
      %897 = vst.msk [vmem:[%s201 + $0x98] sm:$0xff] %vm877, %v832
      %898 = vst.msk [vmem:[%s201 + $0xa0] sm:$0xff] %vm877, %v833
      %899 = vst.msk [vmem:[%s201 + $0xa8] sm:$0xff] %vm877, %v834
      %900 = vst.msk [vmem:[%s201 + $0xb0] sm:$0xff] %vm877, %v835
      %901 = vst.msk [vmem:[%s201 + $0xb8] sm:$0xff] %vm877, %v836
      %902 = vst.msk [vmem:[%s201 + $0xc0] sm:$0xff] %vm877, %v837
      %903 = vst.msk [vmem:[%s201 + $0xc8] sm:$0xff] %vm877, %v838
      %904 = vst.msk [vmem:[%s201 + $0xd0] sm:$0xff] %vm877, %v839
      %905 = vst.msk [vmem:[%s201 + $0xd8] sm:$0xff] %vm877, %v840
      %906 = vst.msk [vmem:[%s201 + $0xe0] sm:$0xff] %vm877, %v841
      %907 = vst.msk [vmem:[%s201 + $0xe8] sm:$0xff] %vm877, %v842
      %908 = vst.msk [vmem:[%s201 + $0xf0] sm:$0xff] %vm877, %v843
      %909 = vst.msk [vmem:[%s201 + $0xf8] sm:$0xff] %vm877, %v844
      %910 = vst.msk [vmem:[%s201 + $0x100] sm:$0xff] %vm877, %v845
      %911 = vst.msk [vmem:[%s201 + $0x108] sm:$0xff] %vm877, %v846
      %912 = vst.msk [vmem:[%s201 + $0x110] sm:$0xff] %vm877, %v847
      %913 = vst.msk [vmem:[%s201 + $0x118] sm:$0xff] %vm877, %v848
      %914 = vst.msk [vmem:[%s201 + $0x120] sm:$0xff] %vm877, %v849
      %915 = vst.msk [vmem:[%s201 + $0x128] sm:$0xff] %vm877, %v850
      %916 = vst.msk [vmem:[%s201 + $0x130] sm:$0xff] %vm877, %v851
      %917 = vst.msk [vmem:[%s201 + $0x138] sm:$0xff] %vm877, %v852
      %918 = vst.msk [vmem:[%s201 + $0x140] sm:$0xff] %vm877, %v853
      %919 = vst.msk [vmem:[%s201 + $0x148] sm:$0xff] %vm877, %v854
      %920 = vst.msk [vmem:[%s201 + $0x150] sm:$0xff] %vm877, %v855
      %921 = vst.msk [vmem:[%s201 + $0x158] sm:$0xff] %vm877, %v856
      %922 = vst.msk [vmem:[%s201 + $0x160] sm:$0xff] %vm877, %v857
      %923 = vst.msk [vmem:[%s201 + $0x168] sm:$0xff] %vm877, %v858
      %924 = vst.msk [vmem:[%s201 + $0x170] sm:$0xff] %vm877, %v859
      %925 = vst.msk [vmem:[%s201 + $0x178] sm:$0xff] %vm877, %v860
      %926 = vst.msk [vmem:[%s201 + $0x180] sm:$0xff] %vm877, %v861
      %927 = vst.msk [vmem:[%s201 + $0x188] sm:$0xff] %vm877, %v862
      %928 = vst.msk [vmem:[%s201 + $0x190] sm:$0xff] %vm877, %v863
      %929 = vst.msk [vmem:[%s201 + $0x198] sm:$0xff] %vm877, %v864
      %930 = vst.msk [vmem:[%s201 + $0x1a0] sm:$0xff] %vm877, %v865
      %931 = vst.msk [vmem:[%s201 + $0x1a8] sm:$0xff] %vm877, %v866
      %932 = vst.msk [vmem:[%s201 + $0x1b0] sm:$0xff] %vm877, %v867
      %933 = vst.msk [vmem:[%s201 + $0x1b8] sm:$0xff] %vm877, %v868
      %934 = vst.msk [vmem:[%s201 + $0x1c0] sm:$0xff] %vm877, %v869
      %935 = vst.msk [vmem:[%s201 + $0x1c8] sm:$0xff] %vm877, %v870
      %936 = vst.msk [vmem:[%s201 + $0x1d0] sm:$0xff] %vm877, %v871
      %937 = vst.msk [vmem:[%s201 + $0x1d8] sm:$0xff] %vm877, %v872
      %938 = vst.msk [vmem:[%s201 + $0x1e0] sm:$0xff] %vm877, %v873
      %939 = vst.msk [vmem:[%s201 + $0x1e8] sm:$0xff] %vm877, %v874
      %940 = vst.msk [vmem:[%s201 + $0x1f0] sm:$0xff] %vm877, %v875
      %941 = vst.msk [vmem:[%s201 + $0x1f8] sm:$0xff] %vm877, %v876
      %s942 = smul.u32 64, %s18
      %p943 = scmp.lt.s32.totalorder %s17, 8
      %s944 = scalar_select %p943, %s17, 8
      %p945 = scmp.lt.s32.totalorder %s942, 255
      %s946 = scalar_select %p945, %s942, 255
      %s947 = smul.addr %s944, 256
      %s948 = sadd.s32 %s946, %s947
      %s949 = smul.addr %s948, 8
      %s950 = scalar_lea.vmem %s2, %s949
      // Predicated region
      $region29: #{netg_forward.17} parent=27 // pred_check
        %p951 = pneg %p99
      $region30: #{netg_forward.17} parent=27 // pred_check_branch
        %953 = sbr.rel (%p951) target = $region32
      $region31: #{netg_forward.17} parent=27 // pred_region
        %s954 = smul.u32 64, %s18
      $region32: #{netg_forward.17} parent=27 // pred_fallthru
        _
    $region28: #{netg_forward.17} parent=5 // pred_fallthru
      _
    %p955 = scmp.le.s32.totalorder 2, %s8
    // Predicated region
    $region33: #{netg_forward.17} parent=5 // pred_check
      %p956 = pneg %p955
    $region34: #{netg_forward.17} parent=5 // pred_check_branch
      %958 = sbr.rel (%p956) target = $region36
    $region35: #{netg_forward.17} parent=5 // pred_region
      %s959 = ssub.s32 %s8, 2
      // Predicated region
      $region37: #{netg_forward.17} parent=35 // pred_check
        %p960 = pneg %p105
      $region38: #{netg_forward.17} parent=35 // pred_check_branch
        %962 = sbr.rel (%p960) target = $region40
      $region39: #{netg_forward.17} parent=35 // pred_region
        %s963 = smul.u32 64, %s20
        %p964 = scmp.lt.s32.totalorder %s19, 8
        %s965 = scalar_select %p964, %s19, 8
        %p966 = scmp.lt.s32.totalorder %s963, 255
        %s967 = scalar_select %p966, %s963, 255
        %s968 = smul.addr %s965, 256
        %s969 = sadd.s32 %s967, %s968
        %s970 = smul.addr %s969, 8
        %s971 = scalar_lea.vmem %s2, %s970
      $region40: #{netg_forward.17} parent=35 // pred_fallthru
        _
    $region36: #{netg_forward.17} parent=5 // pred_fallthru
      _
  $region6: #{netg_forward.17} parent=0 // loop_footer
    %s12 = sadd.s32 1, %s8
  $region7: #{netg_forward.17} parent=0 // loop_footer_branch
    %7 = sbr.rel target = $region3
  $region8: #{netg_forward.17} parent=0 // loop_exit
    _

</llo_original>
